<compile_context>
chip_gen: v6e
topology: v6e:2x2x1
jax: 0.10.0
libtpu: 0.0.40
codegen_flags: <defaults>
</compile_context>

<pallas_src>
import jax
import jax.numpy as jnp
from jax.experimental import pallas as pl
from jax.experimental.pallas import tpu as pltpu

# "small shapes" configuration (module defaults are hidden=512, latent=64)
HIDDEN = 128          # args.hidden_dim
LATENT = 64           # latent_dim
IN_DIM = 3 + LATENT
MAX_TILE_N = 2048     # rows of points per grid step (review: 1024-4096)


def _round_up(x, m):
    return (x + m - 1) // m * m


def decoder_kernel(coords_ref, z_ref,
                   w1c, w1z, b1,
                   w2, b2, w3, b3, w4, b4,
                   w5x, w5c, b5,
                   w6, b6, w7, b7, w8r, b8,
                   alpha_ref, out_ref):
    c = coords_ref[...].astype(jnp.float32)   # [tile, 3]
    a = alpha_ref[0]                          # PReLU slope (SMEM scalar)

    def prelu(x):
        return jnp.where(x > 0, x, a * x)

    def mm(x_f32, w_bf16_ref):
        # bf16 x bf16 -> f32 accumulate on the MXU
        return jnp.dot(x_f32.astype(jnp.bfloat16), w_bf16_ref[...],
                       preferred_element_type=jnp.float32)

    def coord_contrib(wc_ref):
        # c @ Wc with K=3: keep it off the MXU, do 3 broadcast-mul-adds (VPU).
        w = wc_ref[...]                                      # [3, H] f32
        return (c[:, 0:1] * w[0:1, :] +
                c[:, 1:2] * w[1:2, :] +
                c[:, 2:3] * w[2:3, :])

    # fc1 on concat(coords, z) == coords @ W1[:3] + z @ W1[3:]
    zb = z_ref[...].astype(jnp.bfloat16)                     # [tile, LATENT]
    x = prelu(jnp.dot(zb, w1z[...], preferred_element_type=jnp.float32)
              + coord_contrib(w1c) + b1[...])
    x = prelu(mm(x, w2) + b2[...])
    x = prelu(mm(x, w3) + b3[...])
    x = prelu(mm(x, w4) + b4[...])          # [tile, HIDDEN]; lanes 125:128 == 0
    # skip connection: fc5 on concat(x, coords)
    x = prelu(mm(x, w5x) + coord_contrib(w5c) + b5[...])     # [tile, HIDDEN]
    x = prelu(mm(x, w6) + b6[...])
    x = prelu(mm(x, w7) + b7[...])
    # fc8 (HIDDEN -> 1): VPU multiply + cross-lane reduce (XLU), no MXU pass.
    y = jnp.sum(x * w8r[...], axis=-1, keepdims=True) + b8[...]   # [tile, 1]
    out_ref[...] = jnp.tanh(y)


def multishape_decoder_fwd(coords, z, flat_params, alpha, max_tile=MAX_TILE_N):
    """coords: [N,3] f32, z: [N,LATENT] f32, flat_params: list of 2-D arrays,
    alpha: [1] f32 (PReLU slope). Returns [N,1] f32."""
    N = coords.shape[0]
    tile_n = min(max_tile, _round_up(N, 128))
    n_pad = _round_up(N, tile_n)
    if n_pad != N:
        coords = jnp.pad(coords, ((0, n_pad - N), (0, 0)))
        z = jnp.pad(z, ((0, n_pad - N), (0, 0)))
    n_tiles = n_pad // tile_n

    row_spec = lambda ncols: pl.BlockSpec((tile_n, ncols), lambda i: (i, 0))
    full_spec = lambda shape: pl.BlockSpec(shape, lambda i: (0, 0))

    in_specs = [row_spec(3), row_spec(LATENT)]
    in_specs += [full_spec(p.shape) for p in flat_params]
    in_specs += [pl.BlockSpec(memory_space=pltpu.MemorySpace.SMEM)]   # alpha

    out = pl.pallas_call(
        decoder_kernel,
        out_shape=jax.ShapeDtypeStruct((n_pad, 1), jnp.float32),
        grid=(n_tiles,),
        in_specs=in_specs,
        out_specs=pl.BlockSpec((tile_n, 1), lambda i: (i, 0)),
        compiler_params=pltpu.CompilerParams(
            dimension_semantics=("parallel",),
            vmem_limit_bytes=48 * 1024 * 1024),
    )(coords, z, *flat_params, alpha)
    return out[:N]


# ----------------------------- parameter setup -----------------------------

def _weight_norm_effective(v, g):
    # PyTorch weight_norm (default dim=0): W = g * v / ||v||, norm per output row.
    # v: [out, in], g: [out]
    norm = jnp.sqrt(jnp.sum(v * v, axis=1, keepdims=True))
    return g[:, None] * v / norm


def init_params(key):
    """Deterministic synthetic init mirroring the module's layer shapes.

    Returns (flat_kernel_params, (ref_weights, ref_biases)) where the reference
    params are plain f32 [in, out] weights / [1, out] biases for validation.
    """
    layer_dims = [
        (IN_DIM, HIDDEN),        # fc1 (weight_norm)
        (HIDDEN, HIDDEN),        # fc2 (weight_norm)
        (HIDDEN, HIDDEN),        # fc3 (weight_norm)
        (HIDDEN, HIDDEN - 3),    # fc4 (weight_norm)
        (HIDDEN, HIDDEN),        # fc5 (weight_norm)
        (HIDDEN, HIDDEN),        # fc6 (weight_norm)
        (HIDDEN, HIDDEN),        # fc7 (weight_norm)
        (HIDDEN, 1),             # fc8 (plain Linear)
    ]
    weights, biases = [], []
    for idx, (din, dout) in enumerate(layer_dims):
        key, kv, kg, kb = jax.random.split(key, 4)
        v = jax.random.normal(kv, (dout, din), jnp.float32) * 0.05
        b = jax.random.normal(kb, (dout,), jnp.float32) * 0.05
        if idx < 7:
            g = jax.random.uniform(kg, (dout,), jnp.float32, 0.5, 1.5)
            w = _weight_norm_effective(v, g)
        else:
            w = v
        weights.append(w.T)                  # -> [in, out] f32
        biases.append(b.reshape(1, dout))

    w1, w2, w3, w4, w5, w6, w7, w8 = weights
    b1, b2, b3, b4, b5, b6, b7, b8 = biases

    bf16 = jnp.bfloat16

    # fc1 split: concat(coords, z) @ W1 == coords @ W1[:3] + z @ W1[3:]
    w1c = w1[:3, :]                                   # [3, H] f32 (VPU path)
    w1z = w1[3:, :].astype(bf16)                      # [LATENT, H] bf16 (MXU)

    # fc4: pad 125 -> 128 output columns with zeros (padded lanes stay 0).
    w4p = jnp.pad(w4, ((0, 0), (0, 3))).astype(bf16)  # [H, H]
    b4p = jnp.pad(b4, ((0, 0), (0, 3)))               # [1, H]

    # fc5 split: concat(x, coords) @ W5 == x @ W5[:125] + coords @ W5[125:]
    # Pad the x-half to 128 rows (multiplied by the zero padded lanes of x).
    w5x = jnp.pad(w5[:HIDDEN - 3, :], ((0, 3), (0, 0))).astype(bf16)  # [H, H]
    w5c = w5[HIDDEN - 3:, :]                          # [3, H] f32 (VPU path)

    w2b, w3b = w2.astype(bf16), w3.astype(bf16)
    w6b, w7b = w6.astype(bf16), w7.astype(bf16)
    w8r = w8.T                                        # [1, H] f32 (VPU + lane reduce)

    flat = [w1c, w1z, b1,
            w2b, b2, w3b, b3, w4p, b4p,
            w5x, w5c, b5,
            w6b, b6, w7b, b7, w8r, b8]
    return flat, (weights, biases)


def reference_fwd(coords, z, ws, bs, alpha):
    """Pure-JAX f32 reference matching the PyTorch module (eval mode)."""
    def prelu(x):
        return jnp.where(x > 0, x, alpha * x)
    xz = jnp.concatenate([coords, z], axis=1)
    x = prelu(xz @ ws[0] + bs[0])
    x = prelu(x @ ws[1] + bs[1])
    x = prelu(x @ ws[2] + bs[2])
    x = prelu(x @ ws[3] + bs[3])
    x = jnp.concatenate([x, coords], axis=1)
    x = prelu(x @ ws[4] + bs[4])
    x = prelu(x @ ws[5] + bs[5])
    x = prelu(x @ ws[6] + bs[6])
    x = x @ ws[7] + bs[7]
    return jnp.tanh(x)


if __name__ == "__main__":
    key = jax.random.PRNGKey(0)
    kp, ke, kc, ks = jax.random.split(key, 4)

    num_shapes = 4
    N = 256

    flat_params, (ref_ws, ref_bs) = init_params(kp)
    # nn.Embedding(num_shapes, latent_dim), init normal(std=0.01)
    latent_codes = jax.random.normal(ke, (num_shapes, LATENT), jnp.float32) * 0.01
    # nn.PReLU() default single parameter = 0.25 (SMEM scalar)
    alpha = jnp.full((1,), 0.25, jnp.float32)

    coords = jax.random.uniform(kc, (N, 3), jnp.float32, minval=-1.0, maxval=1.0)
    shape_id = jax.random.randint(ks, (N,), 0, num_shapes)

    # embedding lookup (glue, equivalent to self.latent_codes(shape_id))
    z = latent_codes[shape_id]                                   # [N, LATENT]

    out = multishape_decoder_fwd(coords, z, flat_params, alpha)  # [N, 1]
    out = jax.block_until_ready(out)
    assert out.shape == (N, 1) and out.dtype == jnp.float32
    assert bool(jnp.all(jnp.isfinite(out)))

    # validate bf16-matmul kernel against the f32 reference
    ref = reference_fwd(coords, z, ref_ws, ref_bs, 0.25)
    max_err = float(jnp.max(jnp.abs(out - ref)))
    assert max_err < 5e-2, f"max abs err vs f32 reference: {max_err}"

    print("KERNEL_OK")
</pallas_src>

<mosaic_0001>
module attributes {stable_mosaic.version = 11 : i64} {
  func.func @decoder_kernel(%arg0: i32, %arg1: memref<256x3xf32, #tpu.memory_space<vmem>>, %arg2: memref<256x64xf32, #tpu.memory_space<vmem>>, %arg3: memref<3x128xf32, #tpu.memory_space<vmem>>, %arg4: memref<64x128xbf16, #tpu.memory_space<vmem>>, %arg5: memref<1x128xf32, #tpu.memory_space<vmem>>, %arg6: memref<128x128xbf16, #tpu.memory_space<vmem>>, %arg7: memref<1x128xf32, #tpu.memory_space<vmem>>, %arg8: memref<128x128xbf16, #tpu.memory_space<vmem>>, %arg9: memref<1x128xf32, #tpu.memory_space<vmem>>, %arg10: memref<128x128xbf16, #tpu.memory_space<vmem>>, %arg11: memref<1x128xf32, #tpu.memory_space<vmem>>, %arg12: memref<128x128xbf16, #tpu.memory_space<vmem>>, %arg13: memref<3x128xf32, #tpu.memory_space<vmem>>, %arg14: memref<1x128xf32, #tpu.memory_space<vmem>>, %arg15: memref<128x128xbf16, #tpu.memory_space<vmem>>, %arg16: memref<1x128xf32, #tpu.memory_space<vmem>>, %arg17: memref<128x128xbf16, #tpu.memory_space<vmem>>, %arg18: memref<1x128xf32, #tpu.memory_space<vmem>>, %arg19: memref<1x128xf32, #tpu.memory_space<vmem>>, %arg20: memref<1x1xf32, #tpu.memory_space<vmem>>, %arg21: memref<1xf32, #tpu.memory_space<smem>>, %arg22: memref<256x1xf32, #tpu.memory_space<vmem>>) attributes {dimension_semantics = [#tpu.dimension_semantics<parallel>], iteration_bounds = array<i64: 1>, scalar_prefetch = 0 : i64, scratch_operands = 0 : i64, tpu.core_type = #tpu.core_type<tc>, window_params = [{transform_indices = @transform_0, window_bounds = array<i64: 256, 3>}, {transform_indices = @transform_1, window_bounds = array<i64: 256, 64>}, {pipeline_mode = #tpu.pipeline_mode<synchronous>, transform_indices = @transform_2, window_bounds = array<i64: 3, 128>}, {pipeline_mode = #tpu.pipeline_mode<synchronous>, transform_indices = @transform_3, window_bounds = array<i64: 64, 128>}, {pipeline_mode = #tpu.pipeline_mode<synchronous>, transform_indices = @transform_4, window_bounds = array<i64: 1, 128>}, {pipeline_mode = #tpu.pipeline_mode<synchronous>, transform_indices = @transform_5, window_bounds = array<i64: 128, 128>}, {pipeline_mode = #tpu.pipeline_mode<synchronous>, transform_indices = @transform_6, window_bounds = array<i64: 1, 128>}, {pipeline_mode = #tpu.pipeline_mode<synchronous>, transform_indices = @transform_7, window_bounds = array<i64: 128, 128>}, {pipeline_mode = #tpu.pipeline_mode<synchronous>, transform_indices = @transform_8, window_bounds = array<i64: 1, 128>}, {pipeline_mode = #tpu.pipeline_mode<synchronous>, transform_indices = @transform_9, window_bounds = array<i64: 128, 128>}, {pipeline_mode = #tpu.pipeline_mode<synchronous>, transform_indices = @transform_10, window_bounds = array<i64: 1, 128>}, {pipeline_mode = #tpu.pipeline_mode<synchronous>, transform_indices = @transform_11, window_bounds = array<i64: 128, 128>}, {pipeline_mode = #tpu.pipeline_mode<synchronous>, transform_indices = @transform_12, window_bounds = array<i64: 3, 128>}, {pipeline_mode = #tpu.pipeline_mode<synchronous>, transform_indices = @transform_13, window_bounds = array<i64: 1, 128>}, {pipeline_mode = #tpu.pipeline_mode<synchronous>, transform_indices = @transform_14, window_bounds = array<i64: 128, 128>}, {pipeline_mode = #tpu.pipeline_mode<synchronous>, transform_indices = @transform_15, window_bounds = array<i64: 1, 128>}, {pipeline_mode = #tpu.pipeline_mode<synchronous>, transform_indices = @transform_16, window_bounds = array<i64: 128, 128>}, {pipeline_mode = #tpu.pipeline_mode<synchronous>, transform_indices = @transform_17, window_bounds = array<i64: 1, 128>}, {pipeline_mode = #tpu.pipeline_mode<synchronous>, transform_indices = @transform_18, window_bounds = array<i64: 1, 128>}, {pipeline_mode = #tpu.pipeline_mode<synchronous>, transform_indices = @transform_19, window_bounds = array<i64: 1, 1>}, {transform_indices = @transform_20, window_bounds = array<i64: 1>}, {transform_indices = @transform_21, window_bounds = array<i64: 256, 1>}]} {
    %c0 = arith.constant 0 : index
    %c0_0 = arith.constant 0 : index
    %0 = vector.load %arg1[%c0, %c0_0] : memref<256x3xf32, #tpu.memory_space<vmem>>, vector<256x3xf32>
    %c0_1 = arith.constant 0 : index
    %1 = memref.load %arg21[%c0_1] : memref<1xf32, #tpu.memory_space<smem>>
    %c0_2 = arith.constant 0 : index
    %c0_3 = arith.constant 0 : index
    %2 = vector.load %arg2[%c0_2, %c0_3] : memref<256x64xf32, #tpu.memory_space<vmem>>, vector<256x64xf32>
    %3 = arith.truncf %2 : vector<256x64xf32> to vector<256x64xbf16>
    %c0_4 = arith.constant 0 : index
    %c0_5 = arith.constant 0 : index
    %4 = vector.load %arg4[%c0_4, %c0_5] : memref<64x128xbf16, #tpu.memory_space<vmem>>, vector<64x128xbf16>
    %cst = arith.constant dense<0.000000e+00> : vector<256x128xf32>
    %5 = tpu.matmul %3, %4, %cst {dimension_numbers = #tpu.dot_dimension_numbers<[1], [0], [0], [1], [0, 0, 1, 1], [], []>} : vector<256x64xbf16>, vector<64x128xbf16>, vector<256x128xf32> -> vector<256x128xf32>
    %c0_6 = arith.constant 0 : index
    %c0_7 = arith.constant 0 : index
    %6 = vector.load %arg3[%c0_6, %c0_7] : memref<3x128xf32, #tpu.memory_space<vmem>>, vector<3x128xf32>
    %7 = vector.extract_strided_slice %0 {offsets = [0, 0], sizes = [256, 1], strides = [1, 1]} : vector<256x3xf32> to vector<256x1xf32>
    %8 = vector.extract_strided_slice %6 {offsets = [0, 0], sizes = [1, 128], strides = [1, 1]} : vector<3x128xf32> to vector<1x128xf32>
    %9 = vector.broadcast %7 : vector<256x1xf32> to vector<256x128xf32>
    %10 = vector.broadcast %8 : vector<1x128xf32> to vector<256x128xf32>
    %11 = arith.mulf %9, %10 : vector<256x128xf32>
    %12 = vector.extract_strided_slice %0 {offsets = [0, 1], sizes = [256, 1], strides = [1, 1]} : vector<256x3xf32> to vector<256x1xf32>
    %13 = vector.extract_strided_slice %6 {offsets = [1, 0], sizes = [1, 128], strides = [1, 1]} : vector<3x128xf32> to vector<1x128xf32>
    %14 = vector.broadcast %12 : vector<256x1xf32> to vector<256x128xf32>
    %15 = vector.broadcast %13 : vector<1x128xf32> to vector<256x128xf32>
    %16 = arith.mulf %14, %15 : vector<256x128xf32>
    %17 = arith.addf %11, %16 : vector<256x128xf32>
    %18 = vector.extract_strided_slice %0 {offsets = [0, 2], sizes = [256, 1], strides = [1, 1]} : vector<256x3xf32> to vector<256x1xf32>
    %19 = vector.extract_strided_slice %6 {offsets = [2, 0], sizes = [1, 128], strides = [1, 1]} : vector<3x128xf32> to vector<1x128xf32>
    %20 = vector.broadcast %18 : vector<256x1xf32> to vector<256x128xf32>
    %21 = vector.broadcast %19 : vector<1x128xf32> to vector<256x128xf32>
    %22 = arith.mulf %20, %21 : vector<256x128xf32>
    %23 = arith.addf %17, %22 : vector<256x128xf32>
    %24 = arith.addf %5, %23 : vector<256x128xf32>
    %c0_8 = arith.constant 0 : index
    %c0_9 = arith.constant 0 : index
    %25 = vector.load %arg5[%c0_8, %c0_9] : memref<1x128xf32, #tpu.memory_space<vmem>>, vector<1x128xf32>
    %26 = vector.broadcast %25 : vector<1x128xf32> to vector<256x128xf32>
    %27 = arith.addf %24, %26 : vector<256x128xf32>
    %cst_10 = arith.constant 0.000000e+00 : f32
    %28 = vector.broadcast %cst_10 : f32 to vector<256x128xf32>
    %29 = arith.cmpf ogt, %27, %28 : vector<256x128xf32>
    %30 = vector.broadcast %1 : f32 to vector<256x128xf32>
    %31 = arith.mulf %30, %27 : vector<256x128xf32>
    %32 = arith.select %29, %27, %31 : vector<256x128xi1>, vector<256x128xf32>
    %33 = arith.truncf %32 : vector<256x128xf32> to vector<256x128xbf16>
    %c0_11 = arith.constant 0 : index
    %c0_12 = arith.constant 0 : index
    %34 = vector.load %arg6[%c0_11, %c0_12] : memref<128x128xbf16, #tpu.memory_space<vmem>>, vector<128x128xbf16>
    %cst_13 = arith.constant dense<0.000000e+00> : vector<256x128xf32>
    %35 = tpu.matmul %33, %34, %cst_13 {dimension_numbers = #tpu.dot_dimension_numbers<[1], [0], [0], [1], [0, 0, 1, 1], [], []>} : vector<256x128xbf16>, vector<128x128xbf16>, vector<256x128xf32> -> vector<256x128xf32>
    %c0_14 = arith.constant 0 : index
    %c0_15 = arith.constant 0 : index
    %36 = vector.load %arg7[%c0_14, %c0_15] : memref<1x128xf32, #tpu.memory_space<vmem>>, vector<1x128xf32>
    %37 = vector.broadcast %36 : vector<1x128xf32> to vector<256x128xf32>
    %38 = arith.addf %35, %37 : vector<256x128xf32>
    %cst_16 = arith.constant 0.000000e+00 : f32
    %39 = vector.broadcast %cst_16 : f32 to vector<256x128xf32>
    %40 = arith.cmpf ogt, %38, %39 : vector<256x128xf32>
    %41 = vector.broadcast %1 : f32 to vector<256x128xf32>
    %42 = arith.mulf %41, %38 : vector<256x128xf32>
    %43 = arith.select %40, %38, %42 : vector<256x128xi1>, vector<256x128xf32>
    %44 = arith.truncf %43 : vector<256x128xf32> to vector<256x128xbf16>
    %c0_17 = arith.constant 0 : index
    %c0_18 = arith.constant 0 : index
    %45 = vector.load %arg8[%c0_17, %c0_18] : memref<128x128xbf16, #tpu.memory_space<vmem>>, vector<128x128xbf16>
    %cst_19 = arith.constant dense<0.000000e+00> : vector<256x128xf32>
    %46 = tpu.matmul %44, %45, %cst_19 {dimension_numbers = #tpu.dot_dimension_numbers<[1], [0], [0], [1], [0, 0, 1, 1], [], []>} : vector<256x128xbf16>, vector<128x128xbf16>, vector<256x128xf32> -> vector<256x128xf32>
    %c0_20 = arith.constant 0 : index
    %c0_21 = arith.constant 0 : index
    %47 = vector.load %arg9[%c0_20, %c0_21] : memref<1x128xf32, #tpu.memory_space<vmem>>, vector<1x128xf32>
    %48 = vector.broadcast %47 : vector<1x128xf32> to vector<256x128xf32>
    %49 = arith.addf %46, %48 : vector<256x128xf32>
    %cst_22 = arith.constant 0.000000e+00 : f32
    %50 = vector.broadcast %cst_22 : f32 to vector<256x128xf32>
    %51 = arith.cmpf ogt, %49, %50 : vector<256x128xf32>
    %52 = vector.broadcast %1 : f32 to vector<256x128xf32>
    %53 = arith.mulf %52, %49 : vector<256x128xf32>
    %54 = arith.select %51, %49, %53 : vector<256x128xi1>, vector<256x128xf32>
    %55 = arith.truncf %54 : vector<256x128xf32> to vector<256x128xbf16>
    %c0_23 = arith.constant 0 : index
    %c0_24 = arith.constant 0 : index
    %56 = vector.load %arg10[%c0_23, %c0_24] : memref<128x128xbf16, #tpu.memory_space<vmem>>, vector<128x128xbf16>
    %cst_25 = arith.constant dense<0.000000e+00> : vector<256x128xf32>
    %57 = tpu.matmul %55, %56, %cst_25 {dimension_numbers = #tpu.dot_dimension_numbers<[1], [0], [0], [1], [0, 0, 1, 1], [], []>} : vector<256x128xbf16>, vector<128x128xbf16>, vector<256x128xf32> -> vector<256x128xf32>
    %c0_26 = arith.constant 0 : index
    %c0_27 = arith.constant 0 : index
    %58 = vector.load %arg11[%c0_26, %c0_27] : memref<1x128xf32, #tpu.memory_space<vmem>>, vector<1x128xf32>
    %59 = vector.broadcast %58 : vector<1x128xf32> to vector<256x128xf32>
    %60 = arith.addf %57, %59 : vector<256x128xf32>
    %cst_28 = arith.constant 0.000000e+00 : f32
    %61 = vector.broadcast %cst_28 : f32 to vector<256x128xf32>
    %62 = arith.cmpf ogt, %60, %61 : vector<256x128xf32>
    %63 = vector.broadcast %1 : f32 to vector<256x128xf32>
    %64 = arith.mulf %63, %60 : vector<256x128xf32>
    %65 = arith.select %62, %60, %64 : vector<256x128xi1>, vector<256x128xf32>
    %66 = arith.truncf %65 : vector<256x128xf32> to vector<256x128xbf16>
    %c0_29 = arith.constant 0 : index
    %c0_30 = arith.constant 0 : index
    %67 = vector.load %arg12[%c0_29, %c0_30] : memref<128x128xbf16, #tpu.memory_space<vmem>>, vector<128x128xbf16>
    %cst_31 = arith.constant dense<0.000000e+00> : vector<256x128xf32>
    %68 = tpu.matmul %66, %67, %cst_31 {dimension_numbers = #tpu.dot_dimension_numbers<[1], [0], [0], [1], [0, 0, 1, 1], [], []>} : vector<256x128xbf16>, vector<128x128xbf16>, vector<256x128xf32> -> vector<256x128xf32>
    %c0_32 = arith.constant 0 : index
    %c0_33 = arith.constant 0 : index
    %69 = vector.load %arg13[%c0_32, %c0_33] : memref<3x128xf32, #tpu.memory_space<vmem>>, vector<3x128xf32>
    %70 = vector.extract_strided_slice %0 {offsets = [0, 0], sizes = [256, 1], strides = [1, 1]} : vector<256x3xf32> to vector<256x1xf32>
    %71 = vector.extract_strided_slice %69 {offsets = [0, 0], sizes = [1, 128], strides = [1, 1]} : vector<3x128xf32> to vector<1x128xf32>
    %72 = vector.broadcast %70 : vector<256x1xf32> to vector<256x128xf32>
    %73 = vector.broadcast %71 : vector<1x128xf32> to vector<256x128xf32>
    %74 = arith.mulf %72, %73 : vector<256x128xf32>
    %75 = vector.extract_strided_slice %0 {offsets = [0, 1], sizes = [256, 1], strides = [1, 1]} : vector<256x3xf32> to vector<256x1xf32>
    %76 = vector.extract_strided_slice %69 {offsets = [1, 0], sizes = [1, 128], strides = [1, 1]} : vector<3x128xf32> to vector<1x128xf32>
    %77 = vector.broadcast %75 : vector<256x1xf32> to vector<256x128xf32>
    %78 = vector.broadcast %76 : vector<1x128xf32> to vector<256x128xf32>
    %79 = arith.mulf %77, %78 : vector<256x128xf32>
    %80 = arith.addf %74, %79 : vector<256x128xf32>
    %81 = vector.extract_strided_slice %0 {offsets = [0, 2], sizes = [256, 1], strides = [1, 1]} : vector<256x3xf32> to vector<256x1xf32>
    %82 = vector.extract_strided_slice %69 {offsets = [2, 0], sizes = [1, 128], strides = [1, 1]} : vector<3x128xf32> to vector<1x128xf32>
    %83 = vector.broadcast %81 : vector<256x1xf32> to vector<256x128xf32>
    %84 = vector.broadcast %82 : vector<1x128xf32> to vector<256x128xf32>
    %85 = arith.mulf %83, %84 : vector<256x128xf32>
    %86 = arith.addf %80, %85 : vector<256x128xf32>
    %87 = arith.addf %68, %86 : vector<256x128xf32>
    %c0_34 = arith.constant 0 : index
    %c0_35 = arith.constant 0 : index
    %88 = vector.load %arg14[%c0_34, %c0_35] : memref<1x128xf32, #tpu.memory_space<vmem>>, vector<1x128xf32>
    %89 = vector.broadcast %88 : vector<1x128xf32> to vector<256x128xf32>
    %90 = arith.addf %87, %89 : vector<256x128xf32>
    %cst_36 = arith.constant 0.000000e+00 : f32
    %91 = vector.broadcast %cst_36 : f32 to vector<256x128xf32>
    %92 = arith.cmpf ogt, %90, %91 : vector<256x128xf32>
    %93 = vector.broadcast %1 : f32 to vector<256x128xf32>
    %94 = arith.mulf %93, %90 : vector<256x128xf32>
    %95 = arith.select %92, %90, %94 : vector<256x128xi1>, vector<256x128xf32>
    %96 = arith.truncf %95 : vector<256x128xf32> to vector<256x128xbf16>
    %c0_37 = arith.constant 0 : index
    %c0_38 = arith.constant 0 : index
    %97 = vector.load %arg15[%c0_37, %c0_38] : memref<128x128xbf16, #tpu.memory_space<vmem>>, vector<128x128xbf16>
    %cst_39 = arith.constant dense<0.000000e+00> : vector<256x128xf32>
    %98 = tpu.matmul %96, %97, %cst_39 {dimension_numbers = #tpu.dot_dimension_numbers<[1], [0], [0], [1], [0, 0, 1, 1], [], []>} : vector<256x128xbf16>, vector<128x128xbf16>, vector<256x128xf32> -> vector<256x128xf32>
    %c0_40 = arith.constant 0 : index
    %c0_41 = arith.constant 0 : index
    %99 = vector.load %arg16[%c0_40, %c0_41] : memref<1x128xf32, #tpu.memory_space<vmem>>, vector<1x128xf32>
    %100 = vector.broadcast %99 : vector<1x128xf32> to vector<256x128xf32>
    %101 = arith.addf %98, %100 : vector<256x128xf32>
    %cst_42 = arith.constant 0.000000e+00 : f32
    %102 = vector.broadcast %cst_42 : f32 to vector<256x128xf32>
    %103 = arith.cmpf ogt, %101, %102 : vector<256x128xf32>
    %104 = vector.broadcast %1 : f32 to vector<256x128xf32>
    %105 = arith.mulf %104, %101 : vector<256x128xf32>
    %106 = arith.select %103, %101, %105 : vector<256x128xi1>, vector<256x128xf32>
    %107 = arith.truncf %106 : vector<256x128xf32> to vector<256x128xbf16>
    %c0_43 = arith.constant 0 : index
    %c0_44 = arith.constant 0 : index
    %108 = vector.load %arg17[%c0_43, %c0_44] : memref<128x128xbf16, #tpu.memory_space<vmem>>, vector<128x128xbf16>
    %cst_45 = arith.constant dense<0.000000e+00> : vector<256x128xf32>
    %109 = tpu.matmul %107, %108, %cst_45 {dimension_numbers = #tpu.dot_dimension_numbers<[1], [0], [0], [1], [0, 0, 1, 1], [], []>} : vector<256x128xbf16>, vector<128x128xbf16>, vector<256x128xf32> -> vector<256x128xf32>
    %c0_46 = arith.constant 0 : index
    %c0_47 = arith.constant 0 : index
    %110 = vector.load %arg18[%c0_46, %c0_47] : memref<1x128xf32, #tpu.memory_space<vmem>>, vector<1x128xf32>
    %111 = vector.broadcast %110 : vector<1x128xf32> to vector<256x128xf32>
    %112 = arith.addf %109, %111 : vector<256x128xf32>
    %cst_48 = arith.constant 0.000000e+00 : f32
    %113 = vector.broadcast %cst_48 : f32 to vector<256x128xf32>
    %114 = arith.cmpf ogt, %112, %113 : vector<256x128xf32>
    %115 = vector.broadcast %1 : f32 to vector<256x128xf32>
    %116 = arith.mulf %115, %112 : vector<256x128xf32>
    %117 = arith.select %114, %112, %116 : vector<256x128xi1>, vector<256x128xf32>
    %c0_49 = arith.constant 0 : index
    %c0_50 = arith.constant 0 : index
    %118 = vector.load %arg19[%c0_49, %c0_50] : memref<1x128xf32, #tpu.memory_space<vmem>>, vector<1x128xf32>
    %119 = vector.broadcast %118 : vector<1x128xf32> to vector<256x128xf32>
    %120 = arith.mulf %117, %119 : vector<256x128xf32>
    %cst_51 = arith.constant dense<0.000000e+00> : vector<256xf32>
    %121 = vector.multi_reduction <add>, %120, %cst_51 [1] : vector<256x128xf32> to vector<256xf32>
    %122 = vector.shape_cast %121 : vector<256xf32> to vector<256x1xf32>
    %c0_52 = arith.constant 0 : index
    %c0_53 = arith.constant 0 : index
    %123 = vector.load %arg20[%c0_52, %c0_53] : memref<1x1xf32, #tpu.memory_space<vmem>>, vector<1x1xf32>
    %124 = vector.broadcast %123 : vector<1x1xf32> to vector<256x1xf32>
    %125 = arith.addf %122, %124 : vector<256x1xf32>
    %126 = math.tanh %125 : vector<256x1xf32>
    %c0_54 = arith.constant 0 : index
    %c0_55 = arith.constant 0 : index
    %127 = vector.load %arg22[%c0_54, %c0_55] : memref<256x1xf32, #tpu.memory_space<vmem>>, vector<256x1xf32>
    tpu.vector_store %arg22[%c0_54, %c0_55], %126 {strides = array<i32>} : memref<256x1xf32, #tpu.memory_space<vmem>>, vector<256x1xf32>,
    return
  }
  func.func @transform_0(%arg0: i32) -> (i32, i32) {
    %c0_i32 = arith.constant 0 : i32
    %c0_i32_0 = arith.constant 0 : i32
    return %arg0, %c0_i32 : i32, i32
  }
  func.func @transform_1(%arg0: i32) -> (i32, i32) {
    %c0_i32 = arith.constant 0 : i32
    %c0_i32_0 = arith.constant 0 : i32
    return %arg0, %c0_i32 : i32, i32
  }
  func.func @transform_2(%arg0: i32) -> (i32, i32) {
    %c0_i32 = arith.constant 0 : i32
    %c0_i32_0 = arith.constant 0 : i32
    %c0_i32_1 = arith.constant 0 : i32
    return %c0_i32, %c0_i32_0 : i32, i32
  }
  func.func @transform_3(%arg0: i32) -> (i32, i32) {
    %c0_i32 = arith.constant 0 : i32
    %c0_i32_0 = arith.constant 0 : i32
    %c0_i32_1 = arith.constant 0 : i32
    return %c0_i32, %c0_i32_0 : i32, i32
  }
  func.func @transform_4(%arg0: i32) -> (i32, i32) {
    %c0_i32 = arith.constant 0 : i32
    %c0_i32_0 = arith.constant 0 : i32
    %c0_i32_1 = arith.constant 0 : i32
    return %c0_i32, %c0_i32_0 : i32, i32
  }
  func.func @transform_5(%arg0: i32) -> (i32, i32) {
    %c0_i32 = arith.constant 0 : i32
    %c0_i32_0 = arith.constant 0 : i32
    %c0_i32_1 = arith.constant 0 : i32
    return %c0_i32, %c0_i32_0 : i32, i32
  }
  func.func @transform_6(%arg0: i32) -> (i32, i32) {
    %c0_i32 = arith.constant 0 : i32
    %c0_i32_0 = arith.constant 0 : i32
    %c0_i32_1 = arith.constant 0 : i32
    return %c0_i32, %c0_i32_0 : i32, i32
  }
  func.func @transform_7(%arg0: i32) -> (i32, i32) {
    %c0_i32 = arith.constant 0 : i32
    %c0_i32_0 = arith.constant 0 : i32
    %c0_i32_1 = arith.constant 0 : i32
    return %c0_i32, %c0_i32_0 : i32, i32
  }
  func.func @transform_8(%arg0: i32) -> (i32, i32) {
    %c0_i32 = arith.constant 0 : i32
    %c0_i32_0 = arith.constant 0 : i32
    %c0_i32_1 = arith.constant 0 : i32
    return %c0_i32, %c0_i32_0 : i32, i32
  }
  func.func @transform_9(%arg0: i32) -> (i32, i32) {
    %c0_i32 = arith.constant 0 : i32
    %c0_i32_0 = arith.constant 0 : i32
    %c0_i32_1 = arith.constant 0 : i32
    return %c0_i32, %c0_i32_0 : i32, i32
  }
  func.func @transform_10(%arg0: i32) -> (i32, i32) {
    %c0_i32 = arith.constant 0 : i32
    %c0_i32_0 = arith.constant 0 : i32
    %c0_i32_1 = arith.constant 0 : i32
    return %c0_i32, %c0_i32_0 : i32, i32
  }
  func.func @transform_11(%arg0: i32) -> (i32, i32) {
    %c0_i32 = arith.constant 0 : i32
    %c0_i32_0 = arith.constant 0 : i32
    %c0_i32_1 = arith.constant 0 : i32
    return %c0_i32, %c0_i32_0 : i32, i32
  }
  func.func @transform_12(%arg0: i32) -> (i32, i32) {
    %c0_i32 = arith.constant 0 : i32
    %c0_i32_0 = arith.constant 0 : i32
    %c0_i32_1 = arith.constant 0 : i32
    return %c0_i32, %c0_i32_0 : i32, i32
  }
  func.func @transform_13(%arg0: i32) -> (i32, i32) {
    %c0_i32 = arith.constant 0 : i32
    %c0_i32_0 = arith.constant 0 : i32
    %c0_i32_1 = arith.constant 0 : i32
    return %c0_i32, %c0_i32_0 : i32, i32
  }
  func.func @transform_14(%arg0: i32) -> (i32, i32) {
    %c0_i32 = arith.constant 0 : i32
    %c0_i32_0 = arith.constant 0 : i32
    %c0_i32_1 = arith.constant 0 : i32
    return %c0_i32, %c0_i32_0 : i32, i32
  }
  func.func @transform_15(%arg0: i32) -> (i32, i32) {
    %c0_i32 = arith.constant 0 : i32
    %c0_i32_0 = arith.constant 0 : i32
    %c0_i32_1 = arith.constant 0 : i32
    return %c0_i32, %c0_i32_0 : i32, i32
  }
  func.func @transform_16(%arg0: i32) -> (i32, i32) {
    %c0_i32 = arith.constant 0 : i32
    %c0_i32_0 = arith.constant 0 : i32
    %c0_i32_1 = arith.constant 0 : i32
    return %c0_i32, %c0_i32_0 : i32, i32
  }
  func.func @transform_17(%arg0: i32) -> (i32, i32) {
    %c0_i32 = arith.constant 0 : i32
    %c0_i32_0 = arith.constant 0 : i32
    %c0_i32_1 = arith.constant 0 : i32
    return %c0_i32, %c0_i32_0 : i32, i32
  }
  func.func @transform_18(%arg0: i32) -> (i32, i32) {
    %c0_i32 = arith.constant 0 : i32
    %c0_i32_0 = arith.constant 0 : i32
    %c0_i32_1 = arith.constant 0 : i32
    return %c0_i32, %c0_i32_0 : i32, i32
  }
  func.func @transform_19(%arg0: i32) -> (i32, i32) {
    %c0_i32 = arith.constant 0 : i32
    %c0_i32_0 = arith.constant 0 : i32
    %c0_i32_1 = arith.constant 0 : i32
    return %c0_i32, %c0_i32_0 : i32, i32
  }
  func.func @transform_20(%arg0: i32) -> i32 {
    %c0_i32 = arith.constant 0 : i32
    %c0_i32_0 = arith.constant 0 : i32
    return %c0_i32 : i32
  }
  func.func @transform_21(%arg0: i32) -> (i32, i32) {
    %c0_i32 = arith.constant 0 : i32
    %c0_i32_0 = arith.constant 0 : i32
    return %arg0, %c0_i32 : i32, i32
  }
}

</mosaic_0001>

<llo_original>
// kernel: tpu_custom_call.1
$region0: #{tpu_custom_call.1}
  #allocation0 [shape = 'u32[]', space=smem, size = 0x4, offset = 0x4, fixed_abs, tag = 'smem constant byte address 0x4 - core index']
  #allocation1 [shape = 'u32[144,128]{1,0:T(1,128)}', space=vmem, size = 0x12000, scoped, tag = 'internal scratch']
  #allocation2 [shape = 'f32[1,1]{1,0:T(1,128)S(1)}', space=vmem, size = 0x200, scoped, tag = 'scoped memory for tpu_custom_call.1']
  #allocation3 [shape = 'f32[1]{0:T(128)S(6)}', space=smem, size = 0x200, scoped, tag = 'scoped memory for tpu_custom_call.1']
  %s0 = inlined_call_operand.vmem [shape: f32[256,3], index: 0, kind: input, shape index: {}]
  %s1 = inlined_call_operand.vmem [shape: f32[256,64], index: 1, kind: input, shape index: {}]
  %s2 = inlined_call_operand.vmem [shape: f32[3,128], index: 2, kind: input, shape index: {}]
  %s3 = inlined_call_operand.vmem [shape: bf16[64,128], index: 3, kind: input, shape index: {}]
  %s4 = inlined_call_operand.vmem [shape: f32[1,128], index: 4, kind: input, shape index: {}]
  %s5 = inlined_call_operand.vmem [shape: bf16[128,128], index: 5, kind: input, shape index: {}]
  %s6 = inlined_call_operand.vmem [shape: f32[1,128], index: 6, kind: input, shape index: {}]
  %s7 = inlined_call_operand.vmem [shape: bf16[128,128], index: 7, kind: input, shape index: {}]
  %s8 = inlined_call_operand.vmem [shape: f32[1,128], index: 8, kind: input, shape index: {}]
  %s9 = inlined_call_operand.vmem [shape: bf16[128,128], index: 9, kind: input, shape index: {}]
  %s10 = inlined_call_operand.vmem [shape: f32[1,128], index: 10, kind: input, shape index: {}]
  %s11 = inlined_call_operand.vmem [shape: bf16[128,128], index: 11, kind: input, shape index: {}]
  %s12 = inlined_call_operand.vmem [shape: f32[3,128], index: 12, kind: input, shape index: {}]
  %s13 = inlined_call_operand.vmem [shape: f32[1,128], index: 13, kind: input, shape index: {}]
  %s14 = inlined_call_operand.vmem [shape: bf16[128,128], index: 14, kind: input, shape index: {}]
  %s15 = inlined_call_operand.vmem [shape: f32[1,128], index: 15, kind: input, shape index: {}]
  %s16 = inlined_call_operand.vmem [shape: bf16[128,128], index: 16, kind: input, shape index: {}]
  %s17 = inlined_call_operand.vmem [shape: f32[1,128], index: 17, kind: input, shape index: {}]
  %s18 = inlined_call_operand.vmem [shape: f32[1,128], index: 18, kind: input, shape index: {}]
  %s19 = inlined_call_operand.<no memory space> [shape: f32[1,1], index: 19, kind: input, shape index: {}]
  %s20 = inlined_call_operand.<no memory space> [shape: f32[1], index: 20, kind: input, shape index: {}]
  %s21 = inlined_call_operand.vmem [shape: f32[256,1], index: 21, kind: output, shape index: {}]
  %s22 = sld [smem:[#allocation0]]
  $region94: #{tpu_custom_call.1} parent=0
    _
  %s24 = ssub.s32 1, %s22
  %s25 = scalar_select 0, %s24, %s22
  %v26 = vstv %s19
  %27 = vst [vmem:[#allocation2] sm:$0x1] %v26
  %28 = sst [smem:[#allocation3]] %s20
  // Predicated region
  $region2: #{tpu_custom_call.1} parent=0 // pred_check
    _
  $region3: #{tpu_custom_call.1} parent=0 // pred_check_branch
    %30 = sbr.rel (0) target = $region5
  $region4: #{tpu_custom_call.1} parent=0 // pred_region
    _
  $region5: #{tpu_custom_call.1} parent=0 // pred_fallthru
    _
  // Predicated region
  $region6: #{tpu_custom_call.1} parent=0 // pred_check
    _
  $region7: #{tpu_custom_call.1} parent=0 // pred_check_branch
    %32 = sbr.rel (0) target = $region9
  $region8: #{tpu_custom_call.1} parent=0 // pred_region
    _
  $region9: #{tpu_custom_call.1} parent=0 // pred_fallthru
    _
  // Predicated region
  $region10: #{tpu_custom_call.1} parent=0 // pred_check
    _
  $region11: #{tpu_custom_call.1} parent=0 // pred_check_branch
    %34 = sbr.rel (0) target = $region13
  $region12: #{tpu_custom_call.1} parent=0 // pred_region
    _
  $region13: #{tpu_custom_call.1} parent=0 // pred_fallthru
    _
  // Predicated region
  $region14: #{tpu_custom_call.1} parent=0 // pred_check
    _
  $region15: #{tpu_custom_call.1} parent=0 // pred_check_branch
    %36 = sbr.rel (0) target = $region17
  $region16: #{tpu_custom_call.1} parent=0 // pred_region
    _
  $region17: #{tpu_custom_call.1} parent=0 // pred_fallthru
    _
  // Predicated region
  $region18: #{tpu_custom_call.1} parent=0 // pred_check
    _
  $region19: #{tpu_custom_call.1} parent=0 // pred_check_branch
    %38 = sbr.rel (0) target = $region21
  $region20: #{tpu_custom_call.1} parent=0 // pred_region
    _
  $region21: #{tpu_custom_call.1} parent=0 // pred_fallthru
    _
  // Predicated region
  $region22: #{tpu_custom_call.1} parent=0 // pred_check
    _
  $region23: #{tpu_custom_call.1} parent=0 // pred_check_branch
    %40 = sbr.rel (0) target = $region25
  $region24: #{tpu_custom_call.1} parent=0 // pred_region
    _
  $region25: #{tpu_custom_call.1} parent=0 // pred_fallthru
    _
  // Predicated region
  $region26: #{tpu_custom_call.1} parent=0 // pred_check
    _
  $region27: #{tpu_custom_call.1} parent=0 // pred_check_branch
    %42 = sbr.rel (0) target = $region29
  $region28: #{tpu_custom_call.1} parent=0 // pred_region
    _
  $region29: #{tpu_custom_call.1} parent=0 // pred_fallthru
    _
  // Predicated region
  $region30: #{tpu_custom_call.1} parent=0 // pred_check
    _
  $region31: #{tpu_custom_call.1} parent=0 // pred_check_branch
    %44 = sbr.rel (0) target = $region33
  $region32: #{tpu_custom_call.1} parent=0 // pred_region
    _
  $region33: #{tpu_custom_call.1} parent=0 // pred_fallthru
    _
  // Predicated region
  $region34: #{tpu_custom_call.1} parent=0 // pred_check
    _
  $region35: #{tpu_custom_call.1} parent=0 // pred_check_branch
    %46 = sbr.rel (0) target = $region37
  $region36: #{tpu_custom_call.1} parent=0 // pred_region
    _
  $region37: #{tpu_custom_call.1} parent=0 // pred_fallthru
    _
  // Predicated region
  $region38: #{tpu_custom_call.1} parent=0 // pred_check
    _
  $region39: #{tpu_custom_call.1} parent=0 // pred_check_branch
    %48 = sbr.rel (0) target = $region41
  $region40: #{tpu_custom_call.1} parent=0 // pred_region
    _
  $region41: #{tpu_custom_call.1} parent=0 // pred_fallthru
    _
  // Predicated region
  $region42: #{tpu_custom_call.1} parent=0 // pred_check
    _
  $region43: #{tpu_custom_call.1} parent=0 // pred_check_branch
    %50 = sbr.rel (0) target = $region45
  $region44: #{tpu_custom_call.1} parent=0 // pred_region
    _
  $region45: #{tpu_custom_call.1} parent=0 // pred_fallthru
    _
  // Predicated region
  $region46: #{tpu_custom_call.1} parent=0 // pred_check
    _
  $region47: #{tpu_custom_call.1} parent=0 // pred_check_branch
    %52 = sbr.rel (0) target = $region49
  $region48: #{tpu_custom_call.1} parent=0 // pred_region
    _
  $region49: #{tpu_custom_call.1} parent=0 // pred_fallthru
    _
  // Predicated region
  $region50: #{tpu_custom_call.1} parent=0 // pred_check
    _
  $region51: #{tpu_custom_call.1} parent=0 // pred_check_branch
    %54 = sbr.rel (0) target = $region53
  $region52: #{tpu_custom_call.1} parent=0 // pred_region
    _
  $region53: #{tpu_custom_call.1} parent=0 // pred_fallthru
    _
  // Predicated region
  $region54: #{tpu_custom_call.1} parent=0 // pred_check
    _
  $region55: #{tpu_custom_call.1} parent=0 // pred_check_branch
    %56 = sbr.rel (0) target = $region57
  $region56: #{tpu_custom_call.1} parent=0 // pred_region
    _
  $region57: #{tpu_custom_call.1} parent=0 // pred_fallthru
    _
  // Predicated region
  $region58: #{tpu_custom_call.1} parent=0 // pred_check
    _
  $region59: #{tpu_custom_call.1} parent=0 // pred_check_branch
    %58 = sbr.rel (0) target = $region61
  $region60: #{tpu_custom_call.1} parent=0 // pred_region
    _
  $region61: #{tpu_custom_call.1} parent=0 // pred_fallthru
    _
  // Predicated region
  $region62: #{tpu_custom_call.1} parent=0 // pred_check
    _
  $region63: #{tpu_custom_call.1} parent=0 // pred_check_branch
    %60 = sbr.rel (0) target = $region65
  $region64: #{tpu_custom_call.1} parent=0 // pred_region
    _
  $region65: #{tpu_custom_call.1} parent=0 // pred_fallthru
    _
  // Predicated region
  $region66: #{tpu_custom_call.1} parent=0 // pred_check
    _
  $region67: #{tpu_custom_call.1} parent=0 // pred_check_branch
    %62 = sbr.rel (0) target = $region69
  $region68: #{tpu_custom_call.1} parent=0 // pred_region
    _
  $region69: #{tpu_custom_call.1} parent=0 // pred_fallthru
    _
  // Predicated region
  $region70: #{tpu_custom_call.1} parent=0 // pred_check
    _
  $region71: #{tpu_custom_call.1} parent=0 // pred_check_branch
    %64 = sbr.rel (0) target = $region73
  $region72: #{tpu_custom_call.1} parent=0 // pred_region
    _
  $region73: #{tpu_custom_call.1} parent=0 // pred_fallthru
    _
  // Predicated region
  $region74: #{tpu_custom_call.1} parent=0 // pred_check
    _
  $region75: #{tpu_custom_call.1} parent=0 // pred_check_branch
    %66 = sbr.rel (0) target = $region77
  $region76: #{tpu_custom_call.1} parent=0 // pred_region
    _
  $region77: #{tpu_custom_call.1} parent=0 // pred_fallthru
    _
  // Predicated region
  $region78: #{tpu_custom_call.1} parent=0 // pred_check
    _
  $region79: #{tpu_custom_call.1} parent=0 // pred_check_branch
    %68 = sbr.rel (0) target = $region81
  $region80: #{tpu_custom_call.1} parent=0 // pred_region
    _
  $region81: #{tpu_custom_call.1} parent=0 // pred_fallthru
    _
  // Predicated region
  $region82: #{tpu_custom_call.1} parent=0 // pred_check
    _
  $region83: #{tpu_custom_call.1} parent=0 // pred_check_branch
    %70 = sbr.rel (0) target = $region85
  $region84: #{tpu_custom_call.1} parent=0 // pred_region
    _
  $region85: #{tpu_custom_call.1} parent=0 // pred_fallthru
    _
  %v72 = vld [vmem:[%s0] sm:$0xff]
  %v73 = vld [vmem:[%s0 + $0x8] sm:$0xff]
  %v74 = vld [vmem:[%s0 + $0x10] sm:$0xff]
  %v75 = vld [vmem:[%s0 + $0x18] sm:$0xff]
  %v76 = vld [vmem:[%s0 + $0x20] sm:$0xff]
  %v77 = vld [vmem:[%s0 + $0x28] sm:$0xff]
  %v78 = vld [vmem:[%s0 + $0x30] sm:$0xff]
  %v79 = vld [vmem:[%s0 + $0x38] sm:$0xff]
  %v80 = vld [vmem:[%s0 + $0x40] sm:$0xff]
  %v81 = vld [vmem:[%s0 + $0x48] sm:$0xff]
  %v82 = vld [vmem:[%s0 + $0x50] sm:$0xff]
  %v83 = vld [vmem:[%s0 + $0x58] sm:$0xff]
  %v84 = vld [vmem:[%s0 + $0x60] sm:$0xff]
  %v85 = vld [vmem:[%s0 + $0x68] sm:$0xff]
  %v86 = vld [vmem:[%s0 + $0x70] sm:$0xff]
  %v87 = vld [vmem:[%s0 + $0x78] sm:$0xff]
  %v88 = vld [vmem:[%s0 + $0x80] sm:$0xff]
  %v89 = vld [vmem:[%s0 + $0x88] sm:$0xff]
  %v90 = vld [vmem:[%s0 + $0x90] sm:$0xff]
  %v91 = vld [vmem:[%s0 + $0x98] sm:$0xff]
  %v92 = vld [vmem:[%s0 + $0xa0] sm:$0xff]
  %v93 = vld [vmem:[%s0 + $0xa8] sm:$0xff]
  %v94 = vld [vmem:[%s0 + $0xb0] sm:$0xff]
  %v95 = vld [vmem:[%s0 + $0xb8] sm:$0xff]
  %v96 = vld [vmem:[%s0 + $0xc0] sm:$0xff]
  %v97 = vld [vmem:[%s0 + $0xc8] sm:$0xff]
  %v98 = vld [vmem:[%s0 + $0xd0] sm:$0xff]
  %v99 = vld [vmem:[%s0 + $0xd8] sm:$0xff]
  %v100 = vld [vmem:[%s0 + $0xe0] sm:$0xff]
  %v101 = vld [vmem:[%s0 + $0xe8] sm:$0xff]
  %v102 = vld [vmem:[%s0 + $0xf0] sm:$0xff]
  %v103 = vld [vmem:[%s0 + $0xf8] sm:$0xff]
  %s104 = sld [smem:[#allocation3]]
  %v105 = vld [vmem:[%s1] sm:$0xff]
  %v106 = vld [vmem:[%s1 + $0x8] sm:$0xff]
  %v107 = vld [vmem:[%s1 + $0x10] sm:$0xff]
  %v108 = vld [vmem:[%s1 + $0x18] sm:$0xff]
  %v109 = vld [vmem:[%s1 + $0x20] sm:$0xff]
  %v110 = vld [vmem:[%s1 + $0x28] sm:$0xff]
  %v111 = vld [vmem:[%s1 + $0x30] sm:$0xff]
  %v112 = vld [vmem:[%s1 + $0x38] sm:$0xff]
  %v113 = vld [vmem:[%s1 + $0x40] sm:$0xff]
  %v114 = vld [vmem:[%s1 + $0x48] sm:$0xff]
  %v115 = vld [vmem:[%s1 + $0x50] sm:$0xff]
  %v116 = vld [vmem:[%s1 + $0x58] sm:$0xff]
  %v117 = vld [vmem:[%s1 + $0x60] sm:$0xff]
  %v118 = vld [vmem:[%s1 + $0x68] sm:$0xff]
  %v119 = vld [vmem:[%s1 + $0x70] sm:$0xff]
  %v120 = vld [vmem:[%s1 + $0x78] sm:$0xff]
  %v121 = vld [vmem:[%s1 + $0x80] sm:$0xff]
  %v122 = vld [vmem:[%s1 + $0x88] sm:$0xff]
  %v123 = vld [vmem:[%s1 + $0x90] sm:$0xff]
  %v124 = vld [vmem:[%s1 + $0x98] sm:$0xff]
  %v125 = vld [vmem:[%s1 + $0xa0] sm:$0xff]
  %v126 = vld [vmem:[%s1 + $0xa8] sm:$0xff]
  %v127 = vld [vmem:[%s1 + $0xb0] sm:$0xff]
  %v128 = vld [vmem:[%s1 + $0xb8] sm:$0xff]
  %v129 = vld [vmem:[%s1 + $0xc0] sm:$0xff]
  %v130 = vld [vmem:[%s1 + $0xc8] sm:$0xff]
  %v131 = vld [vmem:[%s1 + $0xd0] sm:$0xff]
  %v132 = vld [vmem:[%s1 + $0xd8] sm:$0xff]
  %v133 = vld [vmem:[%s1 + $0xe0] sm:$0xff]
  %v134 = vld [vmem:[%s1 + $0xe8] sm:$0xff]
  %v135 = vld [vmem:[%s1 + $0xf0] sm:$0xff]
  %v136 = vld [vmem:[%s1 + $0xf8] sm:$0xff]
  %v137 = vpack.c.bf16 %v106, %v105
  %v138 = vpack.c.bf16 %v108, %v107
  %v139 = vpack.c.bf16 %v110, %v109
  %v140 = vpack.c.bf16 %v112, %v111
  %v141 = vpack.c.bf16 %v114, %v113
  %v142 = vpack.c.bf16 %v116, %v115
  %v143 = vpack.c.bf16 %v118, %v117
  %v144 = vpack.c.bf16 %v120, %v119
  %v145 = vpack.c.bf16 %v122, %v121
  %v146 = vpack.c.bf16 %v124, %v123
  %v147 = vpack.c.bf16 %v126, %v125
  %v148 = vpack.c.bf16 %v128, %v127
  %v149 = vpack.c.bf16 %v130, %v129
  %v150 = vpack.c.bf16 %v132, %v131
  %v151 = vpack.c.bf16 %v134, %v133
  %v152 = vpack.c.bf16 %v136, %v135
  %v153 = vld [vmem:[%s3] sm:$0xf]
  %v154 = vld [vmem:[%s3 + $0x4] sm:$0xf]
  %v155 = vld [vmem:[%s3 + $0x8] sm:$0xf]
  %v156 = vld [vmem:[%s3 + $0xc] sm:$0xf]
  %v157 = vld [vmem:[%s3 + $0x10] sm:$0xf]
  %v158 = vld [vmem:[%s3 + $0x14] sm:$0xf]
  %v159 = vld [vmem:[%s3 + $0x18] sm:$0xf]
  %v160 = vld [vmem:[%s3 + $0x1c] sm:$0xf]
  %v161 = vld [vmem:[%s2] sm:$0x7]
  %163 = vset.pattern.permute.xlu0 0
  %164 = vperm.xlu0 %163, %v72
  %v165 = vpop.permute.xlu0 %164
  %168 = vset.pattern.permute.xlu0 0
  %169 = vperm.xlu0 %168, %v73
  %v170 = vpop.permute.xlu0 %169
  %173 = vset.pattern.permute.xlu0 0
  %174 = vperm.xlu0 %173, %v74
  %v175 = vpop.permute.xlu0 %174
  %178 = vset.pattern.permute.xlu0 0
  %179 = vperm.xlu0 %178, %v75
  %v180 = vpop.permute.xlu0 %179
  %183 = vset.pattern.permute.xlu0 0
  %184 = vperm.xlu0 %183, %v76
  %v185 = vpop.permute.xlu0 %184
  %188 = vset.pattern.permute.xlu0 0
  %189 = vperm.xlu0 %188, %v77
  %v190 = vpop.permute.xlu0 %189
  %193 = vset.pattern.permute.xlu0 0
  %194 = vperm.xlu0 %193, %v78
  %v195 = vpop.permute.xlu0 %194
  %198 = vset.pattern.permute.xlu0 0
  %199 = vperm.xlu0 %198, %v79
  %v200 = vpop.permute.xlu0 %199
  %203 = vset.pattern.permute.xlu0 0
  %204 = vperm.xlu0 %203, %v80
  %v205 = vpop.permute.xlu0 %204
  %208 = vset.pattern.permute.xlu0 0
  %209 = vperm.xlu0 %208, %v81
  %v210 = vpop.permute.xlu0 %209
  %213 = vset.pattern.permute.xlu0 0
  %214 = vperm.xlu0 %213, %v82
  %v215 = vpop.permute.xlu0 %214
  %218 = vset.pattern.permute.xlu0 0
  %219 = vperm.xlu0 %218, %v83
  %v220 = vpop.permute.xlu0 %219
  %223 = vset.pattern.permute.xlu0 0
  %224 = vperm.xlu0 %223, %v84
  %v225 = vpop.permute.xlu0 %224
  %228 = vset.pattern.permute.xlu0 0
  %229 = vperm.xlu0 %228, %v85
  %v230 = vpop.permute.xlu0 %229
  %233 = vset.pattern.permute.xlu0 0
  %234 = vperm.xlu0 %233, %v86
  %v235 = vpop.permute.xlu0 %234
  %238 = vset.pattern.permute.xlu0 0
  %239 = vperm.xlu0 %238, %v87
  %v240 = vpop.permute.xlu0 %239
  %243 = vset.pattern.permute.xlu0 0
  %244 = vperm.xlu0 %243, %v88
  %v245 = vpop.permute.xlu0 %244
  %248 = vset.pattern.permute.xlu0 0
  %249 = vperm.xlu0 %248, %v89
  %v250 = vpop.permute.xlu0 %249
  %253 = vset.pattern.permute.xlu0 0
  %254 = vperm.xlu0 %253, %v90
  %v255 = vpop.permute.xlu0 %254
  %258 = vset.pattern.permute.xlu0 0
  %259 = vperm.xlu0 %258, %v91
  %v260 = vpop.permute.xlu0 %259
  %263 = vset.pattern.permute.xlu0 0
  %264 = vperm.xlu0 %263, %v92
  %v265 = vpop.permute.xlu0 %264
  %268 = vset.pattern.permute.xlu0 0
  %269 = vperm.xlu0 %268, %v93
  %v270 = vpop.permute.xlu0 %269
  %273 = vset.pattern.permute.xlu0 0
  %274 = vperm.xlu0 %273, %v94
  %v275 = vpop.permute.xlu0 %274
  %278 = vset.pattern.permute.xlu0 0
  %279 = vperm.xlu0 %278, %v95
  %v280 = vpop.permute.xlu0 %279
  %283 = vset.pattern.permute.xlu0 0
  %284 = vperm.xlu0 %283, %v96
  %v285 = vpop.permute.xlu0 %284
  %288 = vset.pattern.permute.xlu0 0
  %289 = vperm.xlu0 %288, %v97
  %v290 = vpop.permute.xlu0 %289
  %293 = vset.pattern.permute.xlu0 0
  %294 = vperm.xlu0 %293, %v98
  %v295 = vpop.permute.xlu0 %294
  %298 = vset.pattern.permute.xlu0 0
  %299 = vperm.xlu0 %298, %v99
  %v300 = vpop.permute.xlu0 %299
  %303 = vset.pattern.permute.xlu0 0
  %304 = vperm.xlu0 %303, %v100
  %v305 = vpop.permute.xlu0 %304
  %308 = vset.pattern.permute.xlu0 0
  %309 = vperm.xlu0 %308, %v101
  %v310 = vpop.permute.xlu0 %309
  %313 = vset.pattern.permute.xlu0 0
  %314 = vperm.xlu0 %313, %v102
  %v315 = vpop.permute.xlu0 %314
  %318 = vset.pattern.permute.xlu0 0
  %319 = vperm.xlu0 %318, %v103
  %v320 = vpop.permute.xlu0 %319
  %v322 = vlaneseq
  %v323 = vshrl.u32 %v322, 7
  %v324 = vsub.s32 0, %v323
  %v325 = vrot.slane %v161, %v324
  %v326 = vmul.f32 %v165, %v325
  %v327 = vmul.f32 %v170, %v325
  %v328 = vmul.f32 %v175, %v325
  %v329 = vmul.f32 %v180, %v325
  %v330 = vmul.f32 %v185, %v325
  %v331 = vmul.f32 %v190, %v325
  %v332 = vmul.f32 %v195, %v325
  %v333 = vmul.f32 %v200, %v325
  %v334 = vmul.f32 %v205, %v325
  %v335 = vmul.f32 %v210, %v325
  %v336 = vmul.f32 %v215, %v325
  %v337 = vmul.f32 %v220, %v325
  %v338 = vmul.f32 %v225, %v325
  %v339 = vmul.f32 %v230, %v325
  %v340 = vmul.f32 %v235, %v325
  %v341 = vmul.f32 %v240, %v325
  %v342 = vmul.f32 %v245, %v325
  %v343 = vmul.f32 %v250, %v325
  %v344 = vmul.f32 %v255, %v325
  %v345 = vmul.f32 %v260, %v325
  %v346 = vmul.f32 %v265, %v325
  %v347 = vmul.f32 %v270, %v325
  %v348 = vmul.f32 %v275, %v325
  %v349 = vmul.f32 %v280, %v325
  %v350 = vmul.f32 %v285, %v325
  %v351 = vmul.f32 %v290, %v325
  %v352 = vmul.f32 %v295, %v325
  %v353 = vmul.f32 %v300, %v325
  %v354 = vmul.f32 %v305, %v325
  %v355 = vmul.f32 %v310, %v325
  %v356 = vmul.f32 %v315, %v325
  %v357 = vmul.f32 %v320, %v325
  %358 = vset.pattern.permute.xlu0 1
  %359 = vperm.xlu0 %358, %v72
  %v360 = vpop.permute.xlu0 %359
  %362 = vset.pattern.permute.xlu0 1
  %363 = vperm.xlu0 %362, %v73
  %v364 = vpop.permute.xlu0 %363
  %366 = vset.pattern.permute.xlu0 1
  %367 = vperm.xlu0 %366, %v74
  %v368 = vpop.permute.xlu0 %367
  %370 = vset.pattern.permute.xlu0 1
  %371 = vperm.xlu0 %370, %v75
  %v372 = vpop.permute.xlu0 %371
  %374 = vset.pattern.permute.xlu0 1
  %375 = vperm.xlu0 %374, %v76
  %v376 = vpop.permute.xlu0 %375
  %378 = vset.pattern.permute.xlu0 1
  %379 = vperm.xlu0 %378, %v77
  %v380 = vpop.permute.xlu0 %379
  %382 = vset.pattern.permute.xlu0 1
  %383 = vperm.xlu0 %382, %v78
  %v384 = vpop.permute.xlu0 %383
  %386 = vset.pattern.permute.xlu0 1
  %387 = vperm.xlu0 %386, %v79
  %v388 = vpop.permute.xlu0 %387
  %390 = vset.pattern.permute.xlu0 1
  %391 = vperm.xlu0 %390, %v80
  %v392 = vpop.permute.xlu0 %391
  %394 = vset.pattern.permute.xlu0 1
  %395 = vperm.xlu0 %394, %v81
  %v396 = vpop.permute.xlu0 %395
  %398 = vset.pattern.permute.xlu0 1
  %399 = vperm.xlu0 %398, %v82
  %v400 = vpop.permute.xlu0 %399
  %402 = vset.pattern.permute.xlu0 1
  %403 = vperm.xlu0 %402, %v83
  %v404 = vpop.permute.xlu0 %403
  %406 = vset.pattern.permute.xlu0 1
  %407 = vperm.xlu0 %406, %v84
  %v408 = vpop.permute.xlu0 %407
  %410 = vset.pattern.permute.xlu0 1
  %411 = vperm.xlu0 %410, %v85
  %v412 = vpop.permute.xlu0 %411
  %414 = vset.pattern.permute.xlu0 1
  %415 = vperm.xlu0 %414, %v86
  %v416 = vpop.permute.xlu0 %415
  %418 = vset.pattern.permute.xlu0 1
  %419 = vperm.xlu0 %418, %v87
  %v420 = vpop.permute.xlu0 %419
  %422 = vset.pattern.permute.xlu0 1
  %423 = vperm.xlu0 %422, %v88
  %v424 = vpop.permute.xlu0 %423
  %426 = vset.pattern.permute.xlu0 1
  %427 = vperm.xlu0 %426, %v89
  %v428 = vpop.permute.xlu0 %427
  %430 = vset.pattern.permute.xlu0 1
  %431 = vperm.xlu0 %430, %v90
  %v432 = vpop.permute.xlu0 %431
  %434 = vset.pattern.permute.xlu0 1
  %435 = vperm.xlu0 %434, %v91
  %v436 = vpop.permute.xlu0 %435
  %438 = vset.pattern.permute.xlu0 1
  %439 = vperm.xlu0 %438, %v92
  %v440 = vpop.permute.xlu0 %439
  %442 = vset.pattern.permute.xlu0 1
  %443 = vperm.xlu0 %442, %v93
  %v444 = vpop.permute.xlu0 %443
  %446 = vset.pattern.permute.xlu0 1
  %447 = vperm.xlu0 %446, %v94
  %v448 = vpop.permute.xlu0 %447
  %450 = vset.pattern.permute.xlu0 1
  %451 = vperm.xlu0 %450, %v95
  %v452 = vpop.permute.xlu0 %451
  %454 = vset.pattern.permute.xlu0 1
  %455 = vperm.xlu0 %454, %v96
  %v456 = vpop.permute.xlu0 %455
  %458 = vset.pattern.permute.xlu0 1
  %459 = vperm.xlu0 %458, %v97
  %v460 = vpop.permute.xlu0 %459
  %462 = vset.pattern.permute.xlu0 1
  %463 = vperm.xlu0 %462, %v98
  %v464 = vpop.permute.xlu0 %463
  %466 = vset.pattern.permute.xlu0 1
  %467 = vperm.xlu0 %466, %v99
  %v468 = vpop.permute.xlu0 %467
  %470 = vset.pattern.permute.xlu0 1
  %471 = vperm.xlu0 %470, %v100
  %v472 = vpop.permute.xlu0 %471
  %474 = vset.pattern.permute.xlu0 1
  %475 = vperm.xlu0 %474, %v101
  %v476 = vpop.permute.xlu0 %475
  %478 = vset.pattern.permute.xlu0 1
  %479 = vperm.xlu0 %478, %v102
  %v480 = vpop.permute.xlu0 %479
  %482 = vset.pattern.permute.xlu0 1
  %483 = vperm.xlu0 %482, %v103
  %v484 = vpop.permute.xlu0 %483
  %v486 = vlaneseq
  %v487 = vshrl.u32 %v486, 7
  %v488 = vsub.s32 1, %v487
  %v489 = vrot.slane %v161, %v488
  %v490 = vmul.f32 %v360, %v489
  %v491 = vmul.f32 %v364, %v489
  %v492 = vmul.f32 %v368, %v489
  %v493 = vmul.f32 %v372, %v489
  %v494 = vmul.f32 %v376, %v489
  %v495 = vmul.f32 %v380, %v489
  %v496 = vmul.f32 %v384, %v489
  %v497 = vmul.f32 %v388, %v489
  %v498 = vmul.f32 %v392, %v489
  %v499 = vmul.f32 %v396, %v489
  %v500 = vmul.f32 %v400, %v489
  %v501 = vmul.f32 %v404, %v489
  %v502 = vmul.f32 %v408, %v489
  %v503 = vmul.f32 %v412, %v489
  %v504 = vmul.f32 %v416, %v489
  %v505 = vmul.f32 %v420, %v489
  %v506 = vmul.f32 %v424, %v489
  %v507 = vmul.f32 %v428, %v489
  %v508 = vmul.f32 %v432, %v489
  %v509 = vmul.f32 %v436, %v489
  %v510 = vmul.f32 %v440, %v489
  %v511 = vmul.f32 %v444, %v489
  %v512 = vmul.f32 %v448, %v489
  %v513 = vmul.f32 %v452, %v489
  %v514 = vmul.f32 %v456, %v489
  %v515 = vmul.f32 %v460, %v489
  %v516 = vmul.f32 %v464, %v489
  %v517 = vmul.f32 %v468, %v489
  %v518 = vmul.f32 %v472, %v489
  %v519 = vmul.f32 %v476, %v489
  %v520 = vmul.f32 %v480, %v489
  %v521 = vmul.f32 %v484, %v489
  %v522 = vadd.f32 %v326, %v490
  %v523 = vadd.f32 %v327, %v491
  %v524 = vadd.f32 %v328, %v492
  %v525 = vadd.f32 %v329, %v493
  %v526 = vadd.f32 %v330, %v494
  %v527 = vadd.f32 %v331, %v495
  %v528 = vadd.f32 %v332, %v496
  %v529 = vadd.f32 %v333, %v497
  %v530 = vadd.f32 %v334, %v498
  %v531 = vadd.f32 %v335, %v499
  %v532 = vadd.f32 %v336, %v500
  %v533 = vadd.f32 %v337, %v501
  %v534 = vadd.f32 %v338, %v502
  %v535 = vadd.f32 %v339, %v503
  %v536 = vadd.f32 %v340, %v504
  %v537 = vadd.f32 %v341, %v505
  %v538 = vadd.f32 %v342, %v506
  %v539 = vadd.f32 %v343, %v507
  %v540 = vadd.f32 %v344, %v508
  %v541 = vadd.f32 %v345, %v509
  %v542 = vadd.f32 %v346, %v510
  %v543 = vadd.f32 %v347, %v511
  %v544 = vadd.f32 %v348, %v512
  %v545 = vadd.f32 %v349, %v513
  %v546 = vadd.f32 %v350, %v514
  %v547 = vadd.f32 %v351, %v515
  %v548 = vadd.f32 %v352, %v516
  %v549 = vadd.f32 %v353, %v517
  %v550 = vadd.f32 %v354, %v518
  %v551 = vadd.f32 %v355, %v519
  %v552 = vadd.f32 %v356, %v520
  %v553 = vadd.f32 %v357, %v521
  %554 = vset.pattern.permute.xlu0 2
  %555 = vperm.xlu0 %554, %v72
  %v556 = vpop.permute.xlu0 %555
  %558 = vset.pattern.permute.xlu0 2
  %559 = vperm.xlu0 %558, %v73
  %v560 = vpop.permute.xlu0 %559
  %562 = vset.pattern.permute.xlu0 2
  %563 = vperm.xlu0 %562, %v74
  %v564 = vpop.permute.xlu0 %563
  %566 = vset.pattern.permute.xlu0 2
  %567 = vperm.xlu0 %566, %v75
  %v568 = vpop.permute.xlu0 %567
  %570 = vset.pattern.permute.xlu0 2
  %571 = vperm.xlu0 %570, %v76
  %v572 = vpop.permute.xlu0 %571
  %574 = vset.pattern.permute.xlu0 2
  %575 = vperm.xlu0 %574, %v77
  %v576 = vpop.permute.xlu0 %575
  %578 = vset.pattern.permute.xlu0 2
  %579 = vperm.xlu0 %578, %v78
  %v580 = vpop.permute.xlu0 %579
  %582 = vset.pattern.permute.xlu0 2
  %583 = vperm.xlu0 %582, %v79
  %v584 = vpop.permute.xlu0 %583
  %586 = vset.pattern.permute.xlu0 2
  %587 = vperm.xlu0 %586, %v80
  %v588 = vpop.permute.xlu0 %587
  %590 = vset.pattern.permute.xlu0 2
  %591 = vperm.xlu0 %590, %v81
  %v592 = vpop.permute.xlu0 %591
  %594 = vset.pattern.permute.xlu0 2
  %595 = vperm.xlu0 %594, %v82
  %v596 = vpop.permute.xlu0 %595
  %598 = vset.pattern.permute.xlu0 2
  %599 = vperm.xlu0 %598, %v83
  %v600 = vpop.permute.xlu0 %599
  %602 = vset.pattern.permute.xlu0 2
  %603 = vperm.xlu0 %602, %v84
  %v604 = vpop.permute.xlu0 %603
  %606 = vset.pattern.permute.xlu0 2
  %607 = vperm.xlu0 %606, %v85
  %v608 = vpop.permute.xlu0 %607
  %610 = vset.pattern.permute.xlu0 2
  %611 = vperm.xlu0 %610, %v86
  %v612 = vpop.permute.xlu0 %611
  %614 = vset.pattern.permute.xlu0 2
  %615 = vperm.xlu0 %614, %v87
  %v616 = vpop.permute.xlu0 %615
  %618 = vset.pattern.permute.xlu0 2
  %619 = vperm.xlu0 %618, %v88
  %v620 = vpop.permute.xlu0 %619
  %622 = vset.pattern.permute.xlu0 2
  %623 = vperm.xlu0 %622, %v89
  %v624 = vpop.permute.xlu0 %623
  %626 = vset.pattern.permute.xlu0 2
  %627 = vperm.xlu0 %626, %v90
  %v628 = vpop.permute.xlu0 %627
  %630 = vset.pattern.permute.xlu0 2
  %631 = vperm.xlu0 %630, %v91
  %v632 = vpop.permute.xlu0 %631
  %634 = vset.pattern.permute.xlu0 2
  %635 = vperm.xlu0 %634, %v92
  %v636 = vpop.permute.xlu0 %635
  %638 = vset.pattern.permute.xlu0 2
  %639 = vperm.xlu0 %638, %v93
  %v640 = vpop.permute.xlu0 %639
  %642 = vset.pattern.permute.xlu0 2
  %643 = vperm.xlu0 %642, %v94
  %v644 = vpop.permute.xlu0 %643
  %646 = vset.pattern.permute.xlu0 2
  %647 = vperm.xlu0 %646, %v95
  %v648 = vpop.permute.xlu0 %647
  %650 = vset.pattern.permute.xlu0 2
  %651 = vperm.xlu0 %650, %v96
  %v652 = vpop.permute.xlu0 %651
  %654 = vset.pattern.permute.xlu0 2
  %655 = vperm.xlu0 %654, %v97
  %v656 = vpop.permute.xlu0 %655
  %658 = vset.pattern.permute.xlu0 2
  %659 = vperm.xlu0 %658, %v98
  %v660 = vpop.permute.xlu0 %659
  %662 = vset.pattern.permute.xlu0 2
  %663 = vperm.xlu0 %662, %v99
  %v664 = vpop.permute.xlu0 %663
  %666 = vset.pattern.permute.xlu0 2
  %667 = vperm.xlu0 %666, %v100
  %v668 = vpop.permute.xlu0 %667
  %670 = vset.pattern.permute.xlu0 2
  %671 = vperm.xlu0 %670, %v101
  %v672 = vpop.permute.xlu0 %671
  %674 = vset.pattern.permute.xlu0 2
  %675 = vperm.xlu0 %674, %v102
  %v676 = vpop.permute.xlu0 %675
  %678 = vset.pattern.permute.xlu0 2
  %679 = vperm.xlu0 %678, %v103
  %v680 = vpop.permute.xlu0 %679
  %v682 = vlaneseq
  %v683 = vshrl.u32 %v682, 7
  %v684 = vsub.s32 2, %v683
  %v685 = vrot.slane %v161, %v684
  %v686 = vmul.f32 %v556, %v685
  %v687 = vmul.f32 %v560, %v685
  %v688 = vmul.f32 %v564, %v685
  %v689 = vmul.f32 %v568, %v685
  %v690 = vmul.f32 %v572, %v685
  %v691 = vmul.f32 %v576, %v685
  %v692 = vmul.f32 %v580, %v685
  %v693 = vmul.f32 %v584, %v685
  %v694 = vmul.f32 %v588, %v685
  %v695 = vmul.f32 %v592, %v685
  %v696 = vmul.f32 %v596, %v685
  %v697 = vmul.f32 %v600, %v685
  %v698 = vmul.f32 %v604, %v685
  %v699 = vmul.f32 %v608, %v685
  %v700 = vmul.f32 %v612, %v685
  %v701 = vmul.f32 %v616, %v685
  %v702 = vmul.f32 %v620, %v685
  %v703 = vmul.f32 %v624, %v685
  %v704 = vmul.f32 %v628, %v685
  %v705 = vmul.f32 %v632, %v685
  %v706 = vmul.f32 %v636, %v685
  %v707 = vmul.f32 %v640, %v685
  %v708 = vmul.f32 %v644, %v685
  %v709 = vmul.f32 %v648, %v685
  %v710 = vmul.f32 %v652, %v685
  %v711 = vmul.f32 %v656, %v685
  %v712 = vmul.f32 %v660, %v685
  %v713 = vmul.f32 %v664, %v685
  %v714 = vmul.f32 %v668, %v685
  %v715 = vmul.f32 %v672, %v685
  %v716 = vmul.f32 %v676, %v685
  %v717 = vmul.f32 %v680, %v685
  %v718 = vadd.f32 %v522, %v686
  %v719 = vadd.f32 %v523, %v687
  %v720 = vadd.f32 %v524, %v688
  %v721 = vadd.f32 %v525, %v689
  %v722 = vadd.f32 %v526, %v690
  %v723 = vadd.f32 %v527, %v691
  %v724 = vadd.f32 %v528, %v692
  %v725 = vadd.f32 %v529, %v693
  %v726 = vadd.f32 %v530, %v694
  %v727 = vadd.f32 %v531, %v695
  %v728 = vadd.f32 %v532, %v696
  %v729 = vadd.f32 %v533, %v697
  %v730 = vadd.f32 %v534, %v698
  %v731 = vadd.f32 %v535, %v699
  %v732 = vadd.f32 %v536, %v700
  %v733 = vadd.f32 %v537, %v701
  %v734 = vadd.f32 %v538, %v702
  %v735 = vadd.f32 %v539, %v703
  %v736 = vadd.f32 %v540, %v704
  %v737 = vadd.f32 %v541, %v705
  %v738 = vadd.f32 %v542, %v706
  %v739 = vadd.f32 %v543, %v707
  %v740 = vadd.f32 %v544, %v708
  %v741 = vadd.f32 %v545, %v709
  %v742 = vadd.f32 %v546, %v710
  %v743 = vadd.f32 %v547, %v711
  %v744 = vadd.f32 %v548, %v712
  %v745 = vadd.f32 %v549, %v713
  %v746 = vadd.f32 %v550, %v714
  %v747 = vadd.f32 %v551, %v715
  %v748 = vadd.f32 %v552, %v716
  %v749 = vadd.f32 %v553, %v717
  %v758 = vunpack.c.l.b16 %v153
  %v759 = vunpack.c.l.b16 %v154
  %v760 = vunpack.c.l.b16 %v155
  %v761 = vunpack.c.l.b16 %v156
  %v762 = vunpack.c.l.b16 %v157
  %v763 = vunpack.c.l.b16 %v158
  %v764 = vunpack.c.l.b16 %v159
  %v765 = vunpack.c.l.b16 %v160
  %v766 = vpack.c.b16 %v759, %v758
  %v767 = vpack.c.b16 %v761, %v760
  %v768 = vpack.c.b16 %v763, %v762
  %v769 = vpack.c.b16 %v765, %v764
  %vm774 = vcmask 523264
  %v776 = vsel %vm774, %v137, 0
  %v779 = vsel %vm774, %v138, 0
  %v782 = vsel %vm774, %v139, 0
  %v785 = vsel %vm774, %v140, 0
  %v788 = vsel %vm774, %v141, 0
  %v791 = vsel %vm774, %v142, 0
  %v794 = vsel %vm774, %v143, 0
  %v797 = vsel %vm774, %v144, 0
  %v800 = vsel %vm774, %v145, 0
  %v803 = vsel %vm774, %v146, 0
  %v806 = vsel %vm774, %v147, 0
  %v809 = vsel %vm774, %v148, 0
  %v812 = vsel %vm774, %v149, 0
  %v815 = vsel %vm774, %v150, 0
  %v818 = vsel %vm774, %v151, 0
  %v821 = vsel %vm774, %v152, 0
  %823 = vmatprep.subr.bf16.mxu0 0
  %824 = vmatpush1.bf16.msra.mxu0 0
  %825 = vmatprep.subr.bf16.mxu0 0
  %826 = vmatpush1.bf16.msra.mxu0 0
  %827 = vmatprep.subr.bf16.mxu0 0
  %828 = vmatpush1.bf16.msra.mxu0 0
  %829 = vmatprep.subr.bf16.mxu0 0
  %830 = vmatpush1.bf16.msra.mxu0 0
  %831 = vmatprep.subr.bf16.mxu0 0
  %832 = vmatpush1.bf16.msra.mxu0 %v769
  %833 = vmatprep.subr.bf16.mxu0 0
  %834 = vmatpush1.bf16.msra.mxu0 %v768
  %835 = vmatprep.subr.bf16.mxu0 0
  %836 = vmatpush1.bf16.msra.mxu0 %v767
  %837 = vmatprep.subr.bf16.mxu0 0
  %838 = vmatpush1.bf16.msra.mxu0 %v766
  %839 = vmatprep.subr.bf16.mxu0 0
  %840 = vmatpush2.bf16.msra.mxu0 0
  %841 = vmatprep.subr.bf16.mxu0 0
  %842 = vmatpush2.bf16.msra.mxu0 0
  %843 = vmatprep.subr.bf16.mxu0 0
  %844 = vmatpush2.bf16.msra.mxu0 0
  %845 = vmatprep.subr.bf16.mxu0 0
  %846 = vmatpush2.bf16.msra.mxu0 0
  %847 = vmatprep.subr.bf16.mxu0 0
  %848 = vmatpush2.bf16.msra.mxu0 0
  %849 = vmatprep.subr.bf16.mxu0 0
  %850 = vmatpush2.bf16.msra.mxu0 0
  %851 = vmatprep.subr.bf16.mxu0 0
  %852 = vmatpush2.bf16.msra.mxu0 0
  %853 = vmatprep.subr.bf16.mxu0 0
  %854 = vmatpush2.bf16.msra.mxu0 0
  %855 = vmatprep.mubr.bf16.mxu0 0
  %856 = vmatmul.mubr.bf16.gmra.mxu0 %v776
  %v857 = vpop.f32.mrf.mxu0
  %v858 = vadd.f32 %v718, %v857
  %v859 = vpop.f32.mrf.mxu0
  %v860 = vpop.f32.mrf.mxu0
  %v861 = vadd.f32 %v719, %v860
  %v862 = vpop.f32.mrf.mxu0
  %863 = vmatprep.mubr.bf16.mxu0 0
  %864 = vmatmul.mubr.bf16.gmra.mxu0 %v779
  %v865 = vpop.f32.mrf.mxu0
  %v866 = vadd.f32 %v720, %v865
  %v867 = vpop.f32.mrf.mxu0
  %v868 = vpop.f32.mrf.mxu0
  %v869 = vadd.f32 %v721, %v868
  %v870 = vpop.f32.mrf.mxu0
  %871 = vmatprep.mubr.bf16.mxu0 0
  %872 = vmatmul.mubr.bf16.gmra.mxu0 %v782
  %v873 = vpop.f32.mrf.mxu0
  %v874 = vadd.f32 %v722, %v873
  %v875 = vpop.f32.mrf.mxu0
  %v876 = vpop.f32.mrf.mxu0
  %v877 = vadd.f32 %v723, %v876
  %v878 = vpop.f32.mrf.mxu0
  %879 = vmatprep.mubr.bf16.mxu0 0
  %880 = vmatmul.mubr.bf16.gmra.mxu0 %v785
  %v881 = vpop.f32.mrf.mxu0
  %v882 = vadd.f32 %v724, %v881
  %v883 = vpop.f32.mrf.mxu0
  %v884 = vpop.f32.mrf.mxu0
  %v885 = vadd.f32 %v725, %v884
  %v886 = vpop.f32.mrf.mxu0
  %887 = vmatprep.mubr.bf16.mxu0 0
  %888 = vmatmul.mubr.bf16.gmra.mxu0 %v788
  %v889 = vpop.f32.mrf.mxu0
  %v890 = vadd.f32 %v726, %v889
  %v891 = vpop.f32.mrf.mxu0
  %v892 = vpop.f32.mrf.mxu0
  %v893 = vadd.f32 %v727, %v892
  %v894 = vpop.f32.mrf.mxu0
  %895 = vmatprep.mubr.bf16.mxu0 0
  %896 = vmatmul.mubr.bf16.gmra.mxu0 %v791
  %v897 = vpop.f32.mrf.mxu0
  %v898 = vadd.f32 %v728, %v897
  %v899 = vpop.f32.mrf.mxu0
  %v900 = vpop.f32.mrf.mxu0
  %v901 = vadd.f32 %v729, %v900
  %v902 = vpop.f32.mrf.mxu0
  %903 = vmatprep.mubr.bf16.mxu0 0
  %904 = vmatmul.mubr.bf16.gmra.mxu0 %v794
  %v905 = vpop.f32.mrf.mxu0
  %v906 = vadd.f32 %v730, %v905
  %v907 = vpop.f32.mrf.mxu0
  %v908 = vpop.f32.mrf.mxu0
  %v909 = vadd.f32 %v731, %v908
  %v910 = vpop.f32.mrf.mxu0
  %911 = vmatprep.mubr.bf16.mxu0 0
  %912 = vmatmul.mubr.bf16.gmra.mxu0 %v797
  %v913 = vpop.f32.mrf.mxu0
  %v914 = vadd.f32 %v732, %v913
  %v915 = vpop.f32.mrf.mxu0
  %v916 = vpop.f32.mrf.mxu0
  %v917 = vadd.f32 %v733, %v916
  %v918 = vpop.f32.mrf.mxu0
  %919 = vmatprep.mubr.bf16.mxu0 0
  %920 = vmatmul.mubr.bf16.gmra.mxu0 %v800
  %v921 = vpop.f32.mrf.mxu0
  %v922 = vadd.f32 %v734, %v921
  %v923 = vpop.f32.mrf.mxu0
  %v924 = vpop.f32.mrf.mxu0
  %v925 = vadd.f32 %v735, %v924
  %v926 = vpop.f32.mrf.mxu0
  %927 = vmatprep.mubr.bf16.mxu0 0
  %928 = vmatmul.mubr.bf16.gmra.mxu0 %v803
  %v929 = vpop.f32.mrf.mxu0
  %v930 = vadd.f32 %v736, %v929
  %v931 = vpop.f32.mrf.mxu0
  %v932 = vpop.f32.mrf.mxu0
  %v933 = vadd.f32 %v737, %v932
  %v934 = vpop.f32.mrf.mxu0
  %935 = vmatprep.mubr.bf16.mxu0 0
  %936 = vmatmul.mubr.bf16.gmra.mxu0 %v806
  %v937 = vpop.f32.mrf.mxu0
  %v938 = vadd.f32 %v738, %v937
  %v939 = vpop.f32.mrf.mxu0
  %v940 = vpop.f32.mrf.mxu0
  %v941 = vadd.f32 %v739, %v940
  %v942 = vpop.f32.mrf.mxu0
  %943 = vmatprep.mubr.bf16.mxu0 0
  %944 = vmatmul.mubr.bf16.gmra.mxu0 %v809
  %v945 = vpop.f32.mrf.mxu0
  %v946 = vadd.f32 %v740, %v945
  %v947 = vpop.f32.mrf.mxu0
  %v948 = vpop.f32.mrf.mxu0
  %v949 = vadd.f32 %v741, %v948
  %v950 = vpop.f32.mrf.mxu0
  %951 = vmatprep.mubr.bf16.mxu0 0
  %952 = vmatmul.mubr.bf16.gmra.mxu0 %v812
  %v953 = vpop.f32.mrf.mxu0
  %v954 = vadd.f32 %v742, %v953
  %v955 = vpop.f32.mrf.mxu0
  %v956 = vpop.f32.mrf.mxu0
  %v957 = vadd.f32 %v743, %v956
  %v958 = vpop.f32.mrf.mxu0
  %959 = vmatprep.mubr.bf16.mxu0 0
  %960 = vmatmul.mubr.bf16.gmra.mxu0 %v815
  %v961 = vpop.f32.mrf.mxu0
  %v962 = vadd.f32 %v744, %v961
  %v963 = vpop.f32.mrf.mxu0
  %v964 = vpop.f32.mrf.mxu0
  %v965 = vadd.f32 %v745, %v964
  %v966 = vpop.f32.mrf.mxu0
  %967 = vmatprep.mubr.bf16.mxu0 0
  %968 = vmatmul.mubr.bf16.gmra.mxu0 %v818
  %v969 = vpop.f32.mrf.mxu0
  %v970 = vadd.f32 %v746, %v969
  %v971 = vpop.f32.mrf.mxu0
  %v972 = vpop.f32.mrf.mxu0
  %v973 = vadd.f32 %v747, %v972
  %v974 = vpop.f32.mrf.mxu0
  %975 = vmatprep.mubr.bf16.mxu0 0
  %976 = vmatmul.mubr.bf16.gmra.mxu0 %v821
  %v977 = vpop.f32.mrf.mxu0
  %v978 = vadd.f32 %v748, %v977
  %v979 = vpop.f32.mrf.mxu0
  %v980 = vpop.f32.mrf.mxu0
  %v981 = vadd.f32 %v749, %v980
  %v982 = vpop.f32.mrf.mxu0
  %983 = vdwg.mxu0
  %v984 = vld [vmem:[%s4] sm:$0x1]
  %v986 = vlaneseq
  %v987 = vshrl.u32 %v986, 7
  %v988 = vsub.s32 0, %v987
  %v989 = vrot.slane %v984, %v988
  %v991 = vadd.f32 %v858, %v989
  %v992 = vadd.f32 %v861, %v989
  %v993 = vadd.f32 %v866, %v989
  %v994 = vadd.f32 %v869, %v989
  %v995 = vadd.f32 %v874, %v989
  %v996 = vadd.f32 %v877, %v989
  %v997 = vadd.f32 %v882, %v989
  %v998 = vadd.f32 %v885, %v989
  %v999 = vadd.f32 %v890, %v989
  %v1000 = vadd.f32 %v893, %v989
  %v1001 = vadd.f32 %v898, %v989
  %v1002 = vadd.f32 %v901, %v989
  %v1003 = vadd.f32 %v906, %v989
  %v1004 = vadd.f32 %v909, %v989
  %v1005 = vadd.f32 %v914, %v989
  %v1006 = vadd.f32 %v917, %v989
  %v1007 = vadd.f32 %v922, %v989
  %v1008 = vadd.f32 %v925, %v989
  %v1009 = vadd.f32 %v930, %v989
  %v1010 = vadd.f32 %v933, %v989
  %v1011 = vadd.f32 %v938, %v989
  %v1012 = vadd.f32 %v941, %v989
  %v1013 = vadd.f32 %v946, %v989
  %v1014 = vadd.f32 %v949, %v989
  %v1015 = vadd.f32 %v954, %v989
  %v1016 = vadd.f32 %v957, %v989
  %v1017 = vadd.f32 %v962, %v989
  %v1018 = vadd.f32 %v965, %v989
  %v1019 = vadd.f32 %v970, %v989
  %v1020 = vadd.f32 %v973, %v989
  %v1021 = vadd.f32 %v978, %v989
  %v1022 = vadd.f32 %v981, %v989
  %vm1023 = vcmp.gt.f32.partialorder %v991, 0.0
  %vm1024 = vcmp.gt.f32.partialorder %v992, 0.0
  %vm1025 = vcmp.gt.f32.partialorder %v993, 0.0
  %vm1026 = vcmp.gt.f32.partialorder %v994, 0.0
  %vm1027 = vcmp.gt.f32.partialorder %v995, 0.0
  %vm1028 = vcmp.gt.f32.partialorder %v996, 0.0
  %vm1029 = vcmp.gt.f32.partialorder %v997, 0.0
  %vm1030 = vcmp.gt.f32.partialorder %v998, 0.0
  %vm1031 = vcmp.gt.f32.partialorder %v999, 0.0
  %vm1032 = vcmp.gt.f32.partialorder %v1000, 0.0
  %vm1033 = vcmp.gt.f32.partialorder %v1001, 0.0
  %vm1034 = vcmp.gt.f32.partialorder %v1002, 0.0
  %vm1035 = vcmp.gt.f32.partialorder %v1003, 0.0
  %vm1036 = vcmp.gt.f32.partialorder %v1004, 0.0
  %vm1037 = vcmp.gt.f32.partialorder %v1005, 0.0
  %vm1038 = vcmp.gt.f32.partialorder %v1006, 0.0
  %vm1039 = vcmp.gt.f32.partialorder %v1007, 0.0
  %vm1040 = vcmp.gt.f32.partialorder %v1008, 0.0
  %vm1041 = vcmp.gt.f32.partialorder %v1009, 0.0
  %vm1042 = vcmp.gt.f32.partialorder %v1010, 0.0
  %vm1043 = vcmp.gt.f32.partialorder %v1011, 0.0
  %vm1044 = vcmp.gt.f32.partialorder %v1012, 0.0
  %vm1045 = vcmp.gt.f32.partialorder %v1013, 0.0
  %vm1046 = vcmp.gt.f32.partialorder %v1014, 0.0
  %vm1047 = vcmp.gt.f32.partialorder %v1015, 0.0
  %vm1048 = vcmp.gt.f32.partialorder %v1016, 0.0
  %vm1049 = vcmp.gt.f32.partialorder %v1017, 0.0
  %vm1050 = vcmp.gt.f32.partialorder %v1018, 0.0
  %vm1051 = vcmp.gt.f32.partialorder %v1019, 0.0
  %vm1052 = vcmp.gt.f32.partialorder %v1020, 0.0
  %vm1053 = vcmp.gt.f32.partialorder %v1021, 0.0
  %vm1054 = vcmp.gt.f32.partialorder %v1022, 0.0
  %v1055 = vstv %s104
  %v1056 = vmul.f32 %v1055, %v991
  %v1057 = vmul.f32 %v1055, %v992
  %v1058 = vmul.f32 %v1055, %v993
  %v1059 = vmul.f32 %v1055, %v994
  %v1060 = vmul.f32 %v1055, %v995
  %v1061 = vmul.f32 %v1055, %v996
  %v1062 = vmul.f32 %v1055, %v997
  %v1063 = vmul.f32 %v1055, %v998
  %v1064 = vmul.f32 %v1055, %v999
  %v1065 = vmul.f32 %v1055, %v1000
  %v1066 = vmul.f32 %v1055, %v1001
  %v1067 = vmul.f32 %v1055, %v1002
  %v1068 = vmul.f32 %v1055, %v1003
  %v1069 = vmul.f32 %v1055, %v1004
  %v1070 = vmul.f32 %v1055, %v1005
  %v1071 = vmul.f32 %v1055, %v1006
  %v1072 = vmul.f32 %v1055, %v1007
  %v1073 = vmul.f32 %v1055, %v1008
  %v1074 = vmul.f32 %v1055, %v1009
  %v1075 = vmul.f32 %v1055, %v1010
  %v1076 = vmul.f32 %v1055, %v1011
  %v1077 = vmul.f32 %v1055, %v1012
  %v1078 = vmul.f32 %v1055, %v1013
  %v1079 = vmul.f32 %v1055, %v1014
  %v1080 = vmul.f32 %v1055, %v1015
  %v1081 = vmul.f32 %v1055, %v1016
  %v1082 = vmul.f32 %v1055, %v1017
  %v1083 = vmul.f32 %v1055, %v1018
  %v1084 = vmul.f32 %v1055, %v1019
  %v1085 = vmul.f32 %v1055, %v1020
  %v1086 = vmul.f32 %v1055, %v1021
  %v1087 = vmul.f32 %v1055, %v1022
  %v1088 = vsel %vm1023, %v991, %v1056
  %v1089 = vsel %vm1024, %v992, %v1057
  %v1090 = vsel %vm1025, %v993, %v1058
  %v1091 = vsel %vm1026, %v994, %v1059
  %v1092 = vsel %vm1027, %v995, %v1060
  %v1093 = vsel %vm1028, %v996, %v1061
  %v1094 = vsel %vm1029, %v997, %v1062
  %v1095 = vsel %vm1030, %v998, %v1063
  %v1096 = vsel %vm1031, %v999, %v1064
  %v1097 = vsel %vm1032, %v1000, %v1065
  %v1098 = vsel %vm1033, %v1001, %v1066
  %v1099 = vsel %vm1034, %v1002, %v1067
  %v1100 = vsel %vm1035, %v1003, %v1068
  %v1101 = vsel %vm1036, %v1004, %v1069
  %v1102 = vsel %vm1037, %v1005, %v1070
  %v1103 = vsel %vm1038, %v1006, %v1071
  %v1104 = vsel %vm1039, %v1007, %v1072
  %v1105 = vsel %vm1040, %v1008, %v1073
  %v1106 = vsel %vm1041, %v1009, %v1074
  %v1107 = vsel %vm1042, %v1010, %v1075
  %v1108 = vsel %vm1043, %v1011, %v1076
  %v1109 = vsel %vm1044, %v1012, %v1077
  %v1110 = vsel %vm1045, %v1013, %v1078
  %v1111 = vsel %vm1046, %v1014, %v1079
  %v1112 = vsel %vm1047, %v1015, %v1080
  %v1113 = vsel %vm1048, %v1016, %v1081
  %v1114 = vsel %vm1049, %v1017, %v1082
  %v1115 = vsel %vm1050, %v1018, %v1083
  %v1116 = vsel %vm1051, %v1019, %v1084
  %v1117 = vsel %vm1052, %v1020, %v1085
  %v1118 = vsel %vm1053, %v1021, %v1086
  %v1119 = vsel %vm1054, %v1022, %v1087
  %v1120 = vpack.c.bf16 %v1089, %v1088
  %v1121 = vpack.c.bf16 %v1091, %v1090
  %v1122 = vpack.c.bf16 %v1093, %v1092
  %v1123 = vpack.c.bf16 %v1095, %v1094
  %v1124 = vpack.c.bf16 %v1097, %v1096
  %v1125 = vpack.c.bf16 %v1099, %v1098
  %v1126 = vpack.c.bf16 %v1101, %v1100
  %v1127 = vpack.c.bf16 %v1103, %v1102
  %v1128 = vpack.c.bf16 %v1105, %v1104
  %v1129 = vpack.c.bf16 %v1107, %v1106
  %v1130 = vpack.c.bf16 %v1109, %v1108
  %v1131 = vpack.c.bf16 %v1111, %v1110
  %v1132 = vpack.c.bf16 %v1113, %v1112
  %v1133 = vpack.c.bf16 %v1115, %v1114
  %v1134 = vpack.c.bf16 %v1117, %v1116
  %v1135 = vpack.c.bf16 %v1119, %v1118
  %v1136 = vld [vmem:[%s5] sm:$0xf]
  %v1137 = vld [vmem:[%s5 + $0x4] sm:$0xf]
  %v1138 = vld [vmem:[%s5 + $0x8] sm:$0xf]
  %v1139 = vld [vmem:[%s5 + $0xc] sm:$0xf]
  %v1140 = vld [vmem:[%s5 + $0x10] sm:$0xf]
  %v1141 = vld [vmem:[%s5 + $0x14] sm:$0xf]
  %v1142 = vld [vmem:[%s5 + $0x18] sm:$0xf]
  %v1143 = vld [vmem:[%s5 + $0x1c] sm:$0xf]
  %v1144 = vld [vmem:[%s5 + $0x20] sm:$0xf]
  %v1145 = vld [vmem:[%s5 + $0x24] sm:$0xf]
  %v1146 = vld [vmem:[%s5 + $0x28] sm:$0xf]
  %v1147 = vld [vmem:[%s5 + $0x2c] sm:$0xf]
  %v1148 = vld [vmem:[%s5 + $0x30] sm:$0xf]
  %v1149 = vld [vmem:[%s5 + $0x34] sm:$0xf]
  %v1150 = vld [vmem:[%s5 + $0x38] sm:$0xf]
  %v1151 = vld [vmem:[%s5 + $0x3c] sm:$0xf]
  %v1152 = vld [vmem:[%s6] sm:$0x1]
  %v1154 = vlaneseq
  %v1155 = vshrl.u32 %v1154, 7
  %v1156 = vsub.s32 0, %v1155
  %v1157 = vrot.slane %v1152, %v1156
  %v1175 = vunpack.c.l.b16 %v1136
  %v1176 = vunpack.c.l.b16 %v1137
  %v1177 = vunpack.c.l.b16 %v1138
  %v1178 = vunpack.c.l.b16 %v1139
  %v1179 = vunpack.c.l.b16 %v1140
  %v1180 = vunpack.c.l.b16 %v1141
  %v1181 = vunpack.c.l.b16 %v1142
  %v1182 = vunpack.c.l.b16 %v1143
  %v1183 = vunpack.c.l.b16 %v1144
  %v1184 = vunpack.c.l.b16 %v1145
  %v1185 = vunpack.c.l.b16 %v1146
  %v1186 = vunpack.c.l.b16 %v1147
  %v1187 = vunpack.c.l.b16 %v1148
  %v1188 = vunpack.c.l.b16 %v1149
  %v1189 = vunpack.c.l.b16 %v1150
  %v1190 = vunpack.c.l.b16 %v1151
  %v1191 = vpack.c.b16 %v1176, %v1175
  %v1192 = vpack.c.b16 %v1178, %v1177
  %v1193 = vpack.c.b16 %v1180, %v1179
  %v1194 = vpack.c.b16 %v1182, %v1181
  %v1195 = vpack.c.b16 %v1184, %v1183
  %v1196 = vpack.c.b16 %v1186, %v1185
  %v1197 = vpack.c.b16 %v1188, %v1187
  %v1198 = vpack.c.b16 %v1190, %v1189
  %1207 = vmatprep.subr.bf16.mxu0 0
  %1208 = vmatpush1.bf16.msra.mxu0 %v1198
  %1209 = vmatprep.subr.bf16.mxu0 0
  %1210 = vmatpush1.bf16.msra.mxu0 %v1197
  %1211 = vmatprep.subr.bf16.mxu0 0
  %1212 = vmatpush1.bf16.msra.mxu0 %v1196
  %1213 = vmatprep.subr.bf16.mxu0 0
  %1214 = vmatpush1.bf16.msra.mxu0 %v1195
  %1215 = vmatprep.subr.bf16.mxu0 0
  %1216 = vmatpush1.bf16.msra.mxu0 %v1194
  %1217 = vmatprep.subr.bf16.mxu0 0
  %1218 = vmatpush1.bf16.msra.mxu0 %v1193
  %1219 = vmatprep.subr.bf16.mxu0 0
  %1220 = vmatpush1.bf16.msra.mxu0 %v1192
  %1221 = vmatprep.subr.bf16.mxu0 0
  %1222 = vmatpush1.bf16.msra.mxu0 %v1191
  %1223 = vmatprep.subr.bf16.mxu0 0
  %1224 = vmatpush2.bf16.msra.mxu0 0
  %1225 = vmatprep.subr.bf16.mxu0 0
  %1226 = vmatpush2.bf16.msra.mxu0 0
  %1227 = vmatprep.subr.bf16.mxu0 0
  %1228 = vmatpush2.bf16.msra.mxu0 0
  %1229 = vmatprep.subr.bf16.mxu0 0
  %1230 = vmatpush2.bf16.msra.mxu0 0
  %1231 = vmatprep.subr.bf16.mxu0 0
  %1232 = vmatpush2.bf16.msra.mxu0 0
  %1233 = vmatprep.subr.bf16.mxu0 0
  %1234 = vmatpush2.bf16.msra.mxu0 0
  %1235 = vmatprep.subr.bf16.mxu0 0
  %1236 = vmatpush2.bf16.msra.mxu0 0
  %1237 = vmatprep.subr.bf16.mxu0 0
  %1238 = vmatpush2.bf16.msra.mxu0 0
  %1239 = vmatprep.mubr.bf16.mxu0 0
  %1240 = vmatmul.mubr.bf16.gmra.mxu0 %v1120
  %v1241 = vpop.f32.mrf.mxu0
  %v1242 = vadd.f32 %v1157, %v1241
  %v1243 = vpop.f32.mrf.mxu0
  %v1244 = vpop.f32.mrf.mxu0
  %v1245 = vadd.f32 %v1157, %v1244
  %v1246 = vpop.f32.mrf.mxu0
  %1247 = vmatprep.mubr.bf16.mxu0 0
  %1248 = vmatmul.mubr.bf16.gmra.mxu0 %v1121
  %v1249 = vpop.f32.mrf.mxu0
  %v1250 = vadd.f32 %v1157, %v1249
  %v1251 = vpop.f32.mrf.mxu0
  %v1252 = vpop.f32.mrf.mxu0
  %v1253 = vadd.f32 %v1157, %v1252
  %v1254 = vpop.f32.mrf.mxu0
  %1255 = vmatprep.mubr.bf16.mxu0 0
  %1256 = vmatmul.mubr.bf16.gmra.mxu0 %v1122
  %v1257 = vpop.f32.mrf.mxu0
  %v1258 = vadd.f32 %v1157, %v1257
  %v1259 = vpop.f32.mrf.mxu0
  %v1260 = vpop.f32.mrf.mxu0
  %v1261 = vadd.f32 %v1157, %v1260
  %v1262 = vpop.f32.mrf.mxu0
  %1263 = vmatprep.mubr.bf16.mxu0 0
  %1264 = vmatmul.mubr.bf16.gmra.mxu0 %v1123
  %v1265 = vpop.f32.mrf.mxu0
  %v1266 = vadd.f32 %v1157, %v1265
  %v1267 = vpop.f32.mrf.mxu0
  %v1268 = vpop.f32.mrf.mxu0
  %v1269 = vadd.f32 %v1157, %v1268
  %v1270 = vpop.f32.mrf.mxu0
  %1271 = vmatprep.mubr.bf16.mxu0 0
  %1272 = vmatmul.mubr.bf16.gmra.mxu0 %v1124
  %v1273 = vpop.f32.mrf.mxu0
  %v1274 = vadd.f32 %v1157, %v1273
  %v1275 = vpop.f32.mrf.mxu0
  %v1276 = vpop.f32.mrf.mxu0
  %v1277 = vadd.f32 %v1157, %v1276
  %v1278 = vpop.f32.mrf.mxu0
  %1279 = vmatprep.mubr.bf16.mxu0 0
  %1280 = vmatmul.mubr.bf16.gmra.mxu0 %v1125
  %v1281 = vpop.f32.mrf.mxu0
  %v1282 = vadd.f32 %v1157, %v1281
  %v1283 = vpop.f32.mrf.mxu0
  %v1284 = vpop.f32.mrf.mxu0
  %v1285 = vadd.f32 %v1157, %v1284
  %v1286 = vpop.f32.mrf.mxu0
  %1287 = vmatprep.mubr.bf16.mxu0 0
  %1288 = vmatmul.mubr.bf16.gmra.mxu0 %v1126
  %v1289 = vpop.f32.mrf.mxu0
  %v1290 = vadd.f32 %v1157, %v1289
  %v1291 = vpop.f32.mrf.mxu0
  %v1292 = vpop.f32.mrf.mxu0
  %v1293 = vadd.f32 %v1157, %v1292
  %v1294 = vpop.f32.mrf.mxu0
  %1295 = vmatprep.mubr.bf16.mxu0 0
  %1296 = vmatmul.mubr.bf16.gmra.mxu0 %v1127
  %v1297 = vpop.f32.mrf.mxu0
  %v1298 = vadd.f32 %v1157, %v1297
  %v1299 = vpop.f32.mrf.mxu0
  %v1300 = vpop.f32.mrf.mxu0
  %v1301 = vadd.f32 %v1157, %v1300
  %v1302 = vpop.f32.mrf.mxu0
  %1303 = vmatprep.mubr.bf16.mxu0 0
  %1304 = vmatmul.mubr.bf16.gmra.mxu0 %v1128
  %v1305 = vpop.f32.mrf.mxu0
  %v1306 = vadd.f32 %v1157, %v1305
  %v1307 = vpop.f32.mrf.mxu0
  %v1308 = vpop.f32.mrf.mxu0
  %v1309 = vadd.f32 %v1157, %v1308
  %v1310 = vpop.f32.mrf.mxu0
  %1311 = vmatprep.mubr.bf16.mxu0 0
  %1312 = vmatmul.mubr.bf16.gmra.mxu0 %v1129
  %v1313 = vpop.f32.mrf.mxu0
  %v1314 = vadd.f32 %v1157, %v1313
  %v1315 = vpop.f32.mrf.mxu0
  %v1316 = vpop.f32.mrf.mxu0
  %v1317 = vadd.f32 %v1157, %v1316
  %v1318 = vpop.f32.mrf.mxu0
  %1319 = vmatprep.mubr.bf16.mxu0 0
  %1320 = vmatmul.mubr.bf16.gmra.mxu0 %v1130
  %v1321 = vpop.f32.mrf.mxu0
  %v1322 = vadd.f32 %v1157, %v1321
  %v1323 = vpop.f32.mrf.mxu0
  %v1324 = vpop.f32.mrf.mxu0
  %v1325 = vadd.f32 %v1157, %v1324
  %v1326 = vpop.f32.mrf.mxu0
  %1327 = vmatprep.mubr.bf16.mxu0 0
  %1328 = vmatmul.mubr.bf16.gmra.mxu0 %v1131
  %v1329 = vpop.f32.mrf.mxu0
  %v1330 = vadd.f32 %v1157, %v1329
  %v1331 = vpop.f32.mrf.mxu0
  %v1332 = vpop.f32.mrf.mxu0
  %v1333 = vadd.f32 %v1157, %v1332
  %v1334 = vpop.f32.mrf.mxu0
  %1335 = vmatprep.mubr.bf16.mxu0 0
  %1336 = vmatmul.mubr.bf16.gmra.mxu0 %v1132
  %v1337 = vpop.f32.mrf.mxu0
  %v1338 = vadd.f32 %v1157, %v1337
  %v1339 = vpop.f32.mrf.mxu0
  %v1340 = vpop.f32.mrf.mxu0
  %v1341 = vadd.f32 %v1157, %v1340
  %v1342 = vpop.f32.mrf.mxu0
  %1343 = vmatprep.mubr.bf16.mxu0 0
  %1344 = vmatmul.mubr.bf16.gmra.mxu0 %v1133
  %v1345 = vpop.f32.mrf.mxu0
  %v1346 = vadd.f32 %v1157, %v1345
  %v1347 = vpop.f32.mrf.mxu0
  %v1348 = vpop.f32.mrf.mxu0
  %v1349 = vadd.f32 %v1157, %v1348
  %v1350 = vpop.f32.mrf.mxu0
  %1351 = vmatprep.mubr.bf16.mxu0 0
  %1352 = vmatmul.mubr.bf16.gmra.mxu0 %v1134
  %v1353 = vpop.f32.mrf.mxu0
  %v1354 = vadd.f32 %v1157, %v1353
  %v1355 = vpop.f32.mrf.mxu0
  %v1356 = vpop.f32.mrf.mxu0
  %v1357 = vadd.f32 %v1157, %v1356
  %v1358 = vpop.f32.mrf.mxu0
  %1359 = vmatprep.mubr.bf16.mxu0 0
  %1360 = vmatmul.mubr.bf16.gmra.mxu0 %v1135
  %v1361 = vpop.f32.mrf.mxu0
  %v1362 = vadd.f32 %v1157, %v1361
  %v1363 = vpop.f32.mrf.mxu0
  %v1364 = vpop.f32.mrf.mxu0
  %v1365 = vadd.f32 %v1157, %v1364
  %v1366 = vpop.f32.mrf.mxu0
  %1367 = vdwg.mxu0
  %vm1368 = vcmp.gt.f32.partialorder %v1242, 0.0
  %vm1369 = vcmp.gt.f32.partialorder %v1245, 0.0
  %vm1370 = vcmp.gt.f32.partialorder %v1250, 0.0
  %vm1371 = vcmp.gt.f32.partialorder %v1253, 0.0
  %vm1372 = vcmp.gt.f32.partialorder %v1258, 0.0
  %vm1373 = vcmp.gt.f32.partialorder %v1261, 0.0
  %vm1374 = vcmp.gt.f32.partialorder %v1266, 0.0
  %vm1375 = vcmp.gt.f32.partialorder %v1269, 0.0
  %vm1376 = vcmp.gt.f32.partialorder %v1274, 0.0
  %vm1377 = vcmp.gt.f32.partialorder %v1277, 0.0
  %vm1378 = vcmp.gt.f32.partialorder %v1282, 0.0
  %vm1379 = vcmp.gt.f32.partialorder %v1285, 0.0
  %vm1380 = vcmp.gt.f32.partialorder %v1290, 0.0
  %vm1381 = vcmp.gt.f32.partialorder %v1293, 0.0
  %vm1382 = vcmp.gt.f32.partialorder %v1298, 0.0
  %vm1383 = vcmp.gt.f32.partialorder %v1301, 0.0
  %vm1384 = vcmp.gt.f32.partialorder %v1306, 0.0
  %vm1385 = vcmp.gt.f32.partialorder %v1309, 0.0
  %vm1386 = vcmp.gt.f32.partialorder %v1314, 0.0
  %vm1387 = vcmp.gt.f32.partialorder %v1317, 0.0
  %vm1388 = vcmp.gt.f32.partialorder %v1322, 0.0
  %vm1389 = vcmp.gt.f32.partialorder %v1325, 0.0
  %vm1390 = vcmp.gt.f32.partialorder %v1330, 0.0
  %vm1391 = vcmp.gt.f32.partialorder %v1333, 0.0
  %vm1392 = vcmp.gt.f32.partialorder %v1338, 0.0
  %vm1393 = vcmp.gt.f32.partialorder %v1341, 0.0
  %vm1394 = vcmp.gt.f32.partialorder %v1346, 0.0
  %vm1395 = vcmp.gt.f32.partialorder %v1349, 0.0
  %vm1396 = vcmp.gt.f32.partialorder %v1354, 0.0
  %vm1397 = vcmp.gt.f32.partialorder %v1357, 0.0
  %vm1398 = vcmp.gt.f32.partialorder %v1362, 0.0
  %vm1399 = vcmp.gt.f32.partialorder %v1365, 0.0
  %v1400 = vmul.f32 %v1055, %v1242
  %v1401 = vmul.f32 %v1055, %v1245
  %v1402 = vmul.f32 %v1055, %v1250
  %v1403 = vmul.f32 %v1055, %v1253
  %v1404 = vmul.f32 %v1055, %v1258
  %v1405 = vmul.f32 %v1055, %v1261
  %v1406 = vmul.f32 %v1055, %v1266
  %v1407 = vmul.f32 %v1055, %v1269
  %v1408 = vmul.f32 %v1055, %v1274
  %v1409 = vmul.f32 %v1055, %v1277
  %v1410 = vmul.f32 %v1055, %v1282
  %v1411 = vmul.f32 %v1055, %v1285
  %v1412 = vmul.f32 %v1055, %v1290
  %v1413 = vmul.f32 %v1055, %v1293
  %v1414 = vmul.f32 %v1055, %v1298
  %v1415 = vmul.f32 %v1055, %v1301
  %v1416 = vmul.f32 %v1055, %v1306
  %v1417 = vmul.f32 %v1055, %v1309
  %v1418 = vmul.f32 %v1055, %v1314
  %v1419 = vmul.f32 %v1055, %v1317
  %v1420 = vmul.f32 %v1055, %v1322
  %v1421 = vmul.f32 %v1055, %v1325
  %v1422 = vmul.f32 %v1055, %v1330
  %v1423 = vmul.f32 %v1055, %v1333
  %v1424 = vmul.f32 %v1055, %v1338
  %v1425 = vmul.f32 %v1055, %v1341
  %v1426 = vmul.f32 %v1055, %v1346
  %v1427 = vmul.f32 %v1055, %v1349
  %v1428 = vmul.f32 %v1055, %v1354
  %v1429 = vmul.f32 %v1055, %v1357
  %v1430 = vmul.f32 %v1055, %v1362
  %v1431 = vmul.f32 %v1055, %v1365
  %v1432 = vsel %vm1368, %v1242, %v1400
  %v1433 = vsel %vm1369, %v1245, %v1401
  %v1434 = vsel %vm1370, %v1250, %v1402
  %v1435 = vsel %vm1371, %v1253, %v1403
  %v1436 = vsel %vm1372, %v1258, %v1404
  %v1437 = vsel %vm1373, %v1261, %v1405
  %v1438 = vsel %vm1374, %v1266, %v1406
  %v1439 = vsel %vm1375, %v1269, %v1407
  %v1440 = vsel %vm1376, %v1274, %v1408
  %v1441 = vsel %vm1377, %v1277, %v1409
  %v1442 = vsel %vm1378, %v1282, %v1410
  %v1443 = vsel %vm1379, %v1285, %v1411
  %v1444 = vsel %vm1380, %v1290, %v1412
  %v1445 = vsel %vm1381, %v1293, %v1413
  %v1446 = vsel %vm1382, %v1298, %v1414
  %v1447 = vsel %vm1383, %v1301, %v1415
  %v1448 = vsel %vm1384, %v1306, %v1416
  %v1449 = vsel %vm1385, %v1309, %v1417
  %v1450 = vsel %vm1386, %v1314, %v1418
  %v1451 = vsel %vm1387, %v1317, %v1419
  %v1452 = vsel %vm1388, %v1322, %v1420
  %v1453 = vsel %vm1389, %v1325, %v1421
  %v1454 = vsel %vm1390, %v1330, %v1422
  %v1455 = vsel %vm1391, %v1333, %v1423
  %v1456 = vsel %vm1392, %v1338, %v1424
  %v1457 = vsel %vm1393, %v1341, %v1425
  %v1458 = vsel %vm1394, %v1346, %v1426
  %v1459 = vsel %vm1395, %v1349, %v1427
  %v1460 = vsel %vm1396, %v1354, %v1428
  %v1461 = vsel %vm1397, %v1357, %v1429
  %v1462 = vsel %vm1398, %v1362, %v1430
  %v1463 = vsel %vm1399, %v1365, %v1431
  %v1464 = vpack.c.bf16 %v1433, %v1432
  %v1465 = vpack.c.bf16 %v1435, %v1434
  %v1466 = vpack.c.bf16 %v1437, %v1436
  %v1467 = vpack.c.bf16 %v1439, %v1438
  %v1468 = vpack.c.bf16 %v1441, %v1440
  %v1469 = vpack.c.bf16 %v1443, %v1442
  %v1470 = vpack.c.bf16 %v1445, %v1444
  %v1471 = vpack.c.bf16 %v1447, %v1446
  %v1472 = vpack.c.bf16 %v1449, %v1448
  %v1473 = vpack.c.bf16 %v1451, %v1450
  %v1474 = vpack.c.bf16 %v1453, %v1452
  %v1475 = vpack.c.bf16 %v1455, %v1454
  %v1476 = vpack.c.bf16 %v1457, %v1456
  %v1477 = vpack.c.bf16 %v1459, %v1458
  %v1478 = vpack.c.bf16 %v1461, %v1460
  %v1479 = vpack.c.bf16 %v1463, %v1462
  %v1480 = vld [vmem:[%s7] sm:$0xf]
  %v1481 = vld [vmem:[%s7 + $0x4] sm:$0xf]
  %v1482 = vld [vmem:[%s7 + $0x8] sm:$0xf]
  %v1483 = vld [vmem:[%s7 + $0xc] sm:$0xf]
  %v1484 = vld [vmem:[%s7 + $0x10] sm:$0xf]
  %v1485 = vld [vmem:[%s7 + $0x14] sm:$0xf]
  %v1486 = vld [vmem:[%s7 + $0x18] sm:$0xf]
  %v1487 = vld [vmem:[%s7 + $0x1c] sm:$0xf]
  %v1488 = vld [vmem:[%s7 + $0x20] sm:$0xf]
  %v1489 = vld [vmem:[%s7 + $0x24] sm:$0xf]
  %v1490 = vld [vmem:[%s7 + $0x28] sm:$0xf]
  %v1491 = vld [vmem:[%s7 + $0x2c] sm:$0xf]
  %v1492 = vld [vmem:[%s7 + $0x30] sm:$0xf]
  %v1493 = vld [vmem:[%s7 + $0x34] sm:$0xf]
  %v1494 = vld [vmem:[%s7 + $0x38] sm:$0xf]
  %v1495 = vld [vmem:[%s7 + $0x3c] sm:$0xf]
  %v1496 = vld [vmem:[%s8] sm:$0x1]
  %v1498 = vlaneseq
  %v1499 = vshrl.u32 %v1498, 7
  %v1500 = vsub.s32 0, %v1499
  %v1501 = vrot.slane %v1496, %v1500
  %v1519 = vunpack.c.l.b16 %v1480
  %v1520 = vunpack.c.l.b16 %v1481
  %v1521 = vunpack.c.l.b16 %v1482
  %v1522 = vunpack.c.l.b16 %v1483
  %v1523 = vunpack.c.l.b16 %v1484
  %v1524 = vunpack.c.l.b16 %v1485
  %v1525 = vunpack.c.l.b16 %v1486
  %v1526 = vunpack.c.l.b16 %v1487
  %v1527 = vunpack.c.l.b16 %v1488
  %v1528 = vunpack.c.l.b16 %v1489
  %v1529 = vunpack.c.l.b16 %v1490
  %v1530 = vunpack.c.l.b16 %v1491
  %v1531 = vunpack.c.l.b16 %v1492
  %v1532 = vunpack.c.l.b16 %v1493
  %v1533 = vunpack.c.l.b16 %v1494
  %v1534 = vunpack.c.l.b16 %v1495
  %v1535 = vpack.c.b16 %v1520, %v1519
  %v1536 = vpack.c.b16 %v1522, %v1521
  %v1537 = vpack.c.b16 %v1524, %v1523
  %v1538 = vpack.c.b16 %v1526, %v1525
  %v1539 = vpack.c.b16 %v1528, %v1527
  %v1540 = vpack.c.b16 %v1530, %v1529
  %v1541 = vpack.c.b16 %v1532, %v1531
  %v1542 = vpack.c.b16 %v1534, %v1533
  %1551 = vmatprep.subr.bf16.mxu0 0
  %1552 = vmatpush1.bf16.msra.mxu0 %v1542
  %1553 = vmatprep.subr.bf16.mxu0 0
  %1554 = vmatpush1.bf16.msra.mxu0 %v1541
  %1555 = vmatprep.subr.bf16.mxu0 0
  %1556 = vmatpush1.bf16.msra.mxu0 %v1540
  %1557 = vmatprep.subr.bf16.mxu0 0
  %1558 = vmatpush1.bf16.msra.mxu0 %v1539
  %1559 = vmatprep.subr.bf16.mxu0 0
  %1560 = vmatpush1.bf16.msra.mxu0 %v1538
  %1561 = vmatprep.subr.bf16.mxu0 0
  %1562 = vmatpush1.bf16.msra.mxu0 %v1537
  %1563 = vmatprep.subr.bf16.mxu0 0
  %1564 = vmatpush1.bf16.msra.mxu0 %v1536
  %1565 = vmatprep.subr.bf16.mxu0 0
  %1566 = vmatpush1.bf16.msra.mxu0 %v1535
  %1567 = vmatprep.subr.bf16.mxu0 0
  %1568 = vmatpush2.bf16.msra.mxu0 0
  %1569 = vmatprep.subr.bf16.mxu0 0
  %1570 = vmatpush2.bf16.msra.mxu0 0
  %1571 = vmatprep.subr.bf16.mxu0 0
  %1572 = vmatpush2.bf16.msra.mxu0 0
  %1573 = vmatprep.subr.bf16.mxu0 0
  %1574 = vmatpush2.bf16.msra.mxu0 0
  %1575 = vmatprep.subr.bf16.mxu0 0
  %1576 = vmatpush2.bf16.msra.mxu0 0
  %1577 = vmatprep.subr.bf16.mxu0 0
  %1578 = vmatpush2.bf16.msra.mxu0 0
  %1579 = vmatprep.subr.bf16.mxu0 0
  %1580 = vmatpush2.bf16.msra.mxu0 0
  %1581 = vmatprep.subr.bf16.mxu0 0
  %1582 = vmatpush2.bf16.msra.mxu0 0
  %1583 = vmatprep.mubr.bf16.mxu0 0
  %1584 = vmatmul.mubr.bf16.gmra.mxu0 %v1464
  %v1585 = vpop.f32.mrf.mxu0
  %v1586 = vadd.f32 %v1501, %v1585
  %v1587 = vpop.f32.mrf.mxu0
  %v1588 = vpop.f32.mrf.mxu0
  %v1589 = vadd.f32 %v1501, %v1588
  %v1590 = vpop.f32.mrf.mxu0
  %1591 = vmatprep.mubr.bf16.mxu0 0
  %1592 = vmatmul.mubr.bf16.gmra.mxu0 %v1465
  %v1593 = vpop.f32.mrf.mxu0
  %v1594 = vadd.f32 %v1501, %v1593
  %v1595 = vpop.f32.mrf.mxu0
  %v1596 = vpop.f32.mrf.mxu0
  %v1597 = vadd.f32 %v1501, %v1596
  %v1598 = vpop.f32.mrf.mxu0
  %1599 = vmatprep.mubr.bf16.mxu0 0
  %1600 = vmatmul.mubr.bf16.gmra.mxu0 %v1466
  %v1601 = vpop.f32.mrf.mxu0
  %v1602 = vadd.f32 %v1501, %v1601
  %v1603 = vpop.f32.mrf.mxu0
  %v1604 = vpop.f32.mrf.mxu0
  %v1605 = vadd.f32 %v1501, %v1604
  %v1606 = vpop.f32.mrf.mxu0
  %1607 = vmatprep.mubr.bf16.mxu0 0
  %1608 = vmatmul.mubr.bf16.gmra.mxu0 %v1467
  %v1609 = vpop.f32.mrf.mxu0
  %v1610 = vadd.f32 %v1501, %v1609
  %v1611 = vpop.f32.mrf.mxu0
  %v1612 = vpop.f32.mrf.mxu0
  %v1613 = vadd.f32 %v1501, %v1612
  %v1614 = vpop.f32.mrf.mxu0
  %1615 = vmatprep.mubr.bf16.mxu0 0
  %1616 = vmatmul.mubr.bf16.gmra.mxu0 %v1468
  %v1617 = vpop.f32.mrf.mxu0
  %v1618 = vadd.f32 %v1501, %v1617
  %v1619 = vpop.f32.mrf.mxu0
  %v1620 = vpop.f32.mrf.mxu0
  %v1621 = vadd.f32 %v1501, %v1620
  %v1622 = vpop.f32.mrf.mxu0
  %1623 = vmatprep.mubr.bf16.mxu0 0
  %1624 = vmatmul.mubr.bf16.gmra.mxu0 %v1469
  %v1625 = vpop.f32.mrf.mxu0
  %v1626 = vadd.f32 %v1501, %v1625
  %v1627 = vpop.f32.mrf.mxu0
  %v1628 = vpop.f32.mrf.mxu0
  %v1629 = vadd.f32 %v1501, %v1628
  %v1630 = vpop.f32.mrf.mxu0
  %1631 = vmatprep.mubr.bf16.mxu0 0
  %1632 = vmatmul.mubr.bf16.gmra.mxu0 %v1470
  %v1633 = vpop.f32.mrf.mxu0
  %v1634 = vadd.f32 %v1501, %v1633
  %v1635 = vpop.f32.mrf.mxu0
  %v1636 = vpop.f32.mrf.mxu0
  %v1637 = vadd.f32 %v1501, %v1636
  %v1638 = vpop.f32.mrf.mxu0
  %1639 = vmatprep.mubr.bf16.mxu0 0
  %1640 = vmatmul.mubr.bf16.gmra.mxu0 %v1471
  %v1641 = vpop.f32.mrf.mxu0
  %v1642 = vadd.f32 %v1501, %v1641
  %v1643 = vpop.f32.mrf.mxu0
  %v1644 = vpop.f32.mrf.mxu0
  %v1645 = vadd.f32 %v1501, %v1644
  %v1646 = vpop.f32.mrf.mxu0
  %1647 = vmatprep.mubr.bf16.mxu0 0
  %1648 = vmatmul.mubr.bf16.gmra.mxu0 %v1472
  %v1649 = vpop.f32.mrf.mxu0
  %v1650 = vadd.f32 %v1501, %v1649
  %v1651 = vpop.f32.mrf.mxu0
  %v1652 = vpop.f32.mrf.mxu0
  %v1653 = vadd.f32 %v1501, %v1652
  %v1654 = vpop.f32.mrf.mxu0
  %1655 = vmatprep.mubr.bf16.mxu0 0
  %1656 = vmatmul.mubr.bf16.gmra.mxu0 %v1473
  %v1657 = vpop.f32.mrf.mxu0
  %v1658 = vadd.f32 %v1501, %v1657
  %v1659 = vpop.f32.mrf.mxu0
  %v1660 = vpop.f32.mrf.mxu0
  %v1661 = vadd.f32 %v1501, %v1660
  %v1662 = vpop.f32.mrf.mxu0
  %1663 = vmatprep.mubr.bf16.mxu0 0
  %1664 = vmatmul.mubr.bf16.gmra.mxu0 %v1474
  %v1665 = vpop.f32.mrf.mxu0
  %v1666 = vadd.f32 %v1501, %v1665
  %v1667 = vpop.f32.mrf.mxu0
  %v1668 = vpop.f32.mrf.mxu0
  %v1669 = vadd.f32 %v1501, %v1668
  %v1670 = vpop.f32.mrf.mxu0
  %1671 = vmatprep.mubr.bf16.mxu0 0
  %1672 = vmatmul.mubr.bf16.gmra.mxu0 %v1475
  %v1673 = vpop.f32.mrf.mxu0
  %v1674 = vadd.f32 %v1501, %v1673
  %v1675 = vpop.f32.mrf.mxu0
  %v1676 = vpop.f32.mrf.mxu0
  %v1677 = vadd.f32 %v1501, %v1676
  %v1678 = vpop.f32.mrf.mxu0
  %1679 = vmatprep.mubr.bf16.mxu0 0
  %1680 = vmatmul.mubr.bf16.gmra.mxu0 %v1476
  %v1681 = vpop.f32.mrf.mxu0
  %v1682 = vadd.f32 %v1501, %v1681
  %v1683 = vpop.f32.mrf.mxu0
  %v1684 = vpop.f32.mrf.mxu0
  %v1685 = vadd.f32 %v1501, %v1684
  %v1686 = vpop.f32.mrf.mxu0
  %1687 = vmatprep.mubr.bf16.mxu0 0
  %1688 = vmatmul.mubr.bf16.gmra.mxu0 %v1477
  %v1689 = vpop.f32.mrf.mxu0
  %v1690 = vadd.f32 %v1501, %v1689
  %v1691 = vpop.f32.mrf.mxu0
  %v1692 = vpop.f32.mrf.mxu0
  %v1693 = vadd.f32 %v1501, %v1692
  %v1694 = vpop.f32.mrf.mxu0
  %1695 = vmatprep.mubr.bf16.mxu0 0
  %1696 = vmatmul.mubr.bf16.gmra.mxu0 %v1478
  %v1697 = vpop.f32.mrf.mxu0
  %v1698 = vadd.f32 %v1501, %v1697
  %v1699 = vpop.f32.mrf.mxu0
  %v1700 = vpop.f32.mrf.mxu0
  %v1701 = vadd.f32 %v1501, %v1700
  %v1702 = vpop.f32.mrf.mxu0
  %1703 = vmatprep.mubr.bf16.mxu0 0
  %1704 = vmatmul.mubr.bf16.gmra.mxu0 %v1479
  %v1705 = vpop.f32.mrf.mxu0
  %v1706 = vadd.f32 %v1501, %v1705
  %v1707 = vpop.f32.mrf.mxu0
  %v1708 = vpop.f32.mrf.mxu0
  %v1709 = vadd.f32 %v1501, %v1708
  %v1710 = vpop.f32.mrf.mxu0
  %1711 = vdwg.mxu0
  %vm1712 = vcmp.gt.f32.partialorder %v1586, 0.0
  %vm1713 = vcmp.gt.f32.partialorder %v1589, 0.0
  %vm1714 = vcmp.gt.f32.partialorder %v1594, 0.0
  %vm1715 = vcmp.gt.f32.partialorder %v1597, 0.0
  %vm1716 = vcmp.gt.f32.partialorder %v1602, 0.0
  %vm1717 = vcmp.gt.f32.partialorder %v1605, 0.0
  %vm1718 = vcmp.gt.f32.partialorder %v1610, 0.0
  %vm1719 = vcmp.gt.f32.partialorder %v1613, 0.0
  %vm1720 = vcmp.gt.f32.partialorder %v1618, 0.0
  %vm1721 = vcmp.gt.f32.partialorder %v1621, 0.0
  %vm1722 = vcmp.gt.f32.partialorder %v1626, 0.0
  %vm1723 = vcmp.gt.f32.partialorder %v1629, 0.0
  %vm1724 = vcmp.gt.f32.partialorder %v1634, 0.0
  %vm1725 = vcmp.gt.f32.partialorder %v1637, 0.0
  %vm1726 = vcmp.gt.f32.partialorder %v1642, 0.0
  %vm1727 = vcmp.gt.f32.partialorder %v1645, 0.0
  %vm1728 = vcmp.gt.f32.partialorder %v1650, 0.0
  %vm1729 = vcmp.gt.f32.partialorder %v1653, 0.0
  %vm1730 = vcmp.gt.f32.partialorder %v1658, 0.0
  %vm1731 = vcmp.gt.f32.partialorder %v1661, 0.0
  %vm1732 = vcmp.gt.f32.partialorder %v1666, 0.0
  %vm1733 = vcmp.gt.f32.partialorder %v1669, 0.0
  %vm1734 = vcmp.gt.f32.partialorder %v1674, 0.0
  %vm1735 = vcmp.gt.f32.partialorder %v1677, 0.0
  %vm1736 = vcmp.gt.f32.partialorder %v1682, 0.0
  %vm1737 = vcmp.gt.f32.partialorder %v1685, 0.0
  %vm1738 = vcmp.gt.f32.partialorder %v1690, 0.0
  %vm1739 = vcmp.gt.f32.partialorder %v1693, 0.0
  %vm1740 = vcmp.gt.f32.partialorder %v1698, 0.0
  %vm1741 = vcmp.gt.f32.partialorder %v1701, 0.0
  %vm1742 = vcmp.gt.f32.partialorder %v1706, 0.0
  %vm1743 = vcmp.gt.f32.partialorder %v1709, 0.0
  %v1744 = vmul.f32 %v1055, %v1586
  %v1745 = vmul.f32 %v1055, %v1589
  %v1746 = vmul.f32 %v1055, %v1594
  %v1747 = vmul.f32 %v1055, %v1597
  %v1748 = vmul.f32 %v1055, %v1602
  %v1749 = vmul.f32 %v1055, %v1605
  %v1750 = vmul.f32 %v1055, %v1610
  %v1751 = vmul.f32 %v1055, %v1613
  %v1752 = vmul.f32 %v1055, %v1618
  %v1753 = vmul.f32 %v1055, %v1621
  %v1754 = vmul.f32 %v1055, %v1626
  %v1755 = vmul.f32 %v1055, %v1629
  %v1756 = vmul.f32 %v1055, %v1634
  %v1757 = vmul.f32 %v1055, %v1637
  %v1758 = vmul.f32 %v1055, %v1642
  %v1759 = vmul.f32 %v1055, %v1645
  %v1760 = vmul.f32 %v1055, %v1650
  %v1761 = vmul.f32 %v1055, %v1653
  %v1762 = vmul.f32 %v1055, %v1658
  %v1763 = vmul.f32 %v1055, %v1661
  %v1764 = vmul.f32 %v1055, %v1666
  %v1765 = vmul.f32 %v1055, %v1669
  %v1766 = vmul.f32 %v1055, %v1674
  %v1767 = vmul.f32 %v1055, %v1677
  %v1768 = vmul.f32 %v1055, %v1682
  %v1769 = vmul.f32 %v1055, %v1685
  %v1770 = vmul.f32 %v1055, %v1690
  %v1771 = vmul.f32 %v1055, %v1693
  %v1772 = vmul.f32 %v1055, %v1698
  %v1773 = vmul.f32 %v1055, %v1701
  %v1774 = vmul.f32 %v1055, %v1706
  %v1775 = vmul.f32 %v1055, %v1709
  %v1776 = vsel %vm1712, %v1586, %v1744
  %v1777 = vsel %vm1713, %v1589, %v1745
  %v1778 = vsel %vm1714, %v1594, %v1746
  %v1779 = vsel %vm1715, %v1597, %v1747
  %v1780 = vsel %vm1716, %v1602, %v1748
  %v1781 = vsel %vm1717, %v1605, %v1749
  %v1782 = vsel %vm1718, %v1610, %v1750
  %v1783 = vsel %vm1719, %v1613, %v1751
  %v1784 = vsel %vm1720, %v1618, %v1752
  %v1785 = vsel %vm1721, %v1621, %v1753
  %v1786 = vsel %vm1722, %v1626, %v1754
  %v1787 = vsel %vm1723, %v1629, %v1755
  %v1788 = vsel %vm1724, %v1634, %v1756
  %v1789 = vsel %vm1725, %v1637, %v1757
  %v1790 = vsel %vm1726, %v1642, %v1758
  %v1791 = vsel %vm1727, %v1645, %v1759
  %v1792 = vsel %vm1728, %v1650, %v1760
  %v1793 = vsel %vm1729, %v1653, %v1761
  %v1794 = vsel %vm1730, %v1658, %v1762
  %v1795 = vsel %vm1731, %v1661, %v1763
  %v1796 = vsel %vm1732, %v1666, %v1764
  %v1797 = vsel %vm1733, %v1669, %v1765
  %v1798 = vsel %vm1734, %v1674, %v1766
  %v1799 = vsel %vm1735, %v1677, %v1767
  %v1800 = vsel %vm1736, %v1682, %v1768
  %v1801 = vsel %vm1737, %v1685, %v1769
  %v1802 = vsel %vm1738, %v1690, %v1770
  %v1803 = vsel %vm1739, %v1693, %v1771
  %v1804 = vsel %vm1740, %v1698, %v1772
  %v1805 = vsel %vm1741, %v1701, %v1773
  %v1806 = vsel %vm1742, %v1706, %v1774
  %v1807 = vsel %vm1743, %v1709, %v1775
  %v1808 = vpack.c.bf16 %v1777, %v1776
  %v1809 = vpack.c.bf16 %v1779, %v1778
  %v1810 = vpack.c.bf16 %v1781, %v1780
  %v1811 = vpack.c.bf16 %v1783, %v1782
  %v1812 = vpack.c.bf16 %v1785, %v1784
  %v1813 = vpack.c.bf16 %v1787, %v1786
  %v1814 = vpack.c.bf16 %v1789, %v1788
  %v1815 = vpack.c.bf16 %v1791, %v1790
  %v1816 = vpack.c.bf16 %v1793, %v1792
  %v1817 = vpack.c.bf16 %v1795, %v1794
  %v1818 = vpack.c.bf16 %v1797, %v1796
  %v1819 = vpack.c.bf16 %v1799, %v1798
  %v1820 = vpack.c.bf16 %v1801, %v1800
  %v1821 = vpack.c.bf16 %v1803, %v1802
  %v1822 = vpack.c.bf16 %v1805, %v1804
  %v1823 = vpack.c.bf16 %v1807, %v1806
  %v1824 = vld [vmem:[%s9] sm:$0xf]
  %v1825 = vld [vmem:[%s9 + $0x4] sm:$0xf]
  %v1826 = vld [vmem:[%s9 + $0x8] sm:$0xf]
  %v1827 = vld [vmem:[%s9 + $0xc] sm:$0xf]
  %v1828 = vld [vmem:[%s9 + $0x10] sm:$0xf]
  %v1829 = vld [vmem:[%s9 + $0x14] sm:$0xf]
  %v1830 = vld [vmem:[%s9 + $0x18] sm:$0xf]
  %v1831 = vld [vmem:[%s9 + $0x1c] sm:$0xf]
  %v1832 = vld [vmem:[%s9 + $0x20] sm:$0xf]
  %v1833 = vld [vmem:[%s9 + $0x24] sm:$0xf]
  %v1834 = vld [vmem:[%s9 + $0x28] sm:$0xf]
  %v1835 = vld [vmem:[%s9 + $0x2c] sm:$0xf]
  %v1836 = vld [vmem:[%s9 + $0x30] sm:$0xf]
  %v1837 = vld [vmem:[%s9 + $0x34] sm:$0xf]
  %v1838 = vld [vmem:[%s9 + $0x38] sm:$0xf]
  %v1839 = vld [vmem:[%s9 + $0x3c] sm:$0xf]
  %v1840 = vld [vmem:[%s10] sm:$0x1]
  %v1842 = vlaneseq
  %v1843 = vshrl.u32 %v1842, 7
  %v1844 = vsub.s32 0, %v1843
  %v1845 = vrot.slane %v1840, %v1844
  %v1863 = vunpack.c.l.b16 %v1824
  %v1864 = vunpack.c.l.b16 %v1825
  %v1865 = vunpack.c.l.b16 %v1826
  %v1866 = vunpack.c.l.b16 %v1827
  %v1867 = vunpack.c.l.b16 %v1828
  %v1868 = vunpack.c.l.b16 %v1829
  %v1869 = vunpack.c.l.b16 %v1830
  %v1870 = vunpack.c.l.b16 %v1831
  %v1871 = vunpack.c.l.b16 %v1832
  %v1872 = vunpack.c.l.b16 %v1833
  %v1873 = vunpack.c.l.b16 %v1834
  %v1874 = vunpack.c.l.b16 %v1835
  %v1875 = vunpack.c.l.b16 %v1836
  %v1876 = vunpack.c.l.b16 %v1837
  %v1877 = vunpack.c.l.b16 %v1838
  %v1878 = vunpack.c.l.b16 %v1839
  %v1879 = vpack.c.b16 %v1864, %v1863
  %v1880 = vpack.c.b16 %v1866, %v1865
  %v1881 = vpack.c.b16 %v1868, %v1867
  %v1882 = vpack.c.b16 %v1870, %v1869
  %v1883 = vpack.c.b16 %v1872, %v1871
  %v1884 = vpack.c.b16 %v1874, %v1873
  %v1885 = vpack.c.b16 %v1876, %v1875
  %v1886 = vpack.c.b16 %v1878, %v1877
  %1895 = vmatprep.subr.bf16.mxu0 0
  %1896 = vmatpush1.bf16.msra.mxu0 %v1886
  %1897 = vmatprep.subr.bf16.mxu0 0
  %1898 = vmatpush1.bf16.msra.mxu0 %v1885
  %1899 = vmatprep.subr.bf16.mxu0 0
  %1900 = vmatpush1.bf16.msra.mxu0 %v1884
  %1901 = vmatprep.subr.bf16.mxu0 0
  %1902 = vmatpush1.bf16.msra.mxu0 %v1883
  %1903 = vmatprep.subr.bf16.mxu0 0
  %1904 = vmatpush1.bf16.msra.mxu0 %v1882
  %1905 = vmatprep.subr.bf16.mxu0 0
  %1906 = vmatpush1.bf16.msra.mxu0 %v1881
  %1907 = vmatprep.subr.bf16.mxu0 0
  %1908 = vmatpush1.bf16.msra.mxu0 %v1880
  %1909 = vmatprep.subr.bf16.mxu0 0
  %1910 = vmatpush1.bf16.msra.mxu0 %v1879
  %1911 = vmatprep.subr.bf16.mxu0 0
  %1912 = vmatpush2.bf16.msra.mxu0 0
  %1913 = vmatprep.subr.bf16.mxu0 0
  %1914 = vmatpush2.bf16.msra.mxu0 0
  %1915 = vmatprep.subr.bf16.mxu0 0
  %1916 = vmatpush2.bf16.msra.mxu0 0
  %1917 = vmatprep.subr.bf16.mxu0 0
  %1918 = vmatpush2.bf16.msra.mxu0 0
  %1919 = vmatprep.subr.bf16.mxu0 0
  %1920 = vmatpush2.bf16.msra.mxu0 0
  %1921 = vmatprep.subr.bf16.mxu0 0
  %1922 = vmatpush2.bf16.msra.mxu0 0
  %1923 = vmatprep.subr.bf16.mxu0 0
  %1924 = vmatpush2.bf16.msra.mxu0 0
  %1925 = vmatprep.subr.bf16.mxu0 0
  %1926 = vmatpush2.bf16.msra.mxu0 0
  %1927 = vmatprep.mubr.bf16.mxu0 0
  %1928 = vmatmul.mubr.bf16.gmra.mxu0 %v1808
  %v1929 = vpop.f32.mrf.mxu0
  %v1930 = vadd.f32 %v1845, %v1929
  %v1931 = vpop.f32.mrf.mxu0
  %v1932 = vpop.f32.mrf.mxu0
  %v1933 = vadd.f32 %v1845, %v1932
  %v1934 = vpop.f32.mrf.mxu0
  %1935 = vmatprep.mubr.bf16.mxu0 0
  %1936 = vmatmul.mubr.bf16.gmra.mxu0 %v1809
  %v1937 = vpop.f32.mrf.mxu0
  %v1938 = vadd.f32 %v1845, %v1937
  %v1939 = vpop.f32.mrf.mxu0
  %v1940 = vpop.f32.mrf.mxu0
  %v1941 = vadd.f32 %v1845, %v1940
  %v1942 = vpop.f32.mrf.mxu0
  %1943 = vmatprep.mubr.bf16.mxu0 0
  %1944 = vmatmul.mubr.bf16.gmra.mxu0 %v1810
  %v1945 = vpop.f32.mrf.mxu0
  %v1946 = vadd.f32 %v1845, %v1945
  %v1947 = vpop.f32.mrf.mxu0
  %v1948 = vpop.f32.mrf.mxu0
  %v1949 = vadd.f32 %v1845, %v1948
  %v1950 = vpop.f32.mrf.mxu0
  %1951 = vmatprep.mubr.bf16.mxu0 0
  %1952 = vmatmul.mubr.bf16.gmra.mxu0 %v1811
  %v1953 = vpop.f32.mrf.mxu0
  %v1954 = vadd.f32 %v1845, %v1953
  %v1955 = vpop.f32.mrf.mxu0
  %v1956 = vpop.f32.mrf.mxu0
  %v1957 = vadd.f32 %v1845, %v1956
  %v1958 = vpop.f32.mrf.mxu0
  %1959 = vmatprep.mubr.bf16.mxu0 0
  %1960 = vmatmul.mubr.bf16.gmra.mxu0 %v1812
  %v1961 = vpop.f32.mrf.mxu0
  %v1962 = vadd.f32 %v1845, %v1961
  %v1963 = vpop.f32.mrf.mxu0
  %v1964 = vpop.f32.mrf.mxu0
  %v1965 = vadd.f32 %v1845, %v1964
  %v1966 = vpop.f32.mrf.mxu0
  %1967 = vmatprep.mubr.bf16.mxu0 0
  %1968 = vmatmul.mubr.bf16.gmra.mxu0 %v1813
  %v1969 = vpop.f32.mrf.mxu0
  %v1970 = vadd.f32 %v1845, %v1969
  %v1971 = vpop.f32.mrf.mxu0
  %v1972 = vpop.f32.mrf.mxu0
  %v1973 = vadd.f32 %v1845, %v1972
  %v1974 = vpop.f32.mrf.mxu0
  %1975 = vmatprep.mubr.bf16.mxu0 0
  %1976 = vmatmul.mubr.bf16.gmra.mxu0 %v1814
  %v1977 = vpop.f32.mrf.mxu0
  %v1978 = vadd.f32 %v1845, %v1977
  %v1979 = vpop.f32.mrf.mxu0
  %v1980 = vpop.f32.mrf.mxu0
  %v1981 = vadd.f32 %v1845, %v1980
  %v1982 = vpop.f32.mrf.mxu0
  %1983 = vmatprep.mubr.bf16.mxu0 0
  %1984 = vmatmul.mubr.bf16.gmra.mxu0 %v1815
  %v1985 = vpop.f32.mrf.mxu0
  %v1986 = vadd.f32 %v1845, %v1985
  %v1987 = vpop.f32.mrf.mxu0
  %v1988 = vpop.f32.mrf.mxu0
  %v1989 = vadd.f32 %v1845, %v1988
  %v1990 = vpop.f32.mrf.mxu0
  %1991 = vmatprep.mubr.bf16.mxu0 0
  %1992 = vmatmul.mubr.bf16.gmra.mxu0 %v1816
  %v1993 = vpop.f32.mrf.mxu0
  %v1994 = vadd.f32 %v1845, %v1993
  %v1995 = vpop.f32.mrf.mxu0
  %v1996 = vpop.f32.mrf.mxu0
  %v1997 = vadd.f32 %v1845, %v1996
  %v1998 = vpop.f32.mrf.mxu0
  %1999 = vmatprep.mubr.bf16.mxu0 0
  %2000 = vmatmul.mubr.bf16.gmra.mxu0 %v1817
  %v2001 = vpop.f32.mrf.mxu0
  %v2002 = vadd.f32 %v1845, %v2001
  %v2003 = vpop.f32.mrf.mxu0
  %v2004 = vpop.f32.mrf.mxu0
  %v2005 = vadd.f32 %v1845, %v2004
  %v2006 = vpop.f32.mrf.mxu0
  %2007 = vmatprep.mubr.bf16.mxu0 0
  %2008 = vmatmul.mubr.bf16.gmra.mxu0 %v1818
  %v2009 = vpop.f32.mrf.mxu0
  %v2010 = vadd.f32 %v1845, %v2009
  %v2011 = vpop.f32.mrf.mxu0
  %v2012 = vpop.f32.mrf.mxu0
  %v2013 = vadd.f32 %v1845, %v2012
  %v2014 = vpop.f32.mrf.mxu0
  %2015 = vmatprep.mubr.bf16.mxu0 0
  %2016 = vmatmul.mubr.bf16.gmra.mxu0 %v1819
  %v2017 = vpop.f32.mrf.mxu0
  %v2018 = vadd.f32 %v1845, %v2017
  %v2019 = vpop.f32.mrf.mxu0
  %v2020 = vpop.f32.mrf.mxu0
  %v2021 = vadd.f32 %v1845, %v2020
  %v2022 = vpop.f32.mrf.mxu0
  %2023 = vmatprep.mubr.bf16.mxu0 0
  %2024 = vmatmul.mubr.bf16.gmra.mxu0 %v1820
  %v2025 = vpop.f32.mrf.mxu0
  %v2026 = vadd.f32 %v1845, %v2025
  %v2027 = vpop.f32.mrf.mxu0
  %v2028 = vpop.f32.mrf.mxu0
  %v2029 = vadd.f32 %v1845, %v2028
  %v2030 = vpop.f32.mrf.mxu0
  %2031 = vmatprep.mubr.bf16.mxu0 0
  %2032 = vmatmul.mubr.bf16.gmra.mxu0 %v1821
  %v2033 = vpop.f32.mrf.mxu0
  %v2034 = vadd.f32 %v1845, %v2033
  %v2035 = vpop.f32.mrf.mxu0
  %v2036 = vpop.f32.mrf.mxu0
  %v2037 = vadd.f32 %v1845, %v2036
  %v2038 = vpop.f32.mrf.mxu0
  %2039 = vmatprep.mubr.bf16.mxu0 0
  %2040 = vmatmul.mubr.bf16.gmra.mxu0 %v1822
  %v2041 = vpop.f32.mrf.mxu0
  %v2042 = vadd.f32 %v1845, %v2041
  %v2043 = vpop.f32.mrf.mxu0
  %v2044 = vpop.f32.mrf.mxu0
  %v2045 = vadd.f32 %v1845, %v2044
  %v2046 = vpop.f32.mrf.mxu0
  %2047 = vmatprep.mubr.bf16.mxu0 0
  %2048 = vmatmul.mubr.bf16.gmra.mxu0 %v1823
  %v2049 = vpop.f32.mrf.mxu0
  %v2050 = vadd.f32 %v1845, %v2049
  %v2051 = vpop.f32.mrf.mxu0
  %v2052 = vpop.f32.mrf.mxu0
  %v2053 = vadd.f32 %v1845, %v2052
  %v2054 = vpop.f32.mrf.mxu0
  %2055 = vdwg.mxu0
  %vm2056 = vcmp.gt.f32.partialorder %v1930, 0.0
  %vm2057 = vcmp.gt.f32.partialorder %v1933, 0.0
  %vm2058 = vcmp.gt.f32.partialorder %v1938, 0.0
  %vm2059 = vcmp.gt.f32.partialorder %v1941, 0.0
  %vm2060 = vcmp.gt.f32.partialorder %v1946, 0.0
  %vm2061 = vcmp.gt.f32.partialorder %v1949, 0.0
  %vm2062 = vcmp.gt.f32.partialorder %v1954, 0.0
  %vm2063 = vcmp.gt.f32.partialorder %v1957, 0.0
  %vm2064 = vcmp.gt.f32.partialorder %v1962, 0.0
  %vm2065 = vcmp.gt.f32.partialorder %v1965, 0.0
  %vm2066 = vcmp.gt.f32.partialorder %v1970, 0.0
  %vm2067 = vcmp.gt.f32.partialorder %v1973, 0.0
  %vm2068 = vcmp.gt.f32.partialorder %v1978, 0.0
  %vm2069 = vcmp.gt.f32.partialorder %v1981, 0.0
  %vm2070 = vcmp.gt.f32.partialorder %v1986, 0.0
  %vm2071 = vcmp.gt.f32.partialorder %v1989, 0.0
  %vm2072 = vcmp.gt.f32.partialorder %v1994, 0.0
  %vm2073 = vcmp.gt.f32.partialorder %v1997, 0.0
  %vm2074 = vcmp.gt.f32.partialorder %v2002, 0.0
  %vm2075 = vcmp.gt.f32.partialorder %v2005, 0.0
  %vm2076 = vcmp.gt.f32.partialorder %v2010, 0.0
  %vm2077 = vcmp.gt.f32.partialorder %v2013, 0.0
  %vm2078 = vcmp.gt.f32.partialorder %v2018, 0.0
  %vm2079 = vcmp.gt.f32.partialorder %v2021, 0.0
  %vm2080 = vcmp.gt.f32.partialorder %v2026, 0.0
  %vm2081 = vcmp.gt.f32.partialorder %v2029, 0.0
  %vm2082 = vcmp.gt.f32.partialorder %v2034, 0.0
  %vm2083 = vcmp.gt.f32.partialorder %v2037, 0.0
  %vm2084 = vcmp.gt.f32.partialorder %v2042, 0.0
  %vm2085 = vcmp.gt.f32.partialorder %v2045, 0.0
  %vm2086 = vcmp.gt.f32.partialorder %v2050, 0.0
  %vm2087 = vcmp.gt.f32.partialorder %v2053, 0.0
  %v2088 = vmul.f32 %v1055, %v1930
  %v2089 = vmul.f32 %v1055, %v1933
  %v2090 = vmul.f32 %v1055, %v1938
  %v2091 = vmul.f32 %v1055, %v1941
  %v2092 = vmul.f32 %v1055, %v1946
  %v2093 = vmul.f32 %v1055, %v1949
  %v2094 = vmul.f32 %v1055, %v1954
  %v2095 = vmul.f32 %v1055, %v1957
  %v2096 = vmul.f32 %v1055, %v1962
  %v2097 = vmul.f32 %v1055, %v1965
  %v2098 = vmul.f32 %v1055, %v1970
  %v2099 = vmul.f32 %v1055, %v1973
  %v2100 = vmul.f32 %v1055, %v1978
  %v2101 = vmul.f32 %v1055, %v1981
  %v2102 = vmul.f32 %v1055, %v1986
  %v2103 = vmul.f32 %v1055, %v1989
  %v2104 = vmul.f32 %v1055, %v1994
  %v2105 = vmul.f32 %v1055, %v1997
  %v2106 = vmul.f32 %v1055, %v2002
  %v2107 = vmul.f32 %v1055, %v2005
  %v2108 = vmul.f32 %v1055, %v2010
  %v2109 = vmul.f32 %v1055, %v2013
  %v2110 = vmul.f32 %v1055, %v2018
  %v2111 = vmul.f32 %v1055, %v2021
  %v2112 = vmul.f32 %v1055, %v2026
  %v2113 = vmul.f32 %v1055, %v2029
  %v2114 = vmul.f32 %v1055, %v2034
  %v2115 = vmul.f32 %v1055, %v2037
  %v2116 = vmul.f32 %v1055, %v2042
  %v2117 = vmul.f32 %v1055, %v2045
  %v2118 = vmul.f32 %v1055, %v2050
  %v2119 = vmul.f32 %v1055, %v2053
  %v2120 = vsel %vm2056, %v1930, %v2088
  %v2121 = vsel %vm2057, %v1933, %v2089
  %v2122 = vsel %vm2058, %v1938, %v2090
  %v2123 = vsel %vm2059, %v1941, %v2091
  %v2124 = vsel %vm2060, %v1946, %v2092
  %v2125 = vsel %vm2061, %v1949, %v2093
  %v2126 = vsel %vm2062, %v1954, %v2094
  %v2127 = vsel %vm2063, %v1957, %v2095
  %v2128 = vsel %vm2064, %v1962, %v2096
  %v2129 = vsel %vm2065, %v1965, %v2097
  %v2130 = vsel %vm2066, %v1970, %v2098
  %v2131 = vsel %vm2067, %v1973, %v2099
  %v2132 = vsel %vm2068, %v1978, %v2100
  %v2133 = vsel %vm2069, %v1981, %v2101
  %v2134 = vsel %vm2070, %v1986, %v2102
  %v2135 = vsel %vm2071, %v1989, %v2103
  %v2136 = vsel %vm2072, %v1994, %v2104
  %v2137 = vsel %vm2073, %v1997, %v2105
  %v2138 = vsel %vm2074, %v2002, %v2106
  %v2139 = vsel %vm2075, %v2005, %v2107
  %v2140 = vsel %vm2076, %v2010, %v2108
  %v2141 = vsel %vm2077, %v2013, %v2109
  %v2142 = vsel %vm2078, %v2018, %v2110
  %v2143 = vsel %vm2079, %v2021, %v2111
  %v2144 = vsel %vm2080, %v2026, %v2112
  %v2145 = vsel %vm2081, %v2029, %v2113
  %v2146 = vsel %vm2082, %v2034, %v2114
  %v2147 = vsel %vm2083, %v2037, %v2115
  %v2148 = vsel %vm2084, %v2042, %v2116
  %v2149 = vsel %vm2085, %v2045, %v2117
  %v2150 = vsel %vm2086, %v2050, %v2118
  %v2151 = vsel %vm2087, %v2053, %v2119
  %v2152 = vpack.c.bf16 %v2121, %v2120
  %v2153 = vpack.c.bf16 %v2123, %v2122
  %v2154 = vpack.c.bf16 %v2125, %v2124
  %v2155 = vpack.c.bf16 %v2127, %v2126
  %v2156 = vpack.c.bf16 %v2129, %v2128
  %v2157 = vpack.c.bf16 %v2131, %v2130
  %v2158 = vpack.c.bf16 %v2133, %v2132
  %v2159 = vpack.c.bf16 %v2135, %v2134
  %v2160 = vpack.c.bf16 %v2137, %v2136
  %v2161 = vpack.c.bf16 %v2139, %v2138
  %v2162 = vpack.c.bf16 %v2141, %v2140
  %v2163 = vpack.c.bf16 %v2143, %v2142
  %v2164 = vpack.c.bf16 %v2145, %v2144
  %v2165 = vpack.c.bf16 %v2147, %v2146
  %v2166 = vpack.c.bf16 %v2149, %v2148
  %v2167 = vpack.c.bf16 %v2151, %v2150
  %v2168 = vld [vmem:[%s11] sm:$0xf]
  %v2169 = vld [vmem:[%s11 + $0x4] sm:$0xf]
  %v2170 = vld [vmem:[%s11 + $0x8] sm:$0xf]
  %v2171 = vld [vmem:[%s11 + $0xc] sm:$0xf]
  %v2172 = vld [vmem:[%s11 + $0x10] sm:$0xf]
  %v2173 = vld [vmem:[%s11 + $0x14] sm:$0xf]
  %v2174 = vld [vmem:[%s11 + $0x18] sm:$0xf]
  %v2175 = vld [vmem:[%s11 + $0x1c] sm:$0xf]
  %v2176 = vld [vmem:[%s11 + $0x20] sm:$0xf]
  %v2177 = vld [vmem:[%s11 + $0x24] sm:$0xf]
  %v2178 = vld [vmem:[%s11 + $0x28] sm:$0xf]
  %v2179 = vld [vmem:[%s11 + $0x2c] sm:$0xf]
  %v2180 = vld [vmem:[%s11 + $0x30] sm:$0xf]
  %v2181 = vld [vmem:[%s11 + $0x34] sm:$0xf]
  %v2182 = vld [vmem:[%s11 + $0x38] sm:$0xf]
  %v2183 = vld [vmem:[%s11 + $0x3c] sm:$0xf]
  %v2184 = vld [vmem:[%s12] sm:$0x7]
  %v2185 = vlaneseq
  %v2186 = vshrl.u32 %v2185, 7
  %v2187 = vsub.s32 0, %v2186
  %v2188 = vrot.slane %v2184, %v2187
  %v2189 = vmul.f32 %v165, %v2188
  %v2190 = vmul.f32 %v170, %v2188
  %v2191 = vmul.f32 %v175, %v2188
  %v2192 = vmul.f32 %v180, %v2188
  %v2193 = vmul.f32 %v185, %v2188
  %v2194 = vmul.f32 %v190, %v2188
  %v2195 = vmul.f32 %v195, %v2188
  %v2196 = vmul.f32 %v200, %v2188
  %v2197 = vmul.f32 %v205, %v2188
  %v2198 = vmul.f32 %v210, %v2188
  %v2199 = vmul.f32 %v215, %v2188
  %v2200 = vmul.f32 %v220, %v2188
  %v2201 = vmul.f32 %v225, %v2188
  %v2202 = vmul.f32 %v230, %v2188
  %v2203 = vmul.f32 %v235, %v2188
  %v2204 = vmul.f32 %v240, %v2188
  %v2205 = vmul.f32 %v245, %v2188
  %v2206 = vmul.f32 %v250, %v2188
  %v2207 = vmul.f32 %v255, %v2188
  %v2208 = vmul.f32 %v260, %v2188
  %v2209 = vmul.f32 %v265, %v2188
  %v2210 = vmul.f32 %v270, %v2188
  %v2211 = vmul.f32 %v275, %v2188
  %v2212 = vmul.f32 %v280, %v2188
  %v2213 = vmul.f32 %v285, %v2188
  %v2214 = vmul.f32 %v290, %v2188
  %v2215 = vmul.f32 %v295, %v2188
  %v2216 = vmul.f32 %v300, %v2188
  %v2217 = vmul.f32 %v305, %v2188
  %v2218 = vmul.f32 %v310, %v2188
  %v2219 = vmul.f32 %v315, %v2188
  %v2220 = vmul.f32 %v320, %v2188
  %v2221 = vlaneseq
  %v2222 = vshrl.u32 %v2221, 7
  %v2223 = vsub.s32 1, %v2222
  %v2224 = vrot.slane %v2184, %v2223
  %v2225 = vmul.f32 %v360, %v2224
  %v2226 = vmul.f32 %v364, %v2224
  %v2227 = vmul.f32 %v368, %v2224
  %v2228 = vmul.f32 %v372, %v2224
  %v2229 = vmul.f32 %v376, %v2224
  %v2230 = vmul.f32 %v380, %v2224
  %v2231 = vmul.f32 %v384, %v2224
  %v2232 = vmul.f32 %v388, %v2224
  %v2233 = vmul.f32 %v392, %v2224
  %v2234 = vmul.f32 %v396, %v2224
  %v2235 = vmul.f32 %v400, %v2224
  %v2236 = vmul.f32 %v404, %v2224
  %v2237 = vmul.f32 %v408, %v2224
  %v2238 = vmul.f32 %v412, %v2224
  %v2239 = vmul.f32 %v416, %v2224
  %v2240 = vmul.f32 %v420, %v2224
  %v2241 = vmul.f32 %v424, %v2224
  %v2242 = vmul.f32 %v428, %v2224
  %v2243 = vmul.f32 %v432, %v2224
  %v2244 = vmul.f32 %v436, %v2224
  %v2245 = vmul.f32 %v440, %v2224
  %v2246 = vmul.f32 %v444, %v2224
  %v2247 = vmul.f32 %v448, %v2224
  %v2248 = vmul.f32 %v452, %v2224
  %v2249 = vmul.f32 %v456, %v2224
  %v2250 = vmul.f32 %v460, %v2224
  %v2251 = vmul.f32 %v464, %v2224
  %v2252 = vmul.f32 %v468, %v2224
  %v2253 = vmul.f32 %v472, %v2224
  %v2254 = vmul.f32 %v476, %v2224
  %v2255 = vmul.f32 %v480, %v2224
  %v2256 = vmul.f32 %v484, %v2224
  %v2257 = vadd.f32 %v2189, %v2225
  %v2258 = vadd.f32 %v2190, %v2226
  %v2259 = vadd.f32 %v2191, %v2227
  %v2260 = vadd.f32 %v2192, %v2228
  %v2261 = vadd.f32 %v2193, %v2229
  %v2262 = vadd.f32 %v2194, %v2230
  %v2263 = vadd.f32 %v2195, %v2231
  %v2264 = vadd.f32 %v2196, %v2232
  %v2265 = vadd.f32 %v2197, %v2233
  %v2266 = vadd.f32 %v2198, %v2234
  %v2267 = vadd.f32 %v2199, %v2235
  %v2268 = vadd.f32 %v2200, %v2236
  %v2269 = vadd.f32 %v2201, %v2237
  %v2270 = vadd.f32 %v2202, %v2238
  %v2271 = vadd.f32 %v2203, %v2239
  %v2272 = vadd.f32 %v2204, %v2240
  %v2273 = vadd.f32 %v2205, %v2241
  %v2274 = vadd.f32 %v2206, %v2242
  %v2275 = vadd.f32 %v2207, %v2243
  %v2276 = vadd.f32 %v2208, %v2244
  %v2277 = vadd.f32 %v2209, %v2245
  %v2278 = vadd.f32 %v2210, %v2246
  %v2279 = vadd.f32 %v2211, %v2247
  %v2280 = vadd.f32 %v2212, %v2248
  %v2281 = vadd.f32 %v2213, %v2249
  %v2282 = vadd.f32 %v2214, %v2250
  %v2283 = vadd.f32 %v2215, %v2251
  %v2284 = vadd.f32 %v2216, %v2252
  %v2285 = vadd.f32 %v2217, %v2253
  %v2286 = vadd.f32 %v2218, %v2254
  %v2287 = vadd.f32 %v2219, %v2255
  %v2288 = vadd.f32 %v2220, %v2256
  %v2289 = vlaneseq
  %v2290 = vshrl.u32 %v2289, 7
  %v2291 = vsub.s32 2, %v2290
  %v2292 = vrot.slane %v2184, %v2291
  %v2293 = vmul.f32 %v556, %v2292
  %v2294 = vmul.f32 %v560, %v2292
  %v2295 = vmul.f32 %v564, %v2292
  %v2296 = vmul.f32 %v568, %v2292
  %v2297 = vmul.f32 %v572, %v2292
  %v2298 = vmul.f32 %v576, %v2292
  %v2299 = vmul.f32 %v580, %v2292
  %v2300 = vmul.f32 %v584, %v2292
  %v2301 = vmul.f32 %v588, %v2292
  %v2302 = vmul.f32 %v592, %v2292
  %v2303 = vmul.f32 %v596, %v2292
  %v2304 = vmul.f32 %v600, %v2292
  %v2305 = vmul.f32 %v604, %v2292
  %v2306 = vmul.f32 %v608, %v2292
  %v2307 = vmul.f32 %v612, %v2292
  %v2308 = vmul.f32 %v616, %v2292
  %v2309 = vmul.f32 %v620, %v2292
  %v2310 = vmul.f32 %v624, %v2292
  %v2311 = vmul.f32 %v628, %v2292
  %v2312 = vmul.f32 %v632, %v2292
  %v2313 = vmul.f32 %v636, %v2292
  %v2314 = vmul.f32 %v640, %v2292
  %v2315 = vmul.f32 %v644, %v2292
  %v2316 = vmul.f32 %v648, %v2292
  %v2317 = vmul.f32 %v652, %v2292
  %v2318 = vmul.f32 %v656, %v2292
  %v2319 = vmul.f32 %v660, %v2292
  %v2320 = vmul.f32 %v664, %v2292
  %v2321 = vmul.f32 %v668, %v2292
  %v2322 = vmul.f32 %v672, %v2292
  %v2323 = vmul.f32 %v676, %v2292
  %v2324 = vmul.f32 %v680, %v2292
  %v2325 = vadd.f32 %v2257, %v2293
  %v2326 = vadd.f32 %v2258, %v2294
  %v2327 = vadd.f32 %v2259, %v2295
  %v2328 = vadd.f32 %v2260, %v2296
  %v2329 = vadd.f32 %v2261, %v2297
  %v2330 = vadd.f32 %v2262, %v2298
  %v2331 = vadd.f32 %v2263, %v2299
  %v2332 = vadd.f32 %v2264, %v2300
  %v2333 = vadd.f32 %v2265, %v2301
  %v2334 = vadd.f32 %v2266, %v2302
  %v2335 = vadd.f32 %v2267, %v2303
  %v2336 = vadd.f32 %v2268, %v2304
  %v2337 = vadd.f32 %v2269, %v2305
  %v2338 = vadd.f32 %v2270, %v2306
  %v2339 = vadd.f32 %v2271, %v2307
  %v2340 = vadd.f32 %v2272, %v2308
  %v2341 = vadd.f32 %v2273, %v2309
  %v2342 = vadd.f32 %v2274, %v2310
  %v2343 = vadd.f32 %v2275, %v2311
  %v2344 = vadd.f32 %v2276, %v2312
  %v2345 = vadd.f32 %v2277, %v2313
  %v2346 = vadd.f32 %v2278, %v2314
  %v2347 = vadd.f32 %v2279, %v2315
  %v2348 = vadd.f32 %v2280, %v2316
  %v2349 = vadd.f32 %v2281, %v2317
  %v2350 = vadd.f32 %v2282, %v2318
  %v2351 = vadd.f32 %v2283, %v2319
  %v2352 = vadd.f32 %v2284, %v2320
  %v2353 = vadd.f32 %v2285, %v2321
  %v2354 = vadd.f32 %v2286, %v2322
  %v2355 = vadd.f32 %v2287, %v2323
  %v2356 = vadd.f32 %v2288, %v2324
  %v2373 = vunpack.c.l.b16 %v2168
  %v2374 = vunpack.c.l.b16 %v2169
  %v2375 = vunpack.c.l.b16 %v2170
  %v2376 = vunpack.c.l.b16 %v2171
  %v2377 = vunpack.c.l.b16 %v2172
  %v2378 = vunpack.c.l.b16 %v2173
  %v2379 = vunpack.c.l.b16 %v2174
  %v2380 = vunpack.c.l.b16 %v2175
  %v2381 = vunpack.c.l.b16 %v2176
  %v2382 = vunpack.c.l.b16 %v2177
  %v2383 = vunpack.c.l.b16 %v2178
  %v2384 = vunpack.c.l.b16 %v2179
  %v2385 = vunpack.c.l.b16 %v2180
  %v2386 = vunpack.c.l.b16 %v2181
  %v2387 = vunpack.c.l.b16 %v2182
  %v2388 = vunpack.c.l.b16 %v2183
  %v2389 = vpack.c.b16 %v2374, %v2373
  %v2390 = vpack.c.b16 %v2376, %v2375
  %v2391 = vpack.c.b16 %v2378, %v2377
  %v2392 = vpack.c.b16 %v2380, %v2379
  %v2393 = vpack.c.b16 %v2382, %v2381
  %v2394 = vpack.c.b16 %v2384, %v2383
  %v2395 = vpack.c.b16 %v2386, %v2385
  %v2396 = vpack.c.b16 %v2388, %v2387
  %2405 = vmatprep.subr.bf16.mxu0 0
  %2406 = vmatpush1.bf16.msra.mxu0 %v2396
  %2407 = vmatprep.subr.bf16.mxu0 0
  %2408 = vmatpush1.bf16.msra.mxu0 %v2395
  %2409 = vmatprep.subr.bf16.mxu0 0
  %2410 = vmatpush1.bf16.msra.mxu0 %v2394
  %2411 = vmatprep.subr.bf16.mxu0 0
  %2412 = vmatpush1.bf16.msra.mxu0 %v2393
  %2413 = vmatprep.subr.bf16.mxu0 0
  %2414 = vmatpush1.bf16.msra.mxu0 %v2392
  %2415 = vmatprep.subr.bf16.mxu0 0
  %2416 = vmatpush1.bf16.msra.mxu0 %v2391
  %2417 = vmatprep.subr.bf16.mxu0 0
  %2418 = vmatpush1.bf16.msra.mxu0 %v2390
  %2419 = vmatprep.subr.bf16.mxu0 0
  %2420 = vmatpush1.bf16.msra.mxu0 %v2389
  %2421 = vmatprep.subr.bf16.mxu0 0
  %2422 = vmatpush2.bf16.msra.mxu0 0
  %2423 = vmatprep.subr.bf16.mxu0 0
  %2424 = vmatpush2.bf16.msra.mxu0 0
  %2425 = vmatprep.subr.bf16.mxu0 0
  %2426 = vmatpush2.bf16.msra.mxu0 0
  %2427 = vmatprep.subr.bf16.mxu0 0
  %2428 = vmatpush2.bf16.msra.mxu0 0
  %2429 = vmatprep.subr.bf16.mxu0 0
  %2430 = vmatpush2.bf16.msra.mxu0 0
  %2431 = vmatprep.subr.bf16.mxu0 0
  %2432 = vmatpush2.bf16.msra.mxu0 0
  %2433 = vmatprep.subr.bf16.mxu0 0
  %2434 = vmatpush2.bf16.msra.mxu0 0
  %2435 = vmatprep.subr.bf16.mxu0 0
  %2436 = vmatpush2.bf16.msra.mxu0 0
  %2437 = vmatprep.mubr.bf16.mxu0 0
  %2438 = vmatmul.mubr.bf16.gmra.mxu0 %v2152
  %v2439 = vpop.f32.mrf.mxu0
  %v2440 = vadd.f32 %v2325, %v2439
  %v2441 = vpop.f32.mrf.mxu0
  %v2442 = vpop.f32.mrf.mxu0
  %v2443 = vadd.f32 %v2326, %v2442
  %v2444 = vpop.f32.mrf.mxu0
  %2445 = vmatprep.mubr.bf16.mxu0 0
  %2446 = vmatmul.mubr.bf16.gmra.mxu0 %v2153
  %v2447 = vpop.f32.mrf.mxu0
  %v2448 = vadd.f32 %v2327, %v2447
  %v2449 = vpop.f32.mrf.mxu0
  %v2450 = vpop.f32.mrf.mxu0
  %v2451 = vadd.f32 %v2328, %v2450
  %v2452 = vpop.f32.mrf.mxu0
  %2453 = vmatprep.mubr.bf16.mxu0 0
  %2454 = vmatmul.mubr.bf16.gmra.mxu0 %v2154
  %v2455 = vpop.f32.mrf.mxu0
  %v2456 = vadd.f32 %v2329, %v2455
  %v2457 = vpop.f32.mrf.mxu0
  %v2458 = vpop.f32.mrf.mxu0
  %v2459 = vadd.f32 %v2330, %v2458
  %v2460 = vpop.f32.mrf.mxu0
  %2461 = vmatprep.mubr.bf16.mxu0 0
  %2462 = vmatmul.mubr.bf16.gmra.mxu0 %v2155
  %v2463 = vpop.f32.mrf.mxu0
  %v2464 = vadd.f32 %v2331, %v2463
  %v2465 = vpop.f32.mrf.mxu0
  %v2466 = vpop.f32.mrf.mxu0
  %v2467 = vadd.f32 %v2332, %v2466
  %v2468 = vpop.f32.mrf.mxu0
  %2469 = vmatprep.mubr.bf16.mxu0 0
  %2470 = vmatmul.mubr.bf16.gmra.mxu0 %v2156
  %v2471 = vpop.f32.mrf.mxu0
  %v2472 = vadd.f32 %v2333, %v2471
  %v2473 = vpop.f32.mrf.mxu0
  %v2474 = vpop.f32.mrf.mxu0
  %v2475 = vadd.f32 %v2334, %v2474
  %v2476 = vpop.f32.mrf.mxu0
  %2477 = vmatprep.mubr.bf16.mxu0 0
  %2478 = vmatmul.mubr.bf16.gmra.mxu0 %v2157
  %v2479 = vpop.f32.mrf.mxu0
  %v2480 = vadd.f32 %v2335, %v2479
  %v2481 = vpop.f32.mrf.mxu0
  %v2482 = vpop.f32.mrf.mxu0
  %v2483 = vadd.f32 %v2336, %v2482
  %v2484 = vpop.f32.mrf.mxu0
  %2485 = vmatprep.mubr.bf16.mxu0 0
  %2486 = vmatmul.mubr.bf16.gmra.mxu0 %v2158
  %v2487 = vpop.f32.mrf.mxu0
  %v2488 = vadd.f32 %v2337, %v2487
  %v2489 = vpop.f32.mrf.mxu0
  %v2490 = vpop.f32.mrf.mxu0
  %v2491 = vadd.f32 %v2338, %v2490
  %v2492 = vpop.f32.mrf.mxu0
  %2493 = vmatprep.mubr.bf16.mxu0 0
  %2494 = vmatmul.mubr.bf16.gmra.mxu0 %v2159
  %v2495 = vpop.f32.mrf.mxu0
  %v2496 = vadd.f32 %v2339, %v2495
  %v2497 = vpop.f32.mrf.mxu0
  %v2498 = vpop.f32.mrf.mxu0
  %v2499 = vadd.f32 %v2340, %v2498
  %v2500 = vpop.f32.mrf.mxu0
  %2501 = vmatprep.mubr.bf16.mxu0 0
  %2502 = vmatmul.mubr.bf16.gmra.mxu0 %v2160
  %v2503 = vpop.f32.mrf.mxu0
  %v2504 = vadd.f32 %v2341, %v2503
  %v2505 = vpop.f32.mrf.mxu0
  %v2506 = vpop.f32.mrf.mxu0
  %v2507 = vadd.f32 %v2342, %v2506
  %v2508 = vpop.f32.mrf.mxu0
  %2509 = vmatprep.mubr.bf16.mxu0 0
  %2510 = vmatmul.mubr.bf16.gmra.mxu0 %v2161
  %v2511 = vpop.f32.mrf.mxu0
  %v2512 = vadd.f32 %v2343, %v2511
  %v2513 = vpop.f32.mrf.mxu0
  %v2514 = vpop.f32.mrf.mxu0
  %v2515 = vadd.f32 %v2344, %v2514
  %v2516 = vpop.f32.mrf.mxu0
  %2517 = vmatprep.mubr.bf16.mxu0 0
  %2518 = vmatmul.mubr.bf16.gmra.mxu0 %v2162
  %v2519 = vpop.f32.mrf.mxu0
  %v2520 = vadd.f32 %v2345, %v2519
  %v2521 = vpop.f32.mrf.mxu0
  %v2522 = vpop.f32.mrf.mxu0
  %v2523 = vadd.f32 %v2346, %v2522
  %v2524 = vpop.f32.mrf.mxu0
  %2525 = vmatprep.mubr.bf16.mxu0 0
  %2526 = vmatmul.mubr.bf16.gmra.mxu0 %v2163
  %v2527 = vpop.f32.mrf.mxu0
  %v2528 = vadd.f32 %v2347, %v2527
  %v2529 = vpop.f32.mrf.mxu0
  %v2530 = vpop.f32.mrf.mxu0
  %v2531 = vadd.f32 %v2348, %v2530
  %v2532 = vpop.f32.mrf.mxu0
  %2533 = vmatprep.mubr.bf16.mxu0 0
  %2534 = vmatmul.mubr.bf16.gmra.mxu0 %v2164
  %v2535 = vpop.f32.mrf.mxu0
  %v2536 = vadd.f32 %v2349, %v2535
  %v2537 = vpop.f32.mrf.mxu0
  %v2538 = vpop.f32.mrf.mxu0
  %v2539 = vadd.f32 %v2350, %v2538
  %v2540 = vpop.f32.mrf.mxu0
  %2541 = vmatprep.mubr.bf16.mxu0 0
  %2542 = vmatmul.mubr.bf16.gmra.mxu0 %v2165
  %v2543 = vpop.f32.mrf.mxu0
  %v2544 = vadd.f32 %v2351, %v2543
  %v2545 = vpop.f32.mrf.mxu0
  %v2546 = vpop.f32.mrf.mxu0
  %v2547 = vadd.f32 %v2352, %v2546
  %v2548 = vpop.f32.mrf.mxu0
  %2549 = vmatprep.mubr.bf16.mxu0 0
  %2550 = vmatmul.mubr.bf16.gmra.mxu0 %v2166
  %v2551 = vpop.f32.mrf.mxu0
  %v2552 = vadd.f32 %v2353, %v2551
  %v2553 = vpop.f32.mrf.mxu0
  %v2554 = vpop.f32.mrf.mxu0
  %v2555 = vadd.f32 %v2354, %v2554
  %v2556 = vpop.f32.mrf.mxu0
  %2557 = vmatprep.mubr.bf16.mxu0 0
  %2558 = vmatmul.mubr.bf16.gmra.mxu0 %v2167
  %v2559 = vpop.f32.mrf.mxu0
  %v2560 = vadd.f32 %v2355, %v2559
  %v2561 = vpop.f32.mrf.mxu0
  %v2562 = vpop.f32.mrf.mxu0
  %v2563 = vadd.f32 %v2356, %v2562
  %v2564 = vpop.f32.mrf.mxu0
  %2565 = vdwg.mxu0
  %v2566 = vld [vmem:[%s13] sm:$0x1]
  %v2568 = vlaneseq
  %v2569 = vshrl.u32 %v2568, 7
  %v2570 = vsub.s32 0, %v2569
  %v2571 = vrot.slane %v2566, %v2570
  %v2573 = vadd.f32 %v2440, %v2571
  %v2574 = vadd.f32 %v2443, %v2571
  %v2575 = vadd.f32 %v2448, %v2571
  %v2576 = vadd.f32 %v2451, %v2571
  %v2577 = vadd.f32 %v2456, %v2571
  %v2578 = vadd.f32 %v2459, %v2571
  %v2579 = vadd.f32 %v2464, %v2571
  %v2580 = vadd.f32 %v2467, %v2571
  %v2581 = vadd.f32 %v2472, %v2571
  %v2582 = vadd.f32 %v2475, %v2571
  %v2583 = vadd.f32 %v2480, %v2571
  %v2584 = vadd.f32 %v2483, %v2571
  %v2585 = vadd.f32 %v2488, %v2571
  %v2586 = vadd.f32 %v2491, %v2571
  %v2587 = vadd.f32 %v2496, %v2571
  %v2588 = vadd.f32 %v2499, %v2571
  %v2589 = vadd.f32 %v2504, %v2571
  %v2590 = vadd.f32 %v2507, %v2571
  %v2591 = vadd.f32 %v2512, %v2571
  %v2592 = vadd.f32 %v2515, %v2571
  %v2593 = vadd.f32 %v2520, %v2571
  %v2594 = vadd.f32 %v2523, %v2571
  %v2595 = vadd.f32 %v2528, %v2571
  %v2596 = vadd.f32 %v2531, %v2571
  %v2597 = vadd.f32 %v2536, %v2571
  %v2598 = vadd.f32 %v2539, %v2571
  %v2599 = vadd.f32 %v2544, %v2571
  %v2600 = vadd.f32 %v2547, %v2571
  %v2601 = vadd.f32 %v2552, %v2571
  %v2602 = vadd.f32 %v2555, %v2571
  %v2603 = vadd.f32 %v2560, %v2571
  %v2604 = vadd.f32 %v2563, %v2571
  %vm2605 = vcmp.gt.f32.partialorder %v2573, 0.0
  %vm2606 = vcmp.gt.f32.partialorder %v2574, 0.0
  %vm2607 = vcmp.gt.f32.partialorder %v2575, 0.0
  %vm2608 = vcmp.gt.f32.partialorder %v2576, 0.0
  %vm2609 = vcmp.gt.f32.partialorder %v2577, 0.0
  %vm2610 = vcmp.gt.f32.partialorder %v2578, 0.0
  %vm2611 = vcmp.gt.f32.partialorder %v2579, 0.0
  %vm2612 = vcmp.gt.f32.partialorder %v2580, 0.0
  %vm2613 = vcmp.gt.f32.partialorder %v2581, 0.0
  %vm2614 = vcmp.gt.f32.partialorder %v2582, 0.0
  %vm2615 = vcmp.gt.f32.partialorder %v2583, 0.0
  %vm2616 = vcmp.gt.f32.partialorder %v2584, 0.0
  %vm2617 = vcmp.gt.f32.partialorder %v2585, 0.0
  %vm2618 = vcmp.gt.f32.partialorder %v2586, 0.0
  %vm2619 = vcmp.gt.f32.partialorder %v2587, 0.0
  %vm2620 = vcmp.gt.f32.partialorder %v2588, 0.0
  %vm2621 = vcmp.gt.f32.partialorder %v2589, 0.0
  %vm2622 = vcmp.gt.f32.partialorder %v2590, 0.0
  %vm2623 = vcmp.gt.f32.partialorder %v2591, 0.0
  %vm2624 = vcmp.gt.f32.partialorder %v2592, 0.0
  %vm2625 = vcmp.gt.f32.partialorder %v2593, 0.0
  %vm2626 = vcmp.gt.f32.partialorder %v2594, 0.0
  %vm2627 = vcmp.gt.f32.partialorder %v2595, 0.0
  %vm2628 = vcmp.gt.f32.partialorder %v2596, 0.0
  %vm2629 = vcmp.gt.f32.partialorder %v2597, 0.0
  %vm2630 = vcmp.gt.f32.partialorder %v2598, 0.0
  %vm2631 = vcmp.gt.f32.partialorder %v2599, 0.0
  %vm2632 = vcmp.gt.f32.partialorder %v2600, 0.0
  %vm2633 = vcmp.gt.f32.partialorder %v2601, 0.0
  %vm2634 = vcmp.gt.f32.partialorder %v2602, 0.0
  %vm2635 = vcmp.gt.f32.partialorder %v2603, 0.0
  %vm2636 = vcmp.gt.f32.partialorder %v2604, 0.0
  %v2637 = vmul.f32 %v1055, %v2573
  %v2638 = vmul.f32 %v1055, %v2574
  %v2639 = vmul.f32 %v1055, %v2575
  %v2640 = vmul.f32 %v1055, %v2576
  %v2641 = vmul.f32 %v1055, %v2577
  %v2642 = vmul.f32 %v1055, %v2578
  %v2643 = vmul.f32 %v1055, %v2579
  %v2644 = vmul.f32 %v1055, %v2580
  %v2645 = vmul.f32 %v1055, %v2581
  %v2646 = vmul.f32 %v1055, %v2582
  %v2647 = vmul.f32 %v1055, %v2583
  %v2648 = vmul.f32 %v1055, %v2584
  %v2649 = vmul.f32 %v1055, %v2585
  %v2650 = vmul.f32 %v1055, %v2586
  %v2651 = vmul.f32 %v1055, %v2587
  %v2652 = vmul.f32 %v1055, %v2588
  %v2653 = vmul.f32 %v1055, %v2589
  %v2654 = vmul.f32 %v1055, %v2590
  %v2655 = vmul.f32 %v1055, %v2591
  %v2656 = vmul.f32 %v1055, %v2592
  %v2657 = vmul.f32 %v1055, %v2593
  %v2658 = vmul.f32 %v1055, %v2594
  %v2659 = vmul.f32 %v1055, %v2595
  %v2660 = vmul.f32 %v1055, %v2596
  %v2661 = vmul.f32 %v1055, %v2597
  %v2662 = vmul.f32 %v1055, %v2598
  %v2663 = vmul.f32 %v1055, %v2599
  %v2664 = vmul.f32 %v1055, %v2600
  %v2665 = vmul.f32 %v1055, %v2601
  %v2666 = vmul.f32 %v1055, %v2602
  %v2667 = vmul.f32 %v1055, %v2603
  %v2668 = vmul.f32 %v1055, %v2604
  %v2669 = vsel %vm2605, %v2573, %v2637
  %v2670 = vsel %vm2606, %v2574, %v2638
  %v2671 = vsel %vm2607, %v2575, %v2639
  %v2672 = vsel %vm2608, %v2576, %v2640
  %v2673 = vsel %vm2609, %v2577, %v2641
  %v2674 = vsel %vm2610, %v2578, %v2642
  %v2675 = vsel %vm2611, %v2579, %v2643
  %v2676 = vsel %vm2612, %v2580, %v2644
  %v2677 = vsel %vm2613, %v2581, %v2645
  %v2678 = vsel %vm2614, %v2582, %v2646
  %v2679 = vsel %vm2615, %v2583, %v2647
  %v2680 = vsel %vm2616, %v2584, %v2648
  %v2681 = vsel %vm2617, %v2585, %v2649
  %v2682 = vsel %vm2618, %v2586, %v2650
  %v2683 = vsel %vm2619, %v2587, %v2651
  %v2684 = vsel %vm2620, %v2588, %v2652
  %v2685 = vsel %vm2621, %v2589, %v2653
  %v2686 = vsel %vm2622, %v2590, %v2654
  %v2687 = vsel %vm2623, %v2591, %v2655
  %v2688 = vsel %vm2624, %v2592, %v2656
  %v2689 = vsel %vm2625, %v2593, %v2657
  %v2690 = vsel %vm2626, %v2594, %v2658
  %v2691 = vsel %vm2627, %v2595, %v2659
  %v2692 = vsel %vm2628, %v2596, %v2660
  %v2693 = vsel %vm2629, %v2597, %v2661
  %v2694 = vsel %vm2630, %v2598, %v2662
  %v2695 = vsel %vm2631, %v2599, %v2663
  %v2696 = vsel %vm2632, %v2600, %v2664
  %v2697 = vsel %vm2633, %v2601, %v2665
  %v2698 = vsel %vm2634, %v2602, %v2666
  %v2699 = vsel %vm2635, %v2603, %v2667
  %v2700 = vsel %vm2636, %v2604, %v2668
  %v2701 = vpack.c.bf16 %v2670, %v2669
  %v2702 = vpack.c.bf16 %v2672, %v2671
  %v2703 = vpack.c.bf16 %v2674, %v2673
  %v2704 = vpack.c.bf16 %v2676, %v2675
  %v2705 = vpack.c.bf16 %v2678, %v2677
  %v2706 = vpack.c.bf16 %v2680, %v2679
  %v2707 = vpack.c.bf16 %v2682, %v2681
  %v2708 = vpack.c.bf16 %v2684, %v2683
  %v2709 = vpack.c.bf16 %v2686, %v2685
  %v2710 = vpack.c.bf16 %v2688, %v2687
  %v2711 = vpack.c.bf16 %v2690, %v2689
  %v2712 = vpack.c.bf16 %v2692, %v2691
  %v2713 = vpack.c.bf16 %v2694, %v2693
  %v2714 = vpack.c.bf16 %v2696, %v2695
  %v2715 = vpack.c.bf16 %v2698, %v2697
  %v2716 = vpack.c.bf16 %v2700, %v2699
  %v2717 = vld [vmem:[%s14] sm:$0xf]
  %v2718 = vld [vmem:[%s14 + $0x4] sm:$0xf]
  %v2719 = vld [vmem:[%s14 + $0x8] sm:$0xf]
  %v2720 = vld [vmem:[%s14 + $0xc] sm:$0xf]
  %v2721 = vld [vmem:[%s14 + $0x10] sm:$0xf]
  %v2722 = vld [vmem:[%s14 + $0x14] sm:$0xf]
  %v2723 = vld [vmem:[%s14 + $0x18] sm:$0xf]
  %v2724 = vld [vmem:[%s14 + $0x1c] sm:$0xf]
  %v2725 = vld [vmem:[%s14 + $0x20] sm:$0xf]
  %v2726 = vld [vmem:[%s14 + $0x24] sm:$0xf]
  %v2727 = vld [vmem:[%s14 + $0x28] sm:$0xf]
  %v2728 = vld [vmem:[%s14 + $0x2c] sm:$0xf]
  %v2729 = vld [vmem:[%s14 + $0x30] sm:$0xf]
  %v2730 = vld [vmem:[%s14 + $0x34] sm:$0xf]
  %v2731 = vld [vmem:[%s14 + $0x38] sm:$0xf]
  %v2732 = vld [vmem:[%s14 + $0x3c] sm:$0xf]
  %v2733 = vld [vmem:[%s15] sm:$0x1]
  %v2735 = vlaneseq
  %v2736 = vshrl.u32 %v2735, 7
  %v2737 = vsub.s32 0, %v2736
  %v2738 = vrot.slane %v2733, %v2737
  %v2756 = vunpack.c.l.b16 %v2717
  %v2757 = vunpack.c.l.b16 %v2718
  %v2758 = vunpack.c.l.b16 %v2719
  %v2759 = vunpack.c.l.b16 %v2720
  %v2760 = vunpack.c.l.b16 %v2721
  %v2761 = vunpack.c.l.b16 %v2722
  %v2762 = vunpack.c.l.b16 %v2723
  %v2763 = vunpack.c.l.b16 %v2724
  %v2764 = vunpack.c.l.b16 %v2725
  %v2765 = vunpack.c.l.b16 %v2726
  %v2766 = vunpack.c.l.b16 %v2727
  %v2767 = vunpack.c.l.b16 %v2728
  %v2768 = vunpack.c.l.b16 %v2729
  %v2769 = vunpack.c.l.b16 %v2730
  %v2770 = vunpack.c.l.b16 %v2731
  %v2771 = vunpack.c.l.b16 %v2732
  %v2772 = vpack.c.b16 %v2757, %v2756
  %v2773 = vpack.c.b16 %v2759, %v2758
  %v2774 = vpack.c.b16 %v2761, %v2760
  %v2775 = vpack.c.b16 %v2763, %v2762
  %v2776 = vpack.c.b16 %v2765, %v2764
  %v2777 = vpack.c.b16 %v2767, %v2766
  %v2778 = vpack.c.b16 %v2769, %v2768
  %v2779 = vpack.c.b16 %v2771, %v2770
  %2788 = vmatprep.subr.bf16.mxu0 0
  %2789 = vmatpush1.bf16.msra.mxu0 %v2779
  %2790 = vmatprep.subr.bf16.mxu0 0
  %2791 = vmatpush1.bf16.msra.mxu0 %v2778
  %2792 = vmatprep.subr.bf16.mxu0 0
  %2793 = vmatpush1.bf16.msra.mxu0 %v2777
  %2794 = vmatprep.subr.bf16.mxu0 0
  %2795 = vmatpush1.bf16.msra.mxu0 %v2776
  %2796 = vmatprep.subr.bf16.mxu0 0
  %2797 = vmatpush1.bf16.msra.mxu0 %v2775
  %2798 = vmatprep.subr.bf16.mxu0 0
  %2799 = vmatpush1.bf16.msra.mxu0 %v2774
  %2800 = vmatprep.subr.bf16.mxu0 0
  %2801 = vmatpush1.bf16.msra.mxu0 %v2773
  %2802 = vmatprep.subr.bf16.mxu0 0
  %2803 = vmatpush1.bf16.msra.mxu0 %v2772
  %2804 = vmatprep.subr.bf16.mxu0 0
  %2805 = vmatpush2.bf16.msra.mxu0 0
  %2806 = vmatprep.subr.bf16.mxu0 0
  %2807 = vmatpush2.bf16.msra.mxu0 0
  %2808 = vmatprep.subr.bf16.mxu0 0
  %2809 = vmatpush2.bf16.msra.mxu0 0
  %2810 = vmatprep.subr.bf16.mxu0 0
  %2811 = vmatpush2.bf16.msra.mxu0 0
  %2812 = vmatprep.subr.bf16.mxu0 0
  %2813 = vmatpush2.bf16.msra.mxu0 0
  %2814 = vmatprep.subr.bf16.mxu0 0
  %2815 = vmatpush2.bf16.msra.mxu0 0
  %2816 = vmatprep.subr.bf16.mxu0 0
  %2817 = vmatpush2.bf16.msra.mxu0 0
  %2818 = vmatprep.subr.bf16.mxu0 0
  %2819 = vmatpush2.bf16.msra.mxu0 0
  %2820 = vmatprep.mubr.bf16.mxu0 0
  %2821 = vmatmul.mubr.bf16.gmra.mxu0 %v2701
  %v2822 = vpop.f32.mrf.mxu0
  %v2823 = vadd.f32 %v2738, %v2822
  %v2824 = vpop.f32.mrf.mxu0
  %v2825 = vpop.f32.mrf.mxu0
  %v2826 = vadd.f32 %v2738, %v2825
  %v2827 = vpop.f32.mrf.mxu0
  %2828 = vmatprep.mubr.bf16.mxu0 0
  %2829 = vmatmul.mubr.bf16.gmra.mxu0 %v2702
  %v2830 = vpop.f32.mrf.mxu0
  %v2831 = vadd.f32 %v2738, %v2830
  %v2832 = vpop.f32.mrf.mxu0
  %v2833 = vpop.f32.mrf.mxu0
  %v2834 = vadd.f32 %v2738, %v2833
  %v2835 = vpop.f32.mrf.mxu0
  %2836 = vmatprep.mubr.bf16.mxu0 0
  %2837 = vmatmul.mubr.bf16.gmra.mxu0 %v2703
  %v2838 = vpop.f32.mrf.mxu0
  %v2839 = vadd.f32 %v2738, %v2838
  %v2840 = vpop.f32.mrf.mxu0
  %v2841 = vpop.f32.mrf.mxu0
  %v2842 = vadd.f32 %v2738, %v2841
  %v2843 = vpop.f32.mrf.mxu0
  %2844 = vmatprep.mubr.bf16.mxu0 0
  %2845 = vmatmul.mubr.bf16.gmra.mxu0 %v2704
  %v2846 = vpop.f32.mrf.mxu0
  %v2847 = vadd.f32 %v2738, %v2846
  %v2848 = vpop.f32.mrf.mxu0
  %v2849 = vpop.f32.mrf.mxu0
  %v2850 = vadd.f32 %v2738, %v2849
  %v2851 = vpop.f32.mrf.mxu0
  %2852 = vmatprep.mubr.bf16.mxu0 0
  %2853 = vmatmul.mubr.bf16.gmra.mxu0 %v2705
  %v2854 = vpop.f32.mrf.mxu0
  %v2855 = vadd.f32 %v2738, %v2854
  %v2856 = vpop.f32.mrf.mxu0
  %v2857 = vpop.f32.mrf.mxu0
  %v2858 = vadd.f32 %v2738, %v2857
  %v2859 = vpop.f32.mrf.mxu0
  %2860 = vmatprep.mubr.bf16.mxu0 0
  %2861 = vmatmul.mubr.bf16.gmra.mxu0 %v2706
  %v2862 = vpop.f32.mrf.mxu0
  %v2863 = vadd.f32 %v2738, %v2862
  %v2864 = vpop.f32.mrf.mxu0
  %v2865 = vpop.f32.mrf.mxu0
  %v2866 = vadd.f32 %v2738, %v2865
  %v2867 = vpop.f32.mrf.mxu0
  %2868 = vmatprep.mubr.bf16.mxu0 0
  %2869 = vmatmul.mubr.bf16.gmra.mxu0 %v2707
  %v2870 = vpop.f32.mrf.mxu0
  %v2871 = vadd.f32 %v2738, %v2870
  %v2872 = vpop.f32.mrf.mxu0
  %v2873 = vpop.f32.mrf.mxu0
  %v2874 = vadd.f32 %v2738, %v2873
  %v2875 = vpop.f32.mrf.mxu0
  %2876 = vmatprep.mubr.bf16.mxu0 0
  %2877 = vmatmul.mubr.bf16.gmra.mxu0 %v2708
  %v2878 = vpop.f32.mrf.mxu0
  %v2879 = vadd.f32 %v2738, %v2878
  %v2880 = vpop.f32.mrf.mxu0
  %v2881 = vpop.f32.mrf.mxu0
  %v2882 = vadd.f32 %v2738, %v2881
  %v2883 = vpop.f32.mrf.mxu0
  %2884 = vmatprep.mubr.bf16.mxu0 0
  %2885 = vmatmul.mubr.bf16.gmra.mxu0 %v2709
  %v2886 = vpop.f32.mrf.mxu0
  %v2887 = vadd.f32 %v2738, %v2886
  %v2888 = vpop.f32.mrf.mxu0
  %v2889 = vpop.f32.mrf.mxu0
  %v2890 = vadd.f32 %v2738, %v2889
  %v2891 = vpop.f32.mrf.mxu0
  %2892 = vmatprep.mubr.bf16.mxu0 0
  %2893 = vmatmul.mubr.bf16.gmra.mxu0 %v2710
  %v2894 = vpop.f32.mrf.mxu0
  %v2895 = vadd.f32 %v2738, %v2894
  %v2896 = vpop.f32.mrf.mxu0
  %v2897 = vpop.f32.mrf.mxu0
  %v2898 = vadd.f32 %v2738, %v2897
  %v2899 = vpop.f32.mrf.mxu0
  %2900 = vmatprep.mubr.bf16.mxu0 0
  %2901 = vmatmul.mubr.bf16.gmra.mxu0 %v2711
  %v2902 = vpop.f32.mrf.mxu0
  %v2903 = vadd.f32 %v2738, %v2902
  %v2904 = vpop.f32.mrf.mxu0
  %v2905 = vpop.f32.mrf.mxu0
  %v2906 = vadd.f32 %v2738, %v2905
  %v2907 = vpop.f32.mrf.mxu0
  %2908 = vmatprep.mubr.bf16.mxu0 0
  %2909 = vmatmul.mubr.bf16.gmra.mxu0 %v2712
  %v2910 = vpop.f32.mrf.mxu0
  %v2911 = vadd.f32 %v2738, %v2910
  %v2912 = vpop.f32.mrf.mxu0
  %v2913 = vpop.f32.mrf.mxu0
  %v2914 = vadd.f32 %v2738, %v2913
  %v2915 = vpop.f32.mrf.mxu0
  %2916 = vmatprep.mubr.bf16.mxu0 0
  %2917 = vmatmul.mubr.bf16.gmra.mxu0 %v2713
  %v2918 = vpop.f32.mrf.mxu0
  %v2919 = vadd.f32 %v2738, %v2918
  %v2920 = vpop.f32.mrf.mxu0
  %v2921 = vpop.f32.mrf.mxu0
  %v2922 = vadd.f32 %v2738, %v2921
  %v2923 = vpop.f32.mrf.mxu0
  %2924 = vmatprep.mubr.bf16.mxu0 0
  %2925 = vmatmul.mubr.bf16.gmra.mxu0 %v2714
  %v2926 = vpop.f32.mrf.mxu0
  %v2927 = vadd.f32 %v2738, %v2926
  %v2928 = vpop.f32.mrf.mxu0
  %v2929 = vpop.f32.mrf.mxu0
  %v2930 = vadd.f32 %v2738, %v2929
  %v2931 = vpop.f32.mrf.mxu0
  %2932 = vmatprep.mubr.bf16.mxu0 0
  %2933 = vmatmul.mubr.bf16.gmra.mxu0 %v2715
  %v2934 = vpop.f32.mrf.mxu0
  %v2935 = vadd.f32 %v2738, %v2934
  %v2936 = vpop.f32.mrf.mxu0
  %v2937 = vpop.f32.mrf.mxu0
  %v2938 = vadd.f32 %v2738, %v2937
  %v2939 = vpop.f32.mrf.mxu0
  %2940 = vmatprep.mubr.bf16.mxu0 0
  %2941 = vmatmul.mubr.bf16.gmra.mxu0 %v2716
  %v2942 = vpop.f32.mrf.mxu0
  %v2943 = vadd.f32 %v2738, %v2942
  %v2944 = vpop.f32.mrf.mxu0
  %v2945 = vpop.f32.mrf.mxu0
  %v2946 = vadd.f32 %v2738, %v2945
  %v2947 = vpop.f32.mrf.mxu0
  %2948 = vdwg.mxu0
  %vm2949 = vcmp.gt.f32.partialorder %v2823, 0.0
  %vm2950 = vcmp.gt.f32.partialorder %v2826, 0.0
  %vm2951 = vcmp.gt.f32.partialorder %v2831, 0.0
  %vm2952 = vcmp.gt.f32.partialorder %v2834, 0.0
  %vm2953 = vcmp.gt.f32.partialorder %v2839, 0.0
  %vm2954 = vcmp.gt.f32.partialorder %v2842, 0.0
  %vm2955 = vcmp.gt.f32.partialorder %v2847, 0.0
  %vm2956 = vcmp.gt.f32.partialorder %v2850, 0.0
  %vm2957 = vcmp.gt.f32.partialorder %v2855, 0.0
  %vm2958 = vcmp.gt.f32.partialorder %v2858, 0.0
  %vm2959 = vcmp.gt.f32.partialorder %v2863, 0.0
  %vm2960 = vcmp.gt.f32.partialorder %v2866, 0.0
  %vm2961 = vcmp.gt.f32.partialorder %v2871, 0.0
  %vm2962 = vcmp.gt.f32.partialorder %v2874, 0.0
  %vm2963 = vcmp.gt.f32.partialorder %v2879, 0.0
  %vm2964 = vcmp.gt.f32.partialorder %v2882, 0.0
  %vm2965 = vcmp.gt.f32.partialorder %v2887, 0.0
  %vm2966 = vcmp.gt.f32.partialorder %v2890, 0.0
  %vm2967 = vcmp.gt.f32.partialorder %v2895, 0.0
  %vm2968 = vcmp.gt.f32.partialorder %v2898, 0.0
  %vm2969 = vcmp.gt.f32.partialorder %v2903, 0.0
  %vm2970 = vcmp.gt.f32.partialorder %v2906, 0.0
  %vm2971 = vcmp.gt.f32.partialorder %v2911, 0.0
  %vm2972 = vcmp.gt.f32.partialorder %v2914, 0.0
  %vm2973 = vcmp.gt.f32.partialorder %v2919, 0.0
  %vm2974 = vcmp.gt.f32.partialorder %v2922, 0.0
  %vm2975 = vcmp.gt.f32.partialorder %v2927, 0.0
  %vm2976 = vcmp.gt.f32.partialorder %v2930, 0.0
  %vm2977 = vcmp.gt.f32.partialorder %v2935, 0.0
  %vm2978 = vcmp.gt.f32.partialorder %v2938, 0.0
  %vm2979 = vcmp.gt.f32.partialorder %v2943, 0.0
  %vm2980 = vcmp.gt.f32.partialorder %v2946, 0.0
  %v2981 = vmul.f32 %v1055, %v2823
  %v2982 = vmul.f32 %v1055, %v2826
  %v2983 = vmul.f32 %v1055, %v2831
  %v2984 = vmul.f32 %v1055, %v2834
  %v2985 = vmul.f32 %v1055, %v2839
  %v2986 = vmul.f32 %v1055, %v2842
  %v2987 = vmul.f32 %v1055, %v2847
  %v2988 = vmul.f32 %v1055, %v2850
  %v2989 = vmul.f32 %v1055, %v2855
  %v2990 = vmul.f32 %v1055, %v2858
  %v2991 = vmul.f32 %v1055, %v2863
  %v2992 = vmul.f32 %v1055, %v2866
  %v2993 = vmul.f32 %v1055, %v2871
  %v2994 = vmul.f32 %v1055, %v2874
  %v2995 = vmul.f32 %v1055, %v2879
  %v2996 = vmul.f32 %v1055, %v2882
  %v2997 = vmul.f32 %v1055, %v2887
  %v2998 = vmul.f32 %v1055, %v2890
  %v2999 = vmul.f32 %v1055, %v2895
  %v3000 = vmul.f32 %v1055, %v2898
  %v3001 = vmul.f32 %v1055, %v2903
  %v3002 = vmul.f32 %v1055, %v2906
  %v3003 = vmul.f32 %v1055, %v2911
  %v3004 = vmul.f32 %v1055, %v2914
  %v3005 = vmul.f32 %v1055, %v2919
  %v3006 = vmul.f32 %v1055, %v2922
  %v3007 = vmul.f32 %v1055, %v2927
  %v3008 = vmul.f32 %v1055, %v2930
  %v3009 = vmul.f32 %v1055, %v2935
  %v3010 = vmul.f32 %v1055, %v2938
  %v3011 = vmul.f32 %v1055, %v2943
  %v3012 = vmul.f32 %v1055, %v2946
  %v3013 = vsel %vm2949, %v2823, %v2981
  %v3014 = vsel %vm2950, %v2826, %v2982
  %v3015 = vsel %vm2951, %v2831, %v2983
  %v3016 = vsel %vm2952, %v2834, %v2984
  %v3017 = vsel %vm2953, %v2839, %v2985
  %v3018 = vsel %vm2954, %v2842, %v2986
  %v3019 = vsel %vm2955, %v2847, %v2987
  %v3020 = vsel %vm2956, %v2850, %v2988
  %v3021 = vsel %vm2957, %v2855, %v2989
  %v3022 = vsel %vm2958, %v2858, %v2990
  %v3023 = vsel %vm2959, %v2863, %v2991
  %v3024 = vsel %vm2960, %v2866, %v2992
  %v3025 = vsel %vm2961, %v2871, %v2993
  %v3026 = vsel %vm2962, %v2874, %v2994
  %v3027 = vsel %vm2963, %v2879, %v2995
  %v3028 = vsel %vm2964, %v2882, %v2996
  %v3029 = vsel %vm2965, %v2887, %v2997
  %v3030 = vsel %vm2966, %v2890, %v2998
  %v3031 = vsel %vm2967, %v2895, %v2999
  %v3032 = vsel %vm2968, %v2898, %v3000
  %v3033 = vsel %vm2969, %v2903, %v3001
  %v3034 = vsel %vm2970, %v2906, %v3002
  %v3035 = vsel %vm2971, %v2911, %v3003
  %v3036 = vsel %vm2972, %v2914, %v3004
  %v3037 = vsel %vm2973, %v2919, %v3005
  %v3038 = vsel %vm2974, %v2922, %v3006
  %v3039 = vsel %vm2975, %v2927, %v3007
  %v3040 = vsel %vm2976, %v2930, %v3008
  %v3041 = vsel %vm2977, %v2935, %v3009
  %v3042 = vsel %vm2978, %v2938, %v3010
  %v3043 = vsel %vm2979, %v2943, %v3011
  %v3044 = vsel %vm2980, %v2946, %v3012
  %v3045 = vpack.c.bf16 %v3014, %v3013
  %v3046 = vpack.c.bf16 %v3016, %v3015
  %v3047 = vpack.c.bf16 %v3018, %v3017
  %v3048 = vpack.c.bf16 %v3020, %v3019
  %v3049 = vpack.c.bf16 %v3022, %v3021
  %v3050 = vpack.c.bf16 %v3024, %v3023
  %v3051 = vpack.c.bf16 %v3026, %v3025
  %v3052 = vpack.c.bf16 %v3028, %v3027
  %v3053 = vpack.c.bf16 %v3030, %v3029
  %v3054 = vpack.c.bf16 %v3032, %v3031
  %v3055 = vpack.c.bf16 %v3034, %v3033
  %v3056 = vpack.c.bf16 %v3036, %v3035
  %v3057 = vpack.c.bf16 %v3038, %v3037
  %v3058 = vpack.c.bf16 %v3040, %v3039
  %v3059 = vpack.c.bf16 %v3042, %v3041
  %v3060 = vpack.c.bf16 %v3044, %v3043
  %v3061 = vld [vmem:[%s16] sm:$0xf]
  %v3062 = vld [vmem:[%s16 + $0x4] sm:$0xf]
  %v3063 = vld [vmem:[%s16 + $0x8] sm:$0xf]
  %v3064 = vld [vmem:[%s16 + $0xc] sm:$0xf]
  %v3065 = vld [vmem:[%s16 + $0x10] sm:$0xf]
  %v3066 = vld [vmem:[%s16 + $0x14] sm:$0xf]
  %v3067 = vld [vmem:[%s16 + $0x18] sm:$0xf]
  %v3068 = vld [vmem:[%s16 + $0x1c] sm:$0xf]
  %v3069 = vld [vmem:[%s16 + $0x20] sm:$0xf]
  %v3070 = vld [vmem:[%s16 + $0x24] sm:$0xf]
  %v3071 = vld [vmem:[%s16 + $0x28] sm:$0xf]
  %v3072 = vld [vmem:[%s16 + $0x2c] sm:$0xf]
  %v3073 = vld [vmem:[%s16 + $0x30] sm:$0xf]
  %v3074 = vld [vmem:[%s16 + $0x34] sm:$0xf]
  %v3075 = vld [vmem:[%s16 + $0x38] sm:$0xf]
  %v3076 = vld [vmem:[%s16 + $0x3c] sm:$0xf]
  %v3077 = vld [vmem:[%s17] sm:$0x1]
  %v3079 = vlaneseq
  %v3080 = vshrl.u32 %v3079, 7
  %v3081 = vsub.s32 0, %v3080
  %v3082 = vrot.slane %v3077, %v3081
  %v3100 = vunpack.c.l.b16 %v3061
  %v3101 = vunpack.c.l.b16 %v3062
  %v3102 = vunpack.c.l.b16 %v3063
  %v3103 = vunpack.c.l.b16 %v3064
  %v3104 = vunpack.c.l.b16 %v3065
  %v3105 = vunpack.c.l.b16 %v3066
  %v3106 = vunpack.c.l.b16 %v3067
  %v3107 = vunpack.c.l.b16 %v3068
  %v3108 = vunpack.c.l.b16 %v3069
  %v3109 = vunpack.c.l.b16 %v3070
  %v3110 = vunpack.c.l.b16 %v3071
  %v3111 = vunpack.c.l.b16 %v3072
  %v3112 = vunpack.c.l.b16 %v3073
  %v3113 = vunpack.c.l.b16 %v3074
  %v3114 = vunpack.c.l.b16 %v3075
  %v3115 = vunpack.c.l.b16 %v3076
  %v3116 = vpack.c.b16 %v3101, %v3100
  %v3117 = vpack.c.b16 %v3103, %v3102
  %v3118 = vpack.c.b16 %v3105, %v3104
  %v3119 = vpack.c.b16 %v3107, %v3106
  %v3120 = vpack.c.b16 %v3109, %v3108
  %v3121 = vpack.c.b16 %v3111, %v3110
  %v3122 = vpack.c.b16 %v3113, %v3112
  %v3123 = vpack.c.b16 %v3115, %v3114
  %3132 = vmatprep.subr.bf16.mxu0 0
  %3133 = vmatpush1.bf16.msra.mxu0 %v3123
  %3134 = vmatprep.subr.bf16.mxu0 0
  %3135 = vmatpush1.bf16.msra.mxu0 %v3122
  %3136 = vmatprep.subr.bf16.mxu0 0
  %3137 = vmatpush1.bf16.msra.mxu0 %v3121
  %3138 = vmatprep.subr.bf16.mxu0 0
  %3139 = vmatpush1.bf16.msra.mxu0 %v3120
  %3140 = vmatprep.subr.bf16.mxu0 0
  %3141 = vmatpush1.bf16.msra.mxu0 %v3119
  %3142 = vmatprep.subr.bf16.mxu0 0
  %3143 = vmatpush1.bf16.msra.mxu0 %v3118
  %3144 = vmatprep.subr.bf16.mxu0 0
  %3145 = vmatpush1.bf16.msra.mxu0 %v3117
  %3146 = vmatprep.subr.bf16.mxu0 0
  %3147 = vmatpush1.bf16.msra.mxu0 %v3116
  %3148 = vmatprep.subr.bf16.mxu0 0
  %3149 = vmatpush2.bf16.msra.mxu0 0
  %3150 = vmatprep.subr.bf16.mxu0 0
  %3151 = vmatpush2.bf16.msra.mxu0 0
  %3152 = vmatprep.subr.bf16.mxu0 0
  %3153 = vmatpush2.bf16.msra.mxu0 0
  %3154 = vmatprep.subr.bf16.mxu0 0
  %3155 = vmatpush2.bf16.msra.mxu0 0
  %3156 = vmatprep.subr.bf16.mxu0 0
  %3157 = vmatpush2.bf16.msra.mxu0 0
  %3158 = vmatprep.subr.bf16.mxu0 0
  %3159 = vmatpush2.bf16.msra.mxu0 0
  %3160 = vmatprep.subr.bf16.mxu0 0
  %3161 = vmatpush2.bf16.msra.mxu0 0
  %3162 = vmatprep.subr.bf16.mxu0 0
  %3163 = vmatpush2.bf16.msra.mxu0 0
  %3164 = vmatprep.mubr.bf16.mxu0 0
  %3165 = vmatmul.mubr.bf16.gmra.mxu0 %v3045
  %v3166 = vpop.f32.mrf.mxu0
  %v3167 = vadd.f32 %v3082, %v3166
  %v3168 = vpop.f32.mrf.mxu0
  %v3169 = vpop.f32.mrf.mxu0
  %v3170 = vadd.f32 %v3082, %v3169
  %v3171 = vpop.f32.mrf.mxu0
  %3172 = vmatprep.mubr.bf16.mxu0 0
  %3173 = vmatmul.mubr.bf16.gmra.mxu0 %v3046
  %v3174 = vpop.f32.mrf.mxu0
  %v3175 = vadd.f32 %v3082, %v3174
  %v3176 = vpop.f32.mrf.mxu0
  %v3177 = vpop.f32.mrf.mxu0
  %v3178 = vadd.f32 %v3082, %v3177
  %v3179 = vpop.f32.mrf.mxu0
  %3180 = vmatprep.mubr.bf16.mxu0 0
  %3181 = vmatmul.mubr.bf16.gmra.mxu0 %v3047
  %v3182 = vpop.f32.mrf.mxu0
  %v3183 = vadd.f32 %v3082, %v3182
  %v3184 = vpop.f32.mrf.mxu0
  %v3185 = vpop.f32.mrf.mxu0
  %v3186 = vadd.f32 %v3082, %v3185
  %v3187 = vpop.f32.mrf.mxu0
  %3188 = vmatprep.mubr.bf16.mxu0 0
  %3189 = vmatmul.mubr.bf16.gmra.mxu0 %v3048
  %v3190 = vpop.f32.mrf.mxu0
  %v3191 = vadd.f32 %v3082, %v3190
  %v3192 = vpop.f32.mrf.mxu0
  %v3193 = vpop.f32.mrf.mxu0
  %v3194 = vadd.f32 %v3082, %v3193
  %v3195 = vpop.f32.mrf.mxu0
  %3196 = vmatprep.mubr.bf16.mxu0 0
  %3197 = vmatmul.mubr.bf16.gmra.mxu0 %v3049
  %v3198 = vpop.f32.mrf.mxu0
  %v3199 = vadd.f32 %v3082, %v3198
  %v3200 = vpop.f32.mrf.mxu0
  %v3201 = vpop.f32.mrf.mxu0
  %v3202 = vadd.f32 %v3082, %v3201
  %v3203 = vpop.f32.mrf.mxu0
  %3204 = vmatprep.mubr.bf16.mxu0 0
  %3205 = vmatmul.mubr.bf16.gmra.mxu0 %v3050
  %v3206 = vpop.f32.mrf.mxu0
  %v3207 = vadd.f32 %v3082, %v3206
  %v3208 = vpop.f32.mrf.mxu0
  %v3209 = vpop.f32.mrf.mxu0
  %v3210 = vadd.f32 %v3082, %v3209
  %v3211 = vpop.f32.mrf.mxu0
  %3212 = vmatprep.mubr.bf16.mxu0 0
  %3213 = vmatmul.mubr.bf16.gmra.mxu0 %v3051
  %v3214 = vpop.f32.mrf.mxu0
  %v3215 = vadd.f32 %v3082, %v3214
  %v3216 = vpop.f32.mrf.mxu0
  %v3217 = vpop.f32.mrf.mxu0
  %v3218 = vadd.f32 %v3082, %v3217
  %v3219 = vpop.f32.mrf.mxu0
  %3220 = vmatprep.mubr.bf16.mxu0 0
  %3221 = vmatmul.mubr.bf16.gmra.mxu0 %v3052
  %v3222 = vpop.f32.mrf.mxu0
  %v3223 = vadd.f32 %v3082, %v3222
  %v3224 = vpop.f32.mrf.mxu0
  %v3225 = vpop.f32.mrf.mxu0
  %v3226 = vadd.f32 %v3082, %v3225
  %v3227 = vpop.f32.mrf.mxu0
  %3228 = vmatprep.mubr.bf16.mxu0 0
  %3229 = vmatmul.mubr.bf16.gmra.mxu0 %v3053
  %v3230 = vpop.f32.mrf.mxu0
  %v3231 = vadd.f32 %v3082, %v3230
  %v3232 = vpop.f32.mrf.mxu0
  %v3233 = vpop.f32.mrf.mxu0
  %v3234 = vadd.f32 %v3082, %v3233
  %v3235 = vpop.f32.mrf.mxu0
  %3236 = vmatprep.mubr.bf16.mxu0 0
  %3237 = vmatmul.mubr.bf16.gmra.mxu0 %v3054
  %v3238 = vpop.f32.mrf.mxu0
  %v3239 = vadd.f32 %v3082, %v3238
  %v3240 = vpop.f32.mrf.mxu0
  %v3241 = vpop.f32.mrf.mxu0
  %v3242 = vadd.f32 %v3082, %v3241
  %v3243 = vpop.f32.mrf.mxu0
  %3244 = vmatprep.mubr.bf16.mxu0 0
  %3245 = vmatmul.mubr.bf16.gmra.mxu0 %v3055
  %v3246 = vpop.f32.mrf.mxu0
  %v3247 = vadd.f32 %v3082, %v3246
  %v3248 = vpop.f32.mrf.mxu0
  %v3249 = vpop.f32.mrf.mxu0
  %v3250 = vadd.f32 %v3082, %v3249
  %v3251 = vpop.f32.mrf.mxu0
  %3252 = vmatprep.mubr.bf16.mxu0 0
  %3253 = vmatmul.mubr.bf16.gmra.mxu0 %v3056
  %v3254 = vpop.f32.mrf.mxu0
  %v3255 = vadd.f32 %v3082, %v3254
  %v3256 = vpop.f32.mrf.mxu0
  %v3257 = vpop.f32.mrf.mxu0
  %v3258 = vadd.f32 %v3082, %v3257
  %v3259 = vpop.f32.mrf.mxu0
  %3260 = vmatprep.mubr.bf16.mxu0 0
  %3261 = vmatmul.mubr.bf16.gmra.mxu0 %v3057
  %v3262 = vpop.f32.mrf.mxu0
  %v3263 = vadd.f32 %v3082, %v3262
  %v3264 = vpop.f32.mrf.mxu0
  %v3265 = vpop.f32.mrf.mxu0
  %v3266 = vadd.f32 %v3082, %v3265
  %v3267 = vpop.f32.mrf.mxu0
  %3268 = vmatprep.mubr.bf16.mxu0 0
  %3269 = vmatmul.mubr.bf16.gmra.mxu0 %v3058
  %v3270 = vpop.f32.mrf.mxu0
  %v3271 = vadd.f32 %v3082, %v3270
  %v3272 = vpop.f32.mrf.mxu0
  %v3273 = vpop.f32.mrf.mxu0
  %v3274 = vadd.f32 %v3082, %v3273
  %v3275 = vpop.f32.mrf.mxu0
  %3276 = vmatprep.mubr.bf16.mxu0 0
  %3277 = vmatmul.mubr.bf16.gmra.mxu0 %v3059
  %v3278 = vpop.f32.mrf.mxu0
  %v3279 = vadd.f32 %v3082, %v3278
  %v3280 = vpop.f32.mrf.mxu0
  %v3281 = vpop.f32.mrf.mxu0
  %v3282 = vadd.f32 %v3082, %v3281
  %v3283 = vpop.f32.mrf.mxu0
  %3284 = vmatprep.mubr.bf16.mxu0 0
  %3285 = vmatmul.mubr.bf16.gmra.mxu0 %v3060
  %v3286 = vpop.f32.mrf.mxu0
  %v3287 = vadd.f32 %v3082, %v3286
  %v3288 = vpop.f32.mrf.mxu0
  %v3289 = vpop.f32.mrf.mxu0
  %v3290 = vadd.f32 %v3082, %v3289
  %v3291 = vpop.f32.mrf.mxu0
  %3292 = vdwg.mxu0
  %vm3293 = vcmp.gt.f32.partialorder %v3167, 0.0
  %vm3294 = vcmp.gt.f32.partialorder %v3170, 0.0
  %vm3295 = vcmp.gt.f32.partialorder %v3175, 0.0
  %vm3296 = vcmp.gt.f32.partialorder %v3178, 0.0
  %vm3297 = vcmp.gt.f32.partialorder %v3183, 0.0
  %vm3298 = vcmp.gt.f32.partialorder %v3186, 0.0
  %vm3299 = vcmp.gt.f32.partialorder %v3191, 0.0
  %vm3300 = vcmp.gt.f32.partialorder %v3194, 0.0
  %vm3301 = vcmp.gt.f32.partialorder %v3199, 0.0
  %vm3302 = vcmp.gt.f32.partialorder %v3202, 0.0
  %vm3303 = vcmp.gt.f32.partialorder %v3207, 0.0
  %vm3304 = vcmp.gt.f32.partialorder %v3210, 0.0
  %vm3305 = vcmp.gt.f32.partialorder %v3215, 0.0
  %vm3306 = vcmp.gt.f32.partialorder %v3218, 0.0
  %vm3307 = vcmp.gt.f32.partialorder %v3223, 0.0
  %vm3308 = vcmp.gt.f32.partialorder %v3226, 0.0
  %vm3309 = vcmp.gt.f32.partialorder %v3231, 0.0
  %vm3310 = vcmp.gt.f32.partialorder %v3234, 0.0
  %vm3311 = vcmp.gt.f32.partialorder %v3239, 0.0
  %vm3312 = vcmp.gt.f32.partialorder %v3242, 0.0
  %vm3313 = vcmp.gt.f32.partialorder %v3247, 0.0
  %vm3314 = vcmp.gt.f32.partialorder %v3250, 0.0
  %vm3315 = vcmp.gt.f32.partialorder %v3255, 0.0
  %vm3316 = vcmp.gt.f32.partialorder %v3258, 0.0
  %vm3317 = vcmp.gt.f32.partialorder %v3263, 0.0
  %vm3318 = vcmp.gt.f32.partialorder %v3266, 0.0
  %vm3319 = vcmp.gt.f32.partialorder %v3271, 0.0
  %vm3320 = vcmp.gt.f32.partialorder %v3274, 0.0
  %vm3321 = vcmp.gt.f32.partialorder %v3279, 0.0
  %vm3322 = vcmp.gt.f32.partialorder %v3282, 0.0
  %vm3323 = vcmp.gt.f32.partialorder %v3287, 0.0
  %vm3324 = vcmp.gt.f32.partialorder %v3290, 0.0
  %v3325 = vmul.f32 %v1055, %v3167
  %v3326 = vmul.f32 %v1055, %v3170
  %v3327 = vmul.f32 %v1055, %v3175
  %v3328 = vmul.f32 %v1055, %v3178
  %v3329 = vmul.f32 %v1055, %v3183
  %v3330 = vmul.f32 %v1055, %v3186
  %v3331 = vmul.f32 %v1055, %v3191
  %v3332 = vmul.f32 %v1055, %v3194
  %v3333 = vmul.f32 %v1055, %v3199
  %v3334 = vmul.f32 %v1055, %v3202
  %v3335 = vmul.f32 %v1055, %v3207
  %v3336 = vmul.f32 %v1055, %v3210
  %v3337 = vmul.f32 %v1055, %v3215
  %v3338 = vmul.f32 %v1055, %v3218
  %v3339 = vmul.f32 %v1055, %v3223
  %v3340 = vmul.f32 %v1055, %v3226
  %v3341 = vmul.f32 %v1055, %v3231
  %v3342 = vmul.f32 %v1055, %v3234
  %v3343 = vmul.f32 %v1055, %v3239
  %v3344 = vmul.f32 %v1055, %v3242
  %v3345 = vmul.f32 %v1055, %v3247
  %v3346 = vmul.f32 %v1055, %v3250
  %v3347 = vmul.f32 %v1055, %v3255
  %v3348 = vmul.f32 %v1055, %v3258
  %v3349 = vmul.f32 %v1055, %v3263
  %v3350 = vmul.f32 %v1055, %v3266
  %v3351 = vmul.f32 %v1055, %v3271
  %v3352 = vmul.f32 %v1055, %v3274
  %v3353 = vmul.f32 %v1055, %v3279
  %v3354 = vmul.f32 %v1055, %v3282
  %v3355 = vmul.f32 %v1055, %v3287
  %v3356 = vmul.f32 %v1055, %v3290
  %v3357 = vsel %vm3293, %v3167, %v3325
  %v3358 = vsel %vm3294, %v3170, %v3326
  %v3359 = vsel %vm3295, %v3175, %v3327
  %v3360 = vsel %vm3296, %v3178, %v3328
  %v3361 = vsel %vm3297, %v3183, %v3329
  %v3362 = vsel %vm3298, %v3186, %v3330
  %v3363 = vsel %vm3299, %v3191, %v3331
  %v3364 = vsel %vm3300, %v3194, %v3332
  %v3365 = vsel %vm3301, %v3199, %v3333
  %v3366 = vsel %vm3302, %v3202, %v3334
  %v3367 = vsel %vm3303, %v3207, %v3335
  %v3368 = vsel %vm3304, %v3210, %v3336
  %v3369 = vsel %vm3305, %v3215, %v3337
  %v3370 = vsel %vm3306, %v3218, %v3338
  %v3371 = vsel %vm3307, %v3223, %v3339
  %v3372 = vsel %vm3308, %v3226, %v3340
  %v3373 = vsel %vm3309, %v3231, %v3341
  %v3374 = vsel %vm3310, %v3234, %v3342
  %v3375 = vsel %vm3311, %v3239, %v3343
  %v3376 = vsel %vm3312, %v3242, %v3344
  %v3377 = vsel %vm3313, %v3247, %v3345
  %v3378 = vsel %vm3314, %v3250, %v3346
  %v3379 = vsel %vm3315, %v3255, %v3347
  %v3380 = vsel %vm3316, %v3258, %v3348
  %v3381 = vsel %vm3317, %v3263, %v3349
  %v3382 = vsel %vm3318, %v3266, %v3350
  %v3383 = vsel %vm3319, %v3271, %v3351
  %v3384 = vsel %vm3320, %v3274, %v3352
  %v3385 = vsel %vm3321, %v3279, %v3353
  %v3386 = vsel %vm3322, %v3282, %v3354
  %v3387 = vsel %vm3323, %v3287, %v3355
  %v3388 = vsel %vm3324, %v3290, %v3356
  %v3389 = vld [vmem:[%s18] sm:$0x1]
  %v3391 = vlaneseq
  %v3392 = vshrl.u32 %v3391, 7
  %v3393 = vsub.s32 0, %v3392
  %v3394 = vrot.slane %v3389, %v3393
  %v3396 = vmul.f32 %v3357, %v3394
  %v3397 = vmul.f32 %v3358, %v3394
  %v3398 = vmul.f32 %v3359, %v3394
  %v3399 = vmul.f32 %v3360, %v3394
  %v3400 = vmul.f32 %v3361, %v3394
  %v3401 = vmul.f32 %v3362, %v3394
  %v3402 = vmul.f32 %v3363, %v3394
  %v3403 = vmul.f32 %v3364, %v3394
  %v3404 = vmul.f32 %v3365, %v3394
  %v3405 = vmul.f32 %v3366, %v3394
  %v3406 = vmul.f32 %v3367, %v3394
  %v3407 = vmul.f32 %v3368, %v3394
  %v3408 = vmul.f32 %v3369, %v3394
  %v3409 = vmul.f32 %v3370, %v3394
  %v3410 = vmul.f32 %v3371, %v3394
  %v3411 = vmul.f32 %v3372, %v3394
  %v3412 = vmul.f32 %v3373, %v3394
  %v3413 = vmul.f32 %v3374, %v3394
  %v3414 = vmul.f32 %v3375, %v3394
  %v3415 = vmul.f32 %v3376, %v3394
  %v3416 = vmul.f32 %v3377, %v3394
  %v3417 = vmul.f32 %v3378, %v3394
  %v3418 = vmul.f32 %v3379, %v3394
  %v3419 = vmul.f32 %v3380, %v3394
  %v3420 = vmul.f32 %v3381, %v3394
  %v3421 = vmul.f32 %v3382, %v3394
  %v3422 = vmul.f32 %v3383, %v3394
  %v3423 = vmul.f32 %v3384, %v3394
  %v3424 = vmul.f32 %v3385, %v3394
  %v3425 = vmul.f32 %v3386, %v3394
  %v3426 = vmul.f32 %v3387, %v3394
  %v3427 = vmul.f32 %v3388, %v3394
  %3428 = vadd.xlane.f32.xlu0 %v3396
  %v3429 = vpop.xlane.xlu0 %3428
  %3430 = vadd.xlane.f32.xlu0 %v3397
  %v3431 = vpop.xlane.xlu0 %3430
  %3432 = vadd.xlane.f32.xlu0 %v3398
  %v3433 = vpop.xlane.xlu0 %3432
  %3434 = vadd.xlane.f32.xlu0 %v3399
  %v3435 = vpop.xlane.xlu0 %3434
  %3436 = vadd.xlane.f32.xlu0 %v3400
  %v3437 = vpop.xlane.xlu0 %3436
  %3438 = vadd.xlane.f32.xlu0 %v3401
  %v3439 = vpop.xlane.xlu0 %3438
  %3440 = vadd.xlane.f32.xlu0 %v3402
  %v3441 = vpop.xlane.xlu0 %3440
  %3442 = vadd.xlane.f32.xlu0 %v3403
  %v3443 = vpop.xlane.xlu0 %3442
  %3444 = vadd.xlane.f32.xlu0 %v3404
  %v3445 = vpop.xlane.xlu0 %3444
  %3446 = vadd.xlane.f32.xlu0 %v3405
  %v3447 = vpop.xlane.xlu0 %3446
  %3448 = vadd.xlane.f32.xlu0 %v3406
  %v3449 = vpop.xlane.xlu0 %3448
  %3450 = vadd.xlane.f32.xlu0 %v3407
  %v3451 = vpop.xlane.xlu0 %3450
  %3452 = vadd.xlane.f32.xlu0 %v3408
  %v3453 = vpop.xlane.xlu0 %3452
  %3454 = vadd.xlane.f32.xlu0 %v3409
  %v3455 = vpop.xlane.xlu0 %3454
  %3456 = vadd.xlane.f32.xlu0 %v3410
  %v3457 = vpop.xlane.xlu0 %3456
  %3458 = vadd.xlane.f32.xlu0 %v3411
  %v3459 = vpop.xlane.xlu0 %3458
  %3460 = vadd.xlane.f32.xlu0 %v3412
  %v3461 = vpop.xlane.xlu0 %3460
  %3462 = vadd.xlane.f32.xlu0 %v3413
  %v3463 = vpop.xlane.xlu0 %3462
  %3464 = vadd.xlane.f32.xlu0 %v3414
  %v3465 = vpop.xlane.xlu0 %3464
  %3466 = vadd.xlane.f32.xlu0 %v3415
  %v3467 = vpop.xlane.xlu0 %3466
  %3468 = vadd.xlane.f32.xlu0 %v3416
  %v3469 = vpop.xlane.xlu0 %3468
  %3470 = vadd.xlane.f32.xlu0 %v3417
  %v3471 = vpop.xlane.xlu0 %3470
  %3472 = vadd.xlane.f32.xlu0 %v3418
  %v3473 = vpop.xlane.xlu0 %3472
  %3474 = vadd.xlane.f32.xlu0 %v3419
  %v3475 = vpop.xlane.xlu0 %3474
  %3476 = vadd.xlane.f32.xlu0 %v3420
  %v3477 = vpop.xlane.xlu0 %3476
  %3478 = vadd.xlane.f32.xlu0 %v3421
  %v3479 = vpop.xlane.xlu0 %3478
  %3480 = vadd.xlane.f32.xlu0 %v3422
  %v3481 = vpop.xlane.xlu0 %3480
  %3482 = vadd.xlane.f32.xlu0 %v3423
  %v3483 = vpop.xlane.xlu0 %3482
  %3484 = vadd.xlane.f32.xlu0 %v3424
  %v3485 = vpop.xlane.xlu0 %3484
  %3486 = vadd.xlane.f32.xlu0 %v3425
  %v3487 = vpop.xlane.xlu0 %3486
  %3488 = vadd.xlane.f32.xlu0 %v3426
  %v3489 = vpop.xlane.xlu0 %3488
  %3490 = vadd.xlane.f32.xlu0 %v3427
  %v3491 = vpop.xlane.xlu0 %3490
  %v3492 = vld [vmem:[#allocation2] sm:$0x1]
  %v3494 = vlaneseq
  %v3495 = vshrl.u32 %v3494, 7
  %v3496 = vsub.s32 0, %v3495
  %v3497 = vrot.slane %v3492, %v3496
  %v3499 = vadd.f32 %v3429, %v3497
  %v3500 = vadd.f32 %v3431, %v3497
  %v3501 = vadd.f32 %v3433, %v3497
  %v3502 = vadd.f32 %v3435, %v3497
  %v3503 = vadd.f32 %v3437, %v3497
  %v3504 = vadd.f32 %v3439, %v3497
  %v3505 = vadd.f32 %v3441, %v3497
  %v3506 = vadd.f32 %v3443, %v3497
  %v3507 = vadd.f32 %v3445, %v3497
  %v3508 = vadd.f32 %v3447, %v3497
  %v3509 = vadd.f32 %v3449, %v3497
  %v3510 = vadd.f32 %v3451, %v3497
  %v3511 = vadd.f32 %v3453, %v3497
  %v3512 = vadd.f32 %v3455, %v3497
  %v3513 = vadd.f32 %v3457, %v3497
  %v3514 = vadd.f32 %v3459, %v3497
  %v3515 = vadd.f32 %v3461, %v3497
  %v3516 = vadd.f32 %v3463, %v3497
  %v3517 = vadd.f32 %v3465, %v3497
  %v3518 = vadd.f32 %v3467, %v3497
  %v3519 = vadd.f32 %v3469, %v3497
  %v3520 = vadd.f32 %v3471, %v3497
  %v3521 = vadd.f32 %v3473, %v3497
  %v3522 = vadd.f32 %v3475, %v3497
  %v3523 = vadd.f32 %v3477, %v3497
  %v3524 = vadd.f32 %v3479, %v3497
  %v3525 = vadd.f32 %v3481, %v3497
  %v3526 = vadd.f32 %v3483, %v3497
  %v3527 = vadd.f32 %v3485, %v3497
  %v3528 = vadd.f32 %v3487, %v3497
  %v3529 = vadd.f32 %v3489, %v3497
  %v3530 = vadd.f32 %v3491, %v3497
  %v3531 = vtanh.pop %v3499
  %v3532 = vtanh.pop %v3500
  %v3533 = vtanh.pop %v3501
  %v3534 = vtanh.pop %v3502
  %v3535 = vtanh.pop %v3503
  %v3536 = vtanh.pop %v3504
  %v3537 = vtanh.pop %v3505
  %v3538 = vtanh.pop %v3506
  %v3539 = vtanh.pop %v3507
  %v3540 = vtanh.pop %v3508
  %v3541 = vtanh.pop %v3509
  %v3542 = vtanh.pop %v3510
  %v3543 = vtanh.pop %v3511
  %v3544 = vtanh.pop %v3512
  %v3545 = vtanh.pop %v3513
  %v3546 = vtanh.pop %v3514
  %v3547 = vtanh.pop %v3515
  %v3548 = vtanh.pop %v3516
  %v3549 = vtanh.pop %v3517
  %v3550 = vtanh.pop %v3518
  %v3551 = vtanh.pop %v3519
  %v3552 = vtanh.pop %v3520
  %v3553 = vtanh.pop %v3521
  %v3554 = vtanh.pop %v3522
  %v3555 = vtanh.pop %v3523
  %v3556 = vtanh.pop %v3524
  %v3557 = vtanh.pop %v3525
  %v3558 = vtanh.pop %v3526
  %v3559 = vtanh.pop %v3527
  %v3560 = vtanh.pop %v3528
  %v3561 = vtanh.pop %v3529
  %v3562 = vtanh.pop %v3530
  %vm3563 = vcmask 7168
  %3564 = vst.msk [vmem:[%s21] sm:$0xff] %vm3563, %v3531
  %3565 = vst.msk [vmem:[%s21 + $0x8] sm:$0xff] %vm3563, %v3532
  %3566 = vst.msk [vmem:[%s21 + $0x10] sm:$0xff] %vm3563, %v3533
  %3567 = vst.msk [vmem:[%s21 + $0x18] sm:$0xff] %vm3563, %v3534
  %3568 = vst.msk [vmem:[%s21 + $0x20] sm:$0xff] %vm3563, %v3535
  %3569 = vst.msk [vmem:[%s21 + $0x28] sm:$0xff] %vm3563, %v3536
  %3570 = vst.msk [vmem:[%s21 + $0x30] sm:$0xff] %vm3563, %v3537
  %3571 = vst.msk [vmem:[%s21 + $0x38] sm:$0xff] %vm3563, %v3538
  %3572 = vst.msk [vmem:[%s21 + $0x40] sm:$0xff] %vm3563, %v3539
  %3573 = vst.msk [vmem:[%s21 + $0x48] sm:$0xff] %vm3563, %v3540
  %3574 = vst.msk [vmem:[%s21 + $0x50] sm:$0xff] %vm3563, %v3541
  %3575 = vst.msk [vmem:[%s21 + $0x58] sm:$0xff] %vm3563, %v3542
  %3576 = vst.msk [vmem:[%s21 + $0x60] sm:$0xff] %vm3563, %v3543
  %3577 = vst.msk [vmem:[%s21 + $0x68] sm:$0xff] %vm3563, %v3544
  %3578 = vst.msk [vmem:[%s21 + $0x70] sm:$0xff] %vm3563, %v3545
  %3579 = vst.msk [vmem:[%s21 + $0x78] sm:$0xff] %vm3563, %v3546
  %3580 = vst.msk [vmem:[%s21 + $0x80] sm:$0xff] %vm3563, %v3547
  %3581 = vst.msk [vmem:[%s21 + $0x88] sm:$0xff] %vm3563, %v3548
  %3582 = vst.msk [vmem:[%s21 + $0x90] sm:$0xff] %vm3563, %v3549
  %3583 = vst.msk [vmem:[%s21 + $0x98] sm:$0xff] %vm3563, %v3550
  %3584 = vst.msk [vmem:[%s21 + $0xa0] sm:$0xff] %vm3563, %v3551
  %3585 = vst.msk [vmem:[%s21 + $0xa8] sm:$0xff] %vm3563, %v3552
  %3586 = vst.msk [vmem:[%s21 + $0xb0] sm:$0xff] %vm3563, %v3553
  %3587 = vst.msk [vmem:[%s21 + $0xb8] sm:$0xff] %vm3563, %v3554
  %3588 = vst.msk [vmem:[%s21 + $0xc0] sm:$0xff] %vm3563, %v3555
  %3589 = vst.msk [vmem:[%s21 + $0xc8] sm:$0xff] %vm3563, %v3556
  %3590 = vst.msk [vmem:[%s21 + $0xd0] sm:$0xff] %vm3563, %v3557
  %3591 = vst.msk [vmem:[%s21 + $0xd8] sm:$0xff] %vm3563, %v3558
  %3592 = vst.msk [vmem:[%s21 + $0xe0] sm:$0xff] %vm3563, %v3559
  %3593 = vst.msk [vmem:[%s21 + $0xe8] sm:$0xff] %vm3563, %v3560
  %3594 = vst.msk [vmem:[%s21 + $0xf0] sm:$0xff] %vm3563, %v3561
  %3595 = vst.msk [vmem:[%s21 + $0xf8] sm:$0xff] %vm3563, %v3562
  // Predicated region
  $region86: #{tpu_custom_call.1} parent=0 // pred_check
    _
  $region87: #{tpu_custom_call.1} parent=0 // pred_check_branch
    %3597 = sbr.rel (0) target = $region89
  $region88: #{tpu_custom_call.1} parent=0 // pred_region
    _
  $region89: #{tpu_custom_call.1} parent=0 // pred_fallthru
    _
  // Predicated region
  $region90: #{tpu_custom_call.1} parent=0 // pred_check
    _
  $region91: #{tpu_custom_call.1} parent=0 // pred_check_branch
    %3599 = sbr.rel (0) target = $region93
  $region92: #{tpu_custom_call.1} parent=0 // pred_region
    _
  $region93: #{tpu_custom_call.1} parent=0 // pred_fallthru
    _

</llo_original>
